<compile_context>
chip_gen: v6e
topology: v6e:2x2x1
jax: 0.10.0
libtpu: 0.0.40
codegen_flags: <defaults>
</compile_context>

<pallas_src>
import numpy as np

import jax
import jax.numpy as jnp
from jax.experimental import pallas as pl


def _round_up(n, m):
    return ((n + m - 1) // m) * m


# ---------------------------------------------------------------------------
# The fused kernel: conv1 -> conv2 -> conv3 -> fc1 -> fc2, all in VMEM.
# Every op is a 2-D matmul, bias add or ReLU (plus static leading-dim indexing),
# which lowers cleanly to MXU/VPU work.
# ---------------------------------------------------------------------------
def _fused_dqn_kernel(p1_ref, w1_ref, b1_ref,
                      g2_ref, w2_ref, b2_ref,
                      g3_ref, w3_ref, b3_ref,
                      sel_ref, wfc1_ref, bfc1_ref,
                      wfc2_ref, bfc2_ref,
                      out_ref):
    f32 = jnp.float32

    # conv1: patches were materialized outside as P1 (R1, k*k*Cin).
    a1 = jnp.dot(p1_ref[...], w1_ref[...], preferred_element_type=f32)
    a1 = jnp.maximum(a1 + b1_ref[...], 0.0)                      # (R1, 32)

    # conv2: in-kernel im2col via 0/1 gather matmuls, one per (kh, kw) tap.
    acc2 = None
    for k in range(g2_ref.shape[0]):
        patches = jnp.dot(g2_ref[k], a1, preferred_element_type=f32)    # (R2, 32)
        part = jnp.dot(patches, w2_ref[k], preferred_element_type=f32)  # (R2, 64)
        acc2 = part if acc2 is None else acc2 + part
    a2 = jnp.maximum(acc2 + b2_ref[...], 0.0)                    # (R2, 64)

    # conv3 (stride 1): same gather-matmul formulation; rows padded to 24.
    acc3 = None
    for k in range(g3_ref.shape[0]):
        patches = jnp.dot(g3_ref[k], a2, preferred_element_type=f32)    # (R3p, 64)
        part = jnp.dot(patches, w3_ref[k], preferred_element_type=f32)  # (R3p, 128)
        acc3 = part if acc3 is None else acc3 + part
    a3 = jnp.maximum(acc3 + b3_ref[...], 0.0)                    # (R3p, 128); pad rows unused

    # fc1: per-spatial-position weight slices (pre-permuted at prep time so the
    # NHWC row order of a3 needs NO transpose); Sel gathers+pads rows to 8.
    accf = None
    for p in range(sel_ref.shape[0]):
        xp = jnp.dot(sel_ref[p], a3, preferred_element_type=f32)        # (Bp, 128)
        part = jnp.dot(xp, wfc1_ref[p], preferred_element_type=f32)     # (Bp, 128)
        accf = part if accf is None else accf + part
    f1 = jnp.maximum(accf + bfc1_ref[...], 0.0)                  # (Bp, 128)

    # fc2: lane-padded to 128 output columns -> unmasked (8, 128) store.
    out = jnp.dot(f1, wfc2_ref[...], preferred_element_type=f32) + bfc2_ref[...]
    out_ref[...] = out.astype(out_ref.dtype)


# ---------------------------------------------------------------------------
# One-time preparation: gather matrices + pre-permuted weights (PyTorch layouts in).
# ---------------------------------------------------------------------------
def _gather_mats(batch, hi, wi, k, s, r_in_cols):
    """0/1 matrices G[(kh,kw)] s.t. (G @ A) gathers the im2col rows for that tap.

    A has rows ordered (b, h, w); the output rows are ordered (b, ho, wo) and
    padded to a multiple of 8 sublanes.
    """
    ho = (hi - k) // s + 1
    wo = (wi - k) // s + 1
    r_out = batch * ho * wo
    r_out_pad = _round_up(r_out, 8)
    g = np.zeros((k * k, r_out_pad, r_in_cols), np.float32)
    for b in range(batch):
        for oh in range(ho):
            for ow in range(wo):
                ro = b * ho * wo + oh * wo + ow
                for kh in range(k):
                    for kw in range(k):
                        ri = b * hi * wi + (oh * s + kh) * wi + (ow * s + kw)
                        g[kh * k + kw, ro, ri] = 1.0
    return g, ho, wo, r_out_pad


def init_params(input_shape, num_actions, key):
    """Deterministic synthetic parameters, PyTorch layouts (Conv: OIHW, Linear: (out,in))."""
    cin, h, w = input_shape
    ks = jax.random.split(key, 10)

    def uinit(k, shape, fan_in):
        bound = 1.0 / jnp.sqrt(fan_in)
        return jax.random.uniform(k, shape, jnp.float32, -bound, bound)

    # conv chain spatial sizes (k=2, strides 2, 2, 1)
    h1, w1 = (h - 2) // 2 + 1, (w - 2) // 2 + 1
    h2, w2 = (h1 - 2) // 2 + 1, (w1 - 2) // 2 + 1
    h3, w3 = h2 - 1, w2 - 1
    feat = 128 * h3 * w3

    p = {}
    p["w1"] = uinit(ks[0], (32, cin, 2, 2), cin * 4)
    p["b1"] = uinit(ks[1], (32,), cin * 4)
    p["w2"] = uinit(ks[2], (64, 32, 2, 2), 32 * 4)
    p["b2"] = uinit(ks[3], (64,), 32 * 4)
    p["w3"] = uinit(ks[4], (128, 64, 2, 2), 64 * 4)
    p["b3"] = uinit(ks[5], (128,), 64 * 4)
    p["fc1_w"] = uinit(ks[6], (128, feat), feat)
    p["fc1_b"] = uinit(ks[7], (128,), feat)
    p["fc2_w"] = uinit(ks[8], (num_actions, 128), 128)
    p["fc2_b"] = uinit(ks[9], (num_actions,), 128)
    return p


def prepare_dqn_cnn(params, input_shape, num_actions, batch):
    """Build kernel-ready operands (done once, outside the per-step critical path)."""
    cin, h, w = input_shape
    k = 2
    h1, w1 = (h - k) // 2 + 1, (w - k) // 2 + 1
    h2, w2 = (h1 - k) // 2 + 1, (w1 - k) // 2 + 1
    h3, w3 = (h2 - k) // 1 + 1, (w2 - k) // 1 + 1
    c3 = params["w3"].shape[0]
    hidden = params["fc1_w"].shape[0]
    assert params["fc1_w"].shape[1] == c3 * h3 * w3, (
        "fc1 input size does not match the conv chain for this input_shape")

    r1_pad = _round_up(batch * h1 * w1, 8)
    g2, _, _, r2_pad = _gather_mats(batch, h1, w1, k, 2, r1_pad)
    g3, _, _, r3_pad = _gather_mats(batch, h2, w2, k, 1, r2_pad)

    def conv_w_per_tap(w_pt):  # (Cout, Cin, k, k) -> (k*k, Cin, Cout), tap = kh*k+kw
        cout, ci, kh, kw = w_pt.shape
        return jnp.transpose(w_pt, (2, 3, 1, 0)).reshape(kh * kw, ci, cout)

    # conv1 as one matmul: weight rows ordered (kh, kw, cin) to match the patches.
    w1_mat = jnp.transpose(params["w1"], (2, 3, 1, 0)).reshape(k * k * cin, -1)

    # fc1: PyTorch flattens (C, H, W); pre-split into one (C3, hidden) matrix per
    # spatial position p = h*W3 + w so (b,h,w)-row features multiply it directly.
    n_pos = h3 * w3
    wfc1 = params["fc1_w"].reshape(hidden, c3, n_pos)      # (out, c, p)
    wfc1 = jnp.transpose(wfc1, (2, 1, 0))                  # (p, c, out)

    # selection matrices: row b of Sel[p] picks conv3 row (b*n_pos + p); also pads
    # the fc batch rows up to 8 sublanes.
    b_pad = _round_up(max(batch, 8), 8)
    sel = np.zeros((n_pos, b_pad, r3_pad), np.float32)
    for p in range(n_pos):
        for b in range(batch):
            sel[p, b, b * n_pos + p] = 1.0

    # fc2: lane-pad num_actions -> 128 with zero weight/bias columns.
    n_pad = _round_up(max(num_actions, 128), 128)
    wfc2 = np.zeros((hidden, n_pad), np.float32)
    wfc2[:, :num_actions] = np.asarray(params["fc2_w"]).T
    bfc2 = np.zeros((1, n_pad), np.float32)
    bfc2[0, :num_actions] = np.asarray(params["fc2_b"])

    ops = dict(
        w1=w1_mat, b1=params["b1"].reshape(1, -1),
        g2=jnp.asarray(g2), w2=conv_w_per_tap(params["w2"]), b2=params["b2"].reshape(1, -1),
        g3=jnp.asarray(g3), w3=conv_w_per_tap(params["w3"]), b3=params["b3"].reshape(1, -1),
        sel=jnp.asarray(sel), wfc1=wfc1, bfc1=params["fc1_b"].reshape(1, -1),
        wfc2=jnp.asarray(wfc2), bfc2=jnp.asarray(bfc2),
    )
    dims = dict(batch=batch, r1_pad=r1_pad, b_pad=b_pad, n_pad=n_pad,
                num_actions=num_actions, k=k)
    return ops, dims


def make_forward(ops, dims):
    batch = dims["batch"]
    r1_pad = dims["r1_pad"]
    b_pad = dims["b_pad"]
    n_pad = dims["n_pad"]
    num_actions = dims["num_actions"]
    k = dims["k"]
    order = ("w1", "b1", "g2", "w2", "b2", "g3", "w3", "b3",
             "sel", "wfc1", "bfc1", "wfc2", "bfc2")
    operands = tuple(ops[name] for name in order)

    @jax.jit
    def forward(x_nchw, operands):
        assert x_nchw.shape[0] == batch, "prepared operands are batch-specific"
        # conv1 im2col (stride-2 non-overlapping 2x2 taps): one tiny XLA pre-op,
        # same HBM bytes as shipping the raw image.  Rows ordered (b, ho, wo),
        # patch channels ordered (kh, kw, cin) to match w1_mat.
        x = jnp.transpose(x_nchw, (0, 2, 3, 1))              # NCHW -> NHWC
        b, h, w, c = x.shape
        ho, wo = (h - k) // 2 + 1, (w - k) // 2 + 1
        cols = [x[:, kh:kh + 2 * ho:2, kw:kw + 2 * wo:2, :]
                for kh in range(k) for kw in range(k)]
        p1 = jnp.concatenate(cols, axis=-1).reshape(b * ho * wo, k * k * c)
        if p1.shape[0] != r1_pad:
            p1 = jnp.pad(p1, ((0, r1_pad - p1.shape[0]), (0, 0)))

        # One fused pallas_call: no grid -> single invocation, all operands
        # placed whole in VMEM (default), single unmasked (8, 128) output store.
        out_pad = pl.pallas_call(
            _fused_dqn_kernel,
            out_shape=jax.ShapeDtypeStruct((b_pad, n_pad), jnp.float32),
        )(p1, *operands)
        return out_pad[:batch, :num_actions]

    return lambda x: forward(x, operands)


# ---------------------------------------------------------------------------
# Pure-JAX reference (matches the PyTorch module) for a numerical sanity check.
# ---------------------------------------------------------------------------
def dqn_cnn_reference(params, x):
    dn = ("NCHW", "OIHW", "NCHW")
    y = jax.lax.conv_general_dilated(x, params["w1"], (2, 2), "VALID", dimension_numbers=dn)
    y = jax.nn.relu(y + params["b1"][None, :, None, None])
    y = jax.lax.conv_general_dilated(y, params["w2"], (2, 2), "VALID", dimension_numbers=dn)
    y = jax.nn.relu(y + params["b2"][None, :, None, None])
    y = jax.lax.conv_general_dilated(y, params["w3"], (1, 1), "VALID", dimension_numbers=dn)
    y = jax.nn.relu(y + params["b3"][None, :, None, None])
    y = y.reshape(y.shape[0], -1)
    y = jax.nn.relu(y @ params["fc1_w"].T + params["fc1_b"])
    return y @ params["fc2_w"].T + params["fc2_b"]


if __name__ == "__main__":
    input_shape = (4, 16, 16)   # (C, H, W)
    num_actions = 6
    batch = 2

    key = jax.random.PRNGKey(0)
    k_params, k_x = jax.random.split(key)

    params = init_params(input_shape, num_actions, k_params)
    x = jax.random.normal(k_x, (batch,) + input_shape, dtype=jnp.float32)

    ops, dims = prepare_dqn_cnn(params, input_shape, num_actions, batch)
    forward = make_forward(ops, dims)

    out = jax.block_until_ready(forward(x))
    ref = jax.block_until_ready(dqn_cnn_reference(params, x))

    assert out.shape == (batch, num_actions), out.shape
    assert bool(jnp.all(jnp.isfinite(out)))
    max_err = float(jnp.max(jnp.abs(out - ref)))
    assert max_err < 5e-2, f"max abs error vs reference: {max_err}"
    print("KERNEL_OK")
</pallas_src>

<mosaic_0001>
module attributes {stable_mosaic.version = 11 : i64} {
  func.func @_fused_dqn_kernel(%arg0: memref<128x16xf32, #tpu.memory_space<vmem>>, %arg1: memref<16x32xf32, #tpu.memory_space<vmem>>, %arg2: memref<1x32xf32, #tpu.memory_space<vmem>>, %arg3: memref<4x32x128xf32, #tpu.memory_space<vmem>>, %arg4: memref<4x32x64xf32, #tpu.memory_space<vmem>>, %arg5: memref<1x64xf32, #tpu.memory_space<vmem>>, %arg6: memref<4x24x32xf32, #tpu.memory_space<vmem>>, %arg7: memref<4x64x128xf32, #tpu.memory_space<vmem>>, %arg8: memref<1x128xf32, #tpu.memory_space<vmem>>, %arg9: memref<9x8x24xf32, #tpu.memory_space<vmem>>, %arg10: memref<9x128x128xf32, #tpu.memory_space<vmem>>, %arg11: memref<1x128xf32, #tpu.memory_space<vmem>>, %arg12: memref<128x128xf32, #tpu.memory_space<vmem>>, %arg13: memref<1x128xf32, #tpu.memory_space<vmem>>, %arg14: memref<8x128xf32, #tpu.memory_space<vmem>>) attributes {dimension_semantics = [], scalar_prefetch = 0 : i64, scratch_operands = 0 : i64, tpu.core_type = #tpu.core_type<tc>} {
    %c0 = arith.constant 0 : index
    %c0_0 = arith.constant 0 : index
    %0 = vector.load %arg0[%c0, %c0_0] : memref<128x16xf32, #tpu.memory_space<vmem>>, vector<128x16xf32>
    %c0_1 = arith.constant 0 : index
    %c0_2 = arith.constant 0 : index
    %1 = vector.load %arg1[%c0_1, %c0_2] : memref<16x32xf32, #tpu.memory_space<vmem>>, vector<16x32xf32>
    %cst = arith.constant dense<0.000000e+00> : vector<128x32xf32>
    %2 = tpu.matmul %0, %1, %cst {dimension_numbers = #tpu.dot_dimension_numbers<[1], [0], [0], [1], [0, 0, 1, 1], [], []>} : vector<128x16xf32>, vector<16x32xf32>, vector<128x32xf32> -> vector<128x32xf32>
    %c0_3 = arith.constant 0 : index
    %c0_4 = arith.constant 0 : index
    %3 = vector.load %arg2[%c0_3, %c0_4] : memref<1x32xf32, #tpu.memory_space<vmem>>, vector<1x32xf32>
    %4 = vector.broadcast %3 : vector<1x32xf32> to vector<128x32xf32>
    %5 = arith.addf %2, %4 : vector<128x32xf32>
    %cst_5 = arith.constant 0.000000e+00 : f32
    %6 = vector.broadcast %cst_5 : f32 to vector<128x32xf32>
    %7 = arith.maximumf %5, %6 : vector<128x32xf32>
    %c0_6 = arith.constant 0 : index
    %c0_7 = arith.constant 0 : index
    %c0_8 = arith.constant 0 : index
    %8 = vector.load %arg3[%c0_6, %c0_7, %c0_8] : memref<4x32x128xf32, #tpu.memory_space<vmem>>, vector<1x32x128xf32>
    %9 = vector.shape_cast %8 : vector<1x32x128xf32> to vector<32x128xf32>
    %cst_9 = arith.constant dense<0.000000e+00> : vector<32x32xf32>
    %10 = tpu.matmul %9, %7, %cst_9 {dimension_numbers = #tpu.dot_dimension_numbers<[1], [0], [0], [1], [0, 0, 1, 1], [], []>} : vector<32x128xf32>, vector<128x32xf32>, vector<32x32xf32> -> vector<32x32xf32>
    %c0_10 = arith.constant 0 : index
    %c0_11 = arith.constant 0 : index
    %c0_12 = arith.constant 0 : index
    %11 = vector.load %arg4[%c0_10, %c0_11, %c0_12] : memref<4x32x64xf32, #tpu.memory_space<vmem>>, vector<1x32x64xf32>
    %12 = vector.shape_cast %11 : vector<1x32x64xf32> to vector<32x64xf32>
    %cst_13 = arith.constant dense<0.000000e+00> : vector<32x64xf32>
    %13 = tpu.matmul %10, %12, %cst_13 {dimension_numbers = #tpu.dot_dimension_numbers<[1], [0], [0], [1], [0, 0, 1, 1], [], []>} : vector<32x32xf32>, vector<32x64xf32>, vector<32x64xf32> -> vector<32x64xf32>
    %c1 = arith.constant 1 : index
    %c0_14 = arith.constant 0 : index
    %c0_15 = arith.constant 0 : index
    %14 = vector.load %arg3[%c1, %c0_14, %c0_15] : memref<4x32x128xf32, #tpu.memory_space<vmem>>, vector<1x32x128xf32>
    %15 = vector.shape_cast %14 : vector<1x32x128xf32> to vector<32x128xf32>
    %cst_16 = arith.constant dense<0.000000e+00> : vector<32x32xf32>
    %16 = tpu.matmul %15, %7, %cst_16 {dimension_numbers = #tpu.dot_dimension_numbers<[1], [0], [0], [1], [0, 0, 1, 1], [], []>} : vector<32x128xf32>, vector<128x32xf32>, vector<32x32xf32> -> vector<32x32xf32>
    %c1_17 = arith.constant 1 : index
    %c0_18 = arith.constant 0 : index
    %c0_19 = arith.constant 0 : index
    %17 = vector.load %arg4[%c1_17, %c0_18, %c0_19] : memref<4x32x64xf32, #tpu.memory_space<vmem>>, vector<1x32x64xf32>
    %18 = vector.shape_cast %17 : vector<1x32x64xf32> to vector<32x64xf32>
    %cst_20 = arith.constant dense<0.000000e+00> : vector<32x64xf32>
    %19 = tpu.matmul %16, %18, %cst_20 {dimension_numbers = #tpu.dot_dimension_numbers<[1], [0], [0], [1], [0, 0, 1, 1], [], []>} : vector<32x32xf32>, vector<32x64xf32>, vector<32x64xf32> -> vector<32x64xf32>
    %20 = arith.addf %13, %19 : vector<32x64xf32>
    %c2 = arith.constant 2 : index
    %c0_21 = arith.constant 0 : index
    %c0_22 = arith.constant 0 : index
    %21 = vector.load %arg3[%c2, %c0_21, %c0_22] : memref<4x32x128xf32, #tpu.memory_space<vmem>>, vector<1x32x128xf32>
    %22 = vector.shape_cast %21 : vector<1x32x128xf32> to vector<32x128xf32>
    %cst_23 = arith.constant dense<0.000000e+00> : vector<32x32xf32>
    %23 = tpu.matmul %22, %7, %cst_23 {dimension_numbers = #tpu.dot_dimension_numbers<[1], [0], [0], [1], [0, 0, 1, 1], [], []>} : vector<32x128xf32>, vector<128x32xf32>, vector<32x32xf32> -> vector<32x32xf32>
    %c2_24 = arith.constant 2 : index
    %c0_25 = arith.constant 0 : index
    %c0_26 = arith.constant 0 : index
    %24 = vector.load %arg4[%c2_24, %c0_25, %c0_26] : memref<4x32x64xf32, #tpu.memory_space<vmem>>, vector<1x32x64xf32>
    %25 = vector.shape_cast %24 : vector<1x32x64xf32> to vector<32x64xf32>
    %cst_27 = arith.constant dense<0.000000e+00> : vector<32x64xf32>
    %26 = tpu.matmul %23, %25, %cst_27 {dimension_numbers = #tpu.dot_dimension_numbers<[1], [0], [0], [1], [0, 0, 1, 1], [], []>} : vector<32x32xf32>, vector<32x64xf32>, vector<32x64xf32> -> vector<32x64xf32>
    %27 = arith.addf %20, %26 : vector<32x64xf32>
    %c3 = arith.constant 3 : index
    %c0_28 = arith.constant 0 : index
    %c0_29 = arith.constant 0 : index
    %28 = vector.load %arg3[%c3, %c0_28, %c0_29] : memref<4x32x128xf32, #tpu.memory_space<vmem>>, vector<1x32x128xf32>
    %29 = vector.shape_cast %28 : vector<1x32x128xf32> to vector<32x128xf32>
    %cst_30 = arith.constant dense<0.000000e+00> : vector<32x32xf32>
    %30 = tpu.matmul %29, %7, %cst_30 {dimension_numbers = #tpu.dot_dimension_numbers<[1], [0], [0], [1], [0, 0, 1, 1], [], []>} : vector<32x128xf32>, vector<128x32xf32>, vector<32x32xf32> -> vector<32x32xf32>
    %c3_31 = arith.constant 3 : index
    %c0_32 = arith.constant 0 : index
    %c0_33 = arith.constant 0 : index
    %31 = vector.load %arg4[%c3_31, %c0_32, %c0_33] : memref<4x32x64xf32, #tpu.memory_space<vmem>>, vector<1x32x64xf32>
    %32 = vector.shape_cast %31 : vector<1x32x64xf32> to vector<32x64xf32>
    %cst_34 = arith.constant dense<0.000000e+00> : vector<32x64xf32>
    %33 = tpu.matmul %30, %32, %cst_34 {dimension_numbers = #tpu.dot_dimension_numbers<[1], [0], [0], [1], [0, 0, 1, 1], [], []>} : vector<32x32xf32>, vector<32x64xf32>, vector<32x64xf32> -> vector<32x64xf32>
    %34 = arith.addf %27, %33 : vector<32x64xf32>
    %c0_35 = arith.constant 0 : index
    %c0_36 = arith.constant 0 : index
    %35 = vector.load %arg5[%c0_35, %c0_36] : memref<1x64xf32, #tpu.memory_space<vmem>>, vector<1x64xf32>
    %36 = vector.broadcast %35 : vector<1x64xf32> to vector<32x64xf32>
    %37 = arith.addf %34, %36 : vector<32x64xf32>
    %cst_37 = arith.constant 0.000000e+00 : f32
    %38 = vector.broadcast %cst_37 : f32 to vector<32x64xf32>
    %39 = arith.maximumf %37, %38 : vector<32x64xf32>
    %c0_38 = arith.constant 0 : index
    %c0_39 = arith.constant 0 : index
    %c0_40 = arith.constant 0 : index
    %40 = vector.load %arg6[%c0_38, %c0_39, %c0_40] : memref<4x24x32xf32, #tpu.memory_space<vmem>>, vector<1x24x32xf32>
    %41 = vector.shape_cast %40 : vector<1x24x32xf32> to vector<24x32xf32>
    %cst_41 = arith.constant dense<0.000000e+00> : vector<24x64xf32>
    %42 = tpu.matmul %41, %39, %cst_41 {dimension_numbers = #tpu.dot_dimension_numbers<[1], [0], [0], [1], [0, 0, 1, 1], [], []>} : vector<24x32xf32>, vector<32x64xf32>, vector<24x64xf32> -> vector<24x64xf32>
    %c0_42 = arith.constant 0 : index
    %c0_43 = arith.constant 0 : index
    %c0_44 = arith.constant 0 : index
    %43 = vector.load %arg7[%c0_42, %c0_43, %c0_44] : memref<4x64x128xf32, #tpu.memory_space<vmem>>, vector<1x64x128xf32>
    %44 = vector.shape_cast %43 : vector<1x64x128xf32> to vector<64x128xf32>
    %cst_45 = arith.constant dense<0.000000e+00> : vector<24x128xf32>
    %45 = tpu.matmul %42, %44, %cst_45 {dimension_numbers = #tpu.dot_dimension_numbers<[1], [0], [0], [1], [0, 0, 1, 1], [], []>} : vector<24x64xf32>, vector<64x128xf32>, vector<24x128xf32> -> vector<24x128xf32>
    %c1_46 = arith.constant 1 : index
    %c0_47 = arith.constant 0 : index
    %c0_48 = arith.constant 0 : index
    %46 = vector.load %arg6[%c1_46, %c0_47, %c0_48] : memref<4x24x32xf32, #tpu.memory_space<vmem>>, vector<1x24x32xf32>
    %47 = vector.shape_cast %46 : vector<1x24x32xf32> to vector<24x32xf32>
    %cst_49 = arith.constant dense<0.000000e+00> : vector<24x64xf32>
    %48 = tpu.matmul %47, %39, %cst_49 {dimension_numbers = #tpu.dot_dimension_numbers<[1], [0], [0], [1], [0, 0, 1, 1], [], []>} : vector<24x32xf32>, vector<32x64xf32>, vector<24x64xf32> -> vector<24x64xf32>
    %c1_50 = arith.constant 1 : index
    %c0_51 = arith.constant 0 : index
    %c0_52 = arith.constant 0 : index
    %49 = vector.load %arg7[%c1_50, %c0_51, %c0_52] : memref<4x64x128xf32, #tpu.memory_space<vmem>>, vector<1x64x128xf32>
    %50 = vector.shape_cast %49 : vector<1x64x128xf32> to vector<64x128xf32>
    %cst_53 = arith.constant dense<0.000000e+00> : vector<24x128xf32>
    %51 = tpu.matmul %48, %50, %cst_53 {dimension_numbers = #tpu.dot_dimension_numbers<[1], [0], [0], [1], [0, 0, 1, 1], [], []>} : vector<24x64xf32>, vector<64x128xf32>, vector<24x128xf32> -> vector<24x128xf32>
    %52 = arith.addf %45, %51 : vector<24x128xf32>
    %c2_54 = arith.constant 2 : index
    %c0_55 = arith.constant 0 : index
    %c0_56 = arith.constant 0 : index
    %53 = vector.load %arg6[%c2_54, %c0_55, %c0_56] : memref<4x24x32xf32, #tpu.memory_space<vmem>>, vector<1x24x32xf32>
    %54 = vector.shape_cast %53 : vector<1x24x32xf32> to vector<24x32xf32>
    %cst_57 = arith.constant dense<0.000000e+00> : vector<24x64xf32>
    %55 = tpu.matmul %54, %39, %cst_57 {dimension_numbers = #tpu.dot_dimension_numbers<[1], [0], [0], [1], [0, 0, 1, 1], [], []>} : vector<24x32xf32>, vector<32x64xf32>, vector<24x64xf32> -> vector<24x64xf32>
    %c2_58 = arith.constant 2 : index
    %c0_59 = arith.constant 0 : index
    %c0_60 = arith.constant 0 : index
    %56 = vector.load %arg7[%c2_58, %c0_59, %c0_60] : memref<4x64x128xf32, #tpu.memory_space<vmem>>, vector<1x64x128xf32>
    %57 = vector.shape_cast %56 : vector<1x64x128xf32> to vector<64x128xf32>
    %cst_61 = arith.constant dense<0.000000e+00> : vector<24x128xf32>
    %58 = tpu.matmul %55, %57, %cst_61 {dimension_numbers = #tpu.dot_dimension_numbers<[1], [0], [0], [1], [0, 0, 1, 1], [], []>} : vector<24x64xf32>, vector<64x128xf32>, vector<24x128xf32> -> vector<24x128xf32>
    %59 = arith.addf %52, %58 : vector<24x128xf32>
    %c3_62 = arith.constant 3 : index
    %c0_63 = arith.constant 0 : index
    %c0_64 = arith.constant 0 : index
    %60 = vector.load %arg6[%c3_62, %c0_63, %c0_64] : memref<4x24x32xf32, #tpu.memory_space<vmem>>, vector<1x24x32xf32>
    %61 = vector.shape_cast %60 : vector<1x24x32xf32> to vector<24x32xf32>
    %cst_65 = arith.constant dense<0.000000e+00> : vector<24x64xf32>
    %62 = tpu.matmul %61, %39, %cst_65 {dimension_numbers = #tpu.dot_dimension_numbers<[1], [0], [0], [1], [0, 0, 1, 1], [], []>} : vector<24x32xf32>, vector<32x64xf32>, vector<24x64xf32> -> vector<24x64xf32>
    %c3_66 = arith.constant 3 : index
    %c0_67 = arith.constant 0 : index
    %c0_68 = arith.constant 0 : index
    %63 = vector.load %arg7[%c3_66, %c0_67, %c0_68] : memref<4x64x128xf32, #tpu.memory_space<vmem>>, vector<1x64x128xf32>
    %64 = vector.shape_cast %63 : vector<1x64x128xf32> to vector<64x128xf32>
    %cst_69 = arith.constant dense<0.000000e+00> : vector<24x128xf32>
    %65 = tpu.matmul %62, %64, %cst_69 {dimension_numbers = #tpu.dot_dimension_numbers<[1], [0], [0], [1], [0, 0, 1, 1], [], []>} : vector<24x64xf32>, vector<64x128xf32>, vector<24x128xf32> -> vector<24x128xf32>
    %66 = arith.addf %59, %65 : vector<24x128xf32>
    %c0_70 = arith.constant 0 : index
    %c0_71 = arith.constant 0 : index
    %67 = vector.load %arg8[%c0_70, %c0_71] : memref<1x128xf32, #tpu.memory_space<vmem>>, vector<1x128xf32>
    %68 = vector.broadcast %67 : vector<1x128xf32> to vector<24x128xf32>
    %69 = arith.addf %66, %68 : vector<24x128xf32>
    %cst_72 = arith.constant 0.000000e+00 : f32
    %70 = vector.broadcast %cst_72 : f32 to vector<24x128xf32>
    %71 = arith.maximumf %69, %70 : vector<24x128xf32>
    %c0_73 = arith.constant 0 : index
    %c0_74 = arith.constant 0 : index
    %c0_75 = arith.constant 0 : index
    %72 = vector.load %arg9[%c0_73, %c0_74, %c0_75] : memref<9x8x24xf32, #tpu.memory_space<vmem>>, vector<1x8x24xf32>
    %73 = vector.shape_cast %72 : vector<1x8x24xf32> to vector<8x24xf32>
    %cst_76 = arith.constant dense<0.000000e+00> : vector<8x128xf32>
    %74 = tpu.matmul %73, %71, %cst_76 {dimension_numbers = #tpu.dot_dimension_numbers<[1], [0], [0], [1], [0, 0, 1, 1], [], []>} : vector<8x24xf32>, vector<24x128xf32>, vector<8x128xf32> -> vector<8x128xf32>
    %c0_77 = arith.constant 0 : index
    %c0_78 = arith.constant 0 : index
    %c0_79 = arith.constant 0 : index
    %75 = vector.load %arg10[%c0_77, %c0_78, %c0_79] : memref<9x128x128xf32, #tpu.memory_space<vmem>>, vector<1x128x128xf32>
    %76 = vector.shape_cast %75 : vector<1x128x128xf32> to vector<128x128xf32>
    %cst_80 = arith.constant dense<0.000000e+00> : vector<8x128xf32>
    %77 = tpu.matmul %74, %76, %cst_80 {dimension_numbers = #tpu.dot_dimension_numbers<[1], [0], [0], [1], [0, 0, 1, 1], [], []>} : vector<8x128xf32>, vector<128x128xf32>, vector<8x128xf32> -> vector<8x128xf32>
    %c1_81 = arith.constant 1 : index
    %c0_82 = arith.constant 0 : index
    %c0_83 = arith.constant 0 : index
    %78 = vector.load %arg9[%c1_81, %c0_82, %c0_83] : memref<9x8x24xf32, #tpu.memory_space<vmem>>, vector<1x8x24xf32>
    %79 = vector.shape_cast %78 : vector<1x8x24xf32> to vector<8x24xf32>
    %cst_84 = arith.constant dense<0.000000e+00> : vector<8x128xf32>
    %80 = tpu.matmul %79, %71, %cst_84 {dimension_numbers = #tpu.dot_dimension_numbers<[1], [0], [0], [1], [0, 0, 1, 1], [], []>} : vector<8x24xf32>, vector<24x128xf32>, vector<8x128xf32> -> vector<8x128xf32>
    %c1_85 = arith.constant 1 : index
    %c0_86 = arith.constant 0 : index
    %c0_87 = arith.constant 0 : index
    %81 = vector.load %arg10[%c1_85, %c0_86, %c0_87] : memref<9x128x128xf32, #tpu.memory_space<vmem>>, vector<1x128x128xf32>
    %82 = vector.shape_cast %81 : vector<1x128x128xf32> to vector<128x128xf32>
    %cst_88 = arith.constant dense<0.000000e+00> : vector<8x128xf32>
    %83 = tpu.matmul %80, %82, %cst_88 {dimension_numbers = #tpu.dot_dimension_numbers<[1], [0], [0], [1], [0, 0, 1, 1], [], []>} : vector<8x128xf32>, vector<128x128xf32>, vector<8x128xf32> -> vector<8x128xf32>
    %84 = arith.addf %77, %83 : vector<8x128xf32>
    %c2_89 = arith.constant 2 : index
    %c0_90 = arith.constant 0 : index
    %c0_91 = arith.constant 0 : index
    %85 = vector.load %arg9[%c2_89, %c0_90, %c0_91] : memref<9x8x24xf32, #tpu.memory_space<vmem>>, vector<1x8x24xf32>
    %86 = vector.shape_cast %85 : vector<1x8x24xf32> to vector<8x24xf32>
    %cst_92 = arith.constant dense<0.000000e+00> : vector<8x128xf32>
    %87 = tpu.matmul %86, %71, %cst_92 {dimension_numbers = #tpu.dot_dimension_numbers<[1], [0], [0], [1], [0, 0, 1, 1], [], []>} : vector<8x24xf32>, vector<24x128xf32>, vector<8x128xf32> -> vector<8x128xf32>
    %c2_93 = arith.constant 2 : index
    %c0_94 = arith.constant 0 : index
    %c0_95 = arith.constant 0 : index
    %88 = vector.load %arg10[%c2_93, %c0_94, %c0_95] : memref<9x128x128xf32, #tpu.memory_space<vmem>>, vector<1x128x128xf32>
    %89 = vector.shape_cast %88 : vector<1x128x128xf32> to vector<128x128xf32>
    %cst_96 = arith.constant dense<0.000000e+00> : vector<8x128xf32>
    %90 = tpu.matmul %87, %89, %cst_96 {dimension_numbers = #tpu.dot_dimension_numbers<[1], [0], [0], [1], [0, 0, 1, 1], [], []>} : vector<8x128xf32>, vector<128x128xf32>, vector<8x128xf32> -> vector<8x128xf32>
    %91 = arith.addf %84, %90 : vector<8x128xf32>
    %c3_97 = arith.constant 3 : index
    %c0_98 = arith.constant 0 : index
    %c0_99 = arith.constant 0 : index
    %92 = vector.load %arg9[%c3_97, %c0_98, %c0_99] : memref<9x8x24xf32, #tpu.memory_space<vmem>>, vector<1x8x24xf32>
    %93 = vector.shape_cast %92 : vector<1x8x24xf32> to vector<8x24xf32>
    %cst_100 = arith.constant dense<0.000000e+00> : vector<8x128xf32>
    %94 = tpu.matmul %93, %71, %cst_100 {dimension_numbers = #tpu.dot_dimension_numbers<[1], [0], [0], [1], [0, 0, 1, 1], [], []>} : vector<8x24xf32>, vector<24x128xf32>, vector<8x128xf32> -> vector<8x128xf32>
    %c3_101 = arith.constant 3 : index
    %c0_102 = arith.constant 0 : index
    %c0_103 = arith.constant 0 : index
    %95 = vector.load %arg10[%c3_101, %c0_102, %c0_103] : memref<9x128x128xf32, #tpu.memory_space<vmem>>, vector<1x128x128xf32>
    %96 = vector.shape_cast %95 : vector<1x128x128xf32> to vector<128x128xf32>
    %cst_104 = arith.constant dense<0.000000e+00> : vector<8x128xf32>
    %97 = tpu.matmul %94, %96, %cst_104 {dimension_numbers = #tpu.dot_dimension_numbers<[1], [0], [0], [1], [0, 0, 1, 1], [], []>} : vector<8x128xf32>, vector<128x128xf32>, vector<8x128xf32> -> vector<8x128xf32>
    %98 = arith.addf %91, %97 : vector<8x128xf32>
    %c4 = arith.constant 4 : index
    %c0_105 = arith.constant 0 : index
    %c0_106 = arith.constant 0 : index
    %99 = vector.load %arg9[%c4, %c0_105, %c0_106] : memref<9x8x24xf32, #tpu.memory_space<vmem>>, vector<1x8x24xf32>
    %100 = vector.shape_cast %99 : vector<1x8x24xf32> to vector<8x24xf32>
    %cst_107 = arith.constant dense<0.000000e+00> : vector<8x128xf32>
    %101 = tpu.matmul %100, %71, %cst_107 {dimension_numbers = #tpu.dot_dimension_numbers<[1], [0], [0], [1], [0, 0, 1, 1], [], []>} : vector<8x24xf32>, vector<24x128xf32>, vector<8x128xf32> -> vector<8x128xf32>
    %c4_108 = arith.constant 4 : index
    %c0_109 = arith.constant 0 : index
    %c0_110 = arith.constant 0 : index
    %102 = vector.load %arg10[%c4_108, %c0_109, %c0_110] : memref<9x128x128xf32, #tpu.memory_space<vmem>>, vector<1x128x128xf32>
    %103 = vector.shape_cast %102 : vector<1x128x128xf32> to vector<128x128xf32>
    %cst_111 = arith.constant dense<0.000000e+00> : vector<8x128xf32>
    %104 = tpu.matmul %101, %103, %cst_111 {dimension_numbers = #tpu.dot_dimension_numbers<[1], [0], [0], [1], [0, 0, 1, 1], [], []>} : vector<8x128xf32>, vector<128x128xf32>, vector<8x128xf32> -> vector<8x128xf32>
    %105 = arith.addf %98, %104 : vector<8x128xf32>
    %c5 = arith.constant 5 : index
    %c0_112 = arith.constant 0 : index
    %c0_113 = arith.constant 0 : index
    %106 = vector.load %arg9[%c5, %c0_112, %c0_113] : memref<9x8x24xf32, #tpu.memory_space<vmem>>, vector<1x8x24xf32>
    %107 = vector.shape_cast %106 : vector<1x8x24xf32> to vector<8x24xf32>
    %cst_114 = arith.constant dense<0.000000e+00> : vector<8x128xf32>
    %108 = tpu.matmul %107, %71, %cst_114 {dimension_numbers = #tpu.dot_dimension_numbers<[1], [0], [0], [1], [0, 0, 1, 1], [], []>} : vector<8x24xf32>, vector<24x128xf32>, vector<8x128xf32> -> vector<8x128xf32>
    %c5_115 = arith.constant 5 : index
    %c0_116 = arith.constant 0 : index
    %c0_117 = arith.constant 0 : index
    %109 = vector.load %arg10[%c5_115, %c0_116, %c0_117] : memref<9x128x128xf32, #tpu.memory_space<vmem>>, vector<1x128x128xf32>
    %110 = vector.shape_cast %109 : vector<1x128x128xf32> to vector<128x128xf32>
    %cst_118 = arith.constant dense<0.000000e+00> : vector<8x128xf32>
    %111 = tpu.matmul %108, %110, %cst_118 {dimension_numbers = #tpu.dot_dimension_numbers<[1], [0], [0], [1], [0, 0, 1, 1], [], []>} : vector<8x128xf32>, vector<128x128xf32>, vector<8x128xf32> -> vector<8x128xf32>
    %112 = arith.addf %105, %111 : vector<8x128xf32>
    %c6 = arith.constant 6 : index
    %c0_119 = arith.constant 0 : index
    %c0_120 = arith.constant 0 : index
    %113 = vector.load %arg9[%c6, %c0_119, %c0_120] : memref<9x8x24xf32, #tpu.memory_space<vmem>>, vector<1x8x24xf32>
    %114 = vector.shape_cast %113 : vector<1x8x24xf32> to vector<8x24xf32>
    %cst_121 = arith.constant dense<0.000000e+00> : vector<8x128xf32>
    %115 = tpu.matmul %114, %71, %cst_121 {dimension_numbers = #tpu.dot_dimension_numbers<[1], [0], [0], [1], [0, 0, 1, 1], [], []>} : vector<8x24xf32>, vector<24x128xf32>, vector<8x128xf32> -> vector<8x128xf32>
    %c6_122 = arith.constant 6 : index
    %c0_123 = arith.constant 0 : index
    %c0_124 = arith.constant 0 : index
    %116 = vector.load %arg10[%c6_122, %c0_123, %c0_124] : memref<9x128x128xf32, #tpu.memory_space<vmem>>, vector<1x128x128xf32>
    %117 = vector.shape_cast %116 : vector<1x128x128xf32> to vector<128x128xf32>
    %cst_125 = arith.constant dense<0.000000e+00> : vector<8x128xf32>
    %118 = tpu.matmul %115, %117, %cst_125 {dimension_numbers = #tpu.dot_dimension_numbers<[1], [0], [0], [1], [0, 0, 1, 1], [], []>} : vector<8x128xf32>, vector<128x128xf32>, vector<8x128xf32> -> vector<8x128xf32>
    %119 = arith.addf %112, %118 : vector<8x128xf32>
    %c7 = arith.constant 7 : index
    %c0_126 = arith.constant 0 : index
    %c0_127 = arith.constant 0 : index
    %120 = vector.load %arg9[%c7, %c0_126, %c0_127] : memref<9x8x24xf32, #tpu.memory_space<vmem>>, vector<1x8x24xf32>
    %121 = vector.shape_cast %120 : vector<1x8x24xf32> to vector<8x24xf32>
    %cst_128 = arith.constant dense<0.000000e+00> : vector<8x128xf32>
    %122 = tpu.matmul %121, %71, %cst_128 {dimension_numbers = #tpu.dot_dimension_numbers<[1], [0], [0], [1], [0, 0, 1, 1], [], []>} : vector<8x24xf32>, vector<24x128xf32>, vector<8x128xf32> -> vector<8x128xf32>
    %c7_129 = arith.constant 7 : index
    %c0_130 = arith.constant 0 : index
    %c0_131 = arith.constant 0 : index
    %123 = vector.load %arg10[%c7_129, %c0_130, %c0_131] : memref<9x128x128xf32, #tpu.memory_space<vmem>>, vector<1x128x128xf32>
    %124 = vector.shape_cast %123 : vector<1x128x128xf32> to vector<128x128xf32>
    %cst_132 = arith.constant dense<0.000000e+00> : vector<8x128xf32>
    %125 = tpu.matmul %122, %124, %cst_132 {dimension_numbers = #tpu.dot_dimension_numbers<[1], [0], [0], [1], [0, 0, 1, 1], [], []>} : vector<8x128xf32>, vector<128x128xf32>, vector<8x128xf32> -> vector<8x128xf32>
    %126 = arith.addf %119, %125 : vector<8x128xf32>
    %c8 = arith.constant 8 : index
    %c0_133 = arith.constant 0 : index
    %c0_134 = arith.constant 0 : index
    %127 = vector.load %arg9[%c8, %c0_133, %c0_134] : memref<9x8x24xf32, #tpu.memory_space<vmem>>, vector<1x8x24xf32>
    %128 = vector.shape_cast %127 : vector<1x8x24xf32> to vector<8x24xf32>
    %cst_135 = arith.constant dense<0.000000e+00> : vector<8x128xf32>
    %129 = tpu.matmul %128, %71, %cst_135 {dimension_numbers = #tpu.dot_dimension_numbers<[1], [0], [0], [1], [0, 0, 1, 1], [], []>} : vector<8x24xf32>, vector<24x128xf32>, vector<8x128xf32> -> vector<8x128xf32>
    %c8_136 = arith.constant 8 : index
    %c0_137 = arith.constant 0 : index
    %c0_138 = arith.constant 0 : index
    %130 = vector.load %arg10[%c8_136, %c0_137, %c0_138] : memref<9x128x128xf32, #tpu.memory_space<vmem>>, vector<1x128x128xf32>
    %131 = vector.shape_cast %130 : vector<1x128x128xf32> to vector<128x128xf32>
    %cst_139 = arith.constant dense<0.000000e+00> : vector<8x128xf32>
    %132 = tpu.matmul %129, %131, %cst_139 {dimension_numbers = #tpu.dot_dimension_numbers<[1], [0], [0], [1], [0, 0, 1, 1], [], []>} : vector<8x128xf32>, vector<128x128xf32>, vector<8x128xf32> -> vector<8x128xf32>
    %133 = arith.addf %126, %132 : vector<8x128xf32>
    %c0_140 = arith.constant 0 : index
    %c0_141 = arith.constant 0 : index
    %134 = vector.load %arg11[%c0_140, %c0_141] : memref<1x128xf32, #tpu.memory_space<vmem>>, vector<1x128xf32>
    %135 = vector.broadcast %134 : vector<1x128xf32> to vector<8x128xf32>
    %136 = arith.addf %133, %135 : vector<8x128xf32>
    %cst_142 = arith.constant 0.000000e+00 : f32
    %137 = vector.broadcast %cst_142 : f32 to vector<8x128xf32>
    %138 = arith.maximumf %136, %137 : vector<8x128xf32>
    %c0_143 = arith.constant 0 : index
    %c0_144 = arith.constant 0 : index
    %139 = vector.load %arg12[%c0_143, %c0_144] : memref<128x128xf32, #tpu.memory_space<vmem>>, vector<128x128xf32>
    %cst_145 = arith.constant dense<0.000000e+00> : vector<8x128xf32>
    %140 = tpu.matmul %138, %139, %cst_145 {dimension_numbers = #tpu.dot_dimension_numbers<[1], [0], [0], [1], [0, 0, 1, 1], [], []>} : vector<8x128xf32>, vector<128x128xf32>, vector<8x128xf32> -> vector<8x128xf32>
    %c0_146 = arith.constant 0 : index
    %c0_147 = arith.constant 0 : index
    %141 = vector.load %arg13[%c0_146, %c0_147] : memref<1x128xf32, #tpu.memory_space<vmem>>, vector<1x128xf32>
    %142 = vector.broadcast %141 : vector<1x128xf32> to vector<8x128xf32>
    %143 = arith.addf %140, %142 : vector<8x128xf32>
    %c0_148 = arith.constant 0 : index
    %c0_149 = arith.constant 0 : index
    %144 = vector.load %arg14[%c0_148, %c0_149] : memref<8x128xf32, #tpu.memory_space<vmem>>, vector<8x128xf32>
    tpu.vector_store %arg14[%c0_148, %c0_149], %143 {strides = array<i32>} : memref<8x128xf32, #tpu.memory_space<vmem>>, vector<8x128xf32>,
    return
  }
}

</mosaic_0001>

<llo_original>
// kernel: forward.1
$region0: #{forward.1}
  #allocation0 [shape = 'u32[]', space=smem, size = 0x4, offset = 0x4, fixed_abs, tag = 'smem constant byte address 0x4 - core index']
  #allocation1 [shape = 'u32[144,128]{1,0:T(1,128)}', space=vmem, size = 0x12000, scoped, tag = 'internal scratch']
  %s0 = inlined_call_operand.vmem [shape: f32[128,16], index: 0, kind: input, shape index: {}]
  %s1 = inlined_call_operand.vmem [shape: f32[16,32], index: 1, kind: input, shape index: {}]
  %s2 = inlined_call_operand.vmem [shape: f32[1,32], index: 2, kind: input, shape index: {}]
  %s3 = inlined_call_operand.hbm [shape: f32[4,32,128], index: 3, kind: input, shape index: {}]
  %s4 = inlined_call_operand.hbm [shape: f32[4,32,64], index: 4, kind: input, shape index: {}]
  %s5 = inlined_call_operand.vmem [shape: f32[1,64], index: 5, kind: input, shape index: {}]
  %s6 = inlined_call_operand.hbm [shape: f32[4,24,32], index: 6, kind: input, shape index: {}]
  %s7 = inlined_call_operand.vmem [shape: f32[4,64,128], index: 7, kind: input, shape index: {}]
  %s8 = inlined_call_operand.vmem [shape: f32[1,128], index: 8, kind: input, shape index: {}]
  %s9 = inlined_call_operand.hbm [shape: f32[9,8,24], index: 9, kind: input, shape index: {}]
  %s10 = inlined_call_operand.vmem [shape: f32[9,128,128], index: 10, kind: input, shape index: {}]
  %s11 = inlined_call_operand.vmem [shape: f32[1,128], index: 11, kind: input, shape index: {}]
  %s12 = inlined_call_operand.hbm [shape: f32[128,128], index: 12, kind: input, shape index: {}]
  %s13 = inlined_call_operand.vmem [shape: f32[1,128], index: 13, kind: input, shape index: {}]
  %s14 = inlined_call_operand.vmem [shape: f32[8,128], index: 14, kind: output, shape index: {}]
  %s15 = sld [smem:[#allocation0]]
  $region86: #{forward.1} parent=0
    _
  %s17 = ssub.s32 1, %s15
  %s18 = scalar_select 0, %s17, %s15
  $region1: #{forward.1} parent=0
    #allocation2 [shape = 'u8[65536]{0}', space=vmem, size = 0x10000, scoped, tag = 'input window, operand 3, single buffered']
    #allocation3 [shape = 's32[1]{0}', space=sflag, size = 0x4, scoped, tag = 'scoped memory for forward.1']
    #allocation4 [shape = 'u8[65536]{0}', space=vmem, size = 0x10000, scoped, tag = 'input window, operand 4, single buffered']
    #allocation5 [shape = 's32[1]{0}', space=sflag, size = 0x4, scoped, tag = 'scoped memory for forward.1']
    #allocation6 [shape = 'u8[49152]{0}', space=vmem, size = 0xc000, scoped, tag = 'input window, operand 6, single buffered']
    #allocation7 [shape = 'u8[36864]{0}', space=vmem, size = 0x9000, scoped, tag = 'input window, operand 9, single buffered']
    #allocation8 [shape = 's32[1]{0}', space=sflag, size = 0x4, scoped, tag = 'scoped memory for forward.1']
    #allocation9 [shape = 'u8[65536]{0}', space=vmem, size = 0x10000, scoped, tag = 'input window, operand 12, single buffered']
    %19 = vsyncpa [#allocation3], 0
    %20 = vsyncpa [#allocation5], 0
    %21 = vsyncpa [#allocation8], 0
    // Predicated region
    $region2: #{forward.1} parent=1 // pred_check
      _
    $region3: #{forward.1} parent=1 // pred_check_branch
      %23 = sbr.rel (0) target = $region5
    $region4: #{forward.1} parent=1 // pred_region
      _
    $region5: #{forward.1} parent=1 // pred_fallthru
      _
    // Predicated region
    $region6: #{forward.1} parent=1 // pred_check
      _
    $region7: #{forward.1} parent=1 // pred_check_branch
      %25 = sbr.rel (0) target = $region9
    $region8: #{forward.1} parent=1 // pred_region
      _
    $region9: #{forward.1} parent=1 // pred_fallthru
      _
    // Predicated region
    $region10: #{forward.1} parent=1 // pred_check
      _
    $region11: #{forward.1} parent=1 // pred_check_branch
      %27 = sbr.rel (0) target = $region13
    $region12: #{forward.1} parent=1 // pred_region
      _
    $region13: #{forward.1} parent=1 // pred_fallthru
      _
    // Predicated region
    $region14: #{forward.1} parent=1 // pred_check
      _
    $region15: #{forward.1} parent=1 // pred_check_branch
      %29 = sbr.rel (0) target = $region17
    $region16: #{forward.1} parent=1 // pred_region
      %s31 = ssub.s32 2048, 2048
      %32 = vsyncadd [#allocation3], %s31
      %s33 = sshll.u32 [#allocation2], 4
      %s34 = int_to_ptr.vmem [resolvable:$true] %s33
      %39 = dma.hbm_to_vmem [thread:$0]  %s3, 2048, %s34, [#allocation3], 128, 128, 8
    $region17: #{forward.1} parent=1 // pred_fallthru
      _
    // Predicated region
    $region18: #{forward.1} parent=1 // pred_check
      _
    $region19: #{forward.1} parent=1 // pred_check_branch
      %41 = sbr.rel (0) target = $region21
    $region20: #{forward.1} parent=1 // pred_region
      %s43 = ssub.s32 2048, 2048
      %44 = vsyncadd [#allocation5], %s43
      %s45 = sshll.u32 [#allocation4], 4
      %s46 = int_to_ptr.vmem [resolvable:$true] %s45
      %51 = dma.hbm_to_vmem [thread:$0]  %s4, 2048, %s46, [#allocation5], 128, 128, 8
    $region21: #{forward.1} parent=1 // pred_fallthru
      _
    // Predicated region
    $region22: #{forward.1} parent=1 // pred_check
      _
    $region23: #{forward.1} parent=1 // pred_check_branch
      %53 = sbr.rel (0) target = $region25
    $region24: #{forward.1} parent=1 // pred_region
      _
    $region25: #{forward.1} parent=1 // pred_fallthru
      _
    // Predicated region
    $region26: #{forward.1} parent=1 // pred_check
      _
    $region27: #{forward.1} parent=1 // pred_check_branch
      %55 = sbr.rel (0) target = $region29
    $region28: #{forward.1} parent=1 // pred_region
      %s57 = ssub.s32 1536, 1536
      %58 = vsyncadd [#allocation5], %s57
      %s59 = sshll.u32 [#allocation6], 4
      %s60 = int_to_ptr.vmem [resolvable:$true] %s59
      %65 = dma.hbm_to_vmem [thread:$0]  %s6, 1536, %s60, [#allocation5], 128, 128, 8
    $region29: #{forward.1} parent=1 // pred_fallthru
      _
    // Predicated region
    $region30: #{forward.1} parent=1 // pred_check
      _
    $region31: #{forward.1} parent=1 // pred_check_branch
      %67 = sbr.rel (0) target = $region33
    $region32: #{forward.1} parent=1 // pred_region
      _
    $region33: #{forward.1} parent=1 // pred_fallthru
      _
    // Predicated region
    $region34: #{forward.1} parent=1 // pred_check
      _
    $region35: #{forward.1} parent=1 // pred_check_branch
      %69 = sbr.rel (0) target = $region37
    $region36: #{forward.1} parent=1 // pred_region
      _
    $region37: #{forward.1} parent=1 // pred_fallthru
      _
    // Predicated region
    $region38: #{forward.1} parent=1 // pred_check
      _
    $region39: #{forward.1} parent=1 // pred_check_branch
      %71 = sbr.rel (0) target = $region41
    $region40: #{forward.1} parent=1 // pred_region
      %s73 = ssub.s32 1152, 1152
      %74 = vsyncadd [#allocation8], %s73
      %s75 = sshll.u32 [#allocation7], 4
      %s76 = int_to_ptr.vmem [resolvable:$true] %s75
      %81 = dma.hbm_to_vmem [thread:$0]  %s9, 1152, %s76, [#allocation8], 128, 128, 8
    $region41: #{forward.1} parent=1 // pred_fallthru
      _
    // Predicated region
    $region42: #{forward.1} parent=1 // pred_check
      _
    $region43: #{forward.1} parent=1 // pred_check_branch
      %83 = sbr.rel (0) target = $region45
    $region44: #{forward.1} parent=1 // pred_region
      _
    $region45: #{forward.1} parent=1 // pred_fallthru
      _
    // Predicated region
    $region46: #{forward.1} parent=1 // pred_check
      _
    $region47: #{forward.1} parent=1 // pred_check_branch
      %85 = sbr.rel (0) target = $region49
    $region48: #{forward.1} parent=1 // pred_region
      _
    $region49: #{forward.1} parent=1 // pred_fallthru
      _
    // Predicated region
    $region50: #{forward.1} parent=1 // pred_check
      _
    $region51: #{forward.1} parent=1 // pred_check_branch
      %87 = sbr.rel (0) target = $region53
    $region52: #{forward.1} parent=1 // pred_region
      %s89 = ssub.s32 2048, 2048
      %90 = vsyncadd [#allocation8], %s89
      %s91 = sshll.u32 [#allocation9], 4
      %s92 = int_to_ptr.vmem [resolvable:$true] %s91
      %97 = dma.hbm_to_vmem [thread:$0]  %s12, 2048, %s92, [#allocation8], 128, 128, 8
    $region53: #{forward.1} parent=1 // pred_fallthru
      _
    // Predicated region
    $region54: #{forward.1} parent=1 // pred_check
      _
    $region55: #{forward.1} parent=1 // pred_check_branch
      %99 = sbr.rel (0) target = $region57
    $region56: #{forward.1} parent=1 // pred_region
      _
    $region57: #{forward.1} parent=1 // pred_fallthru
      _
    // Predicated region
    $region58: #{forward.1} parent=1 // pred_check
      _
    $region59: #{forward.1} parent=1 // pred_check_branch
      %101 = sbr.rel (0) target = $region61
    $region60: #{forward.1} parent=1 // pred_region
      %102 = dma.done [#allocation3], 2048
    $region61: #{forward.1} parent=1 // pred_fallthru
      _
    // Predicated region
    $region62: #{forward.1} parent=1 // pred_check
      _
    $region63: #{forward.1} parent=1 // pred_check_branch
      %104 = sbr.rel (0) target = $region65
    $region64: #{forward.1} parent=1 // pred_region
      %105 = dma.done [#allocation5], 2048
    $region65: #{forward.1} parent=1 // pred_fallthru
      _
    // Predicated region
    $region66: #{forward.1} parent=1 // pred_check
      _
    $region67: #{forward.1} parent=1 // pred_check_branch
      %107 = sbr.rel (0) target = $region69
    $region68: #{forward.1} parent=1 // pred_region
      %108 = dma.done [#allocation5], 1536
    $region69: #{forward.1} parent=1 // pred_fallthru
      _
    // Predicated region
    $region70: #{forward.1} parent=1 // pred_check
      _
    $region71: #{forward.1} parent=1 // pred_check_branch
      %110 = sbr.rel (0) target = $region73
    $region72: #{forward.1} parent=1 // pred_region
      %111 = dma.done [#allocation8], 1152
    $region73: #{forward.1} parent=1 // pred_fallthru
      _
    // Predicated region
    $region74: #{forward.1} parent=1 // pred_check
      _
    $region75: #{forward.1} parent=1 // pred_check_branch
      %113 = sbr.rel (0) target = $region77
    $region76: #{forward.1} parent=1 // pred_region
      %114 = dma.done [#allocation8], 2048
    $region77: #{forward.1} parent=1 // pred_fallthru
      _
    %v115 = vld [vmem:[%s0] sm:$0xff]
    %v116 = vld [vmem:[%s0 + $0x8] sm:$0xff]
    %v117 = vld [vmem:[%s0 + $0x10] sm:$0xff]
    %v118 = vld [vmem:[%s0 + $0x18] sm:$0xff]
    %v119 = vld [vmem:[%s0 + $0x20] sm:$0xff]
    %v120 = vld [vmem:[%s0 + $0x28] sm:$0xff]
    %v121 = vld [vmem:[%s0 + $0x30] sm:$0xff]
    %v122 = vld [vmem:[%s0 + $0x38] sm:$0xff]
    %v123 = vld [vmem:[%s0 + $0x40] sm:$0xff]
    %v124 = vld [vmem:[%s0 + $0x48] sm:$0xff]
    %v125 = vld [vmem:[%s0 + $0x50] sm:$0xff]
    %v126 = vld [vmem:[%s0 + $0x58] sm:$0xff]
    %v127 = vld [vmem:[%s0 + $0x60] sm:$0xff]
    %v128 = vld [vmem:[%s0 + $0x68] sm:$0xff]
    %v129 = vld [vmem:[%s0 + $0x70] sm:$0xff]
    %v130 = vld [vmem:[%s0 + $0x78] sm:$0xff]
    %v131 = vld [vmem:[%s1] sm:$0xff]
    %v132 = vld [vmem:[%s1 + $0x8] sm:$0xff]
    %v133 = vld [vmem:[%s2] sm:$0x1]
    %v135 = vlaneseq
    %v136 = vshrl.u32 %v135, 7
    %v137 = vsub.s32 0, %v136
    %v138 = vrot.slane %v133, %v137
    %vm140 = vcmask 130048
    %v142 = vsel %vm140, %v115, 0
    %v145 = vsel %vm140, %v116, 0
    %v148 = vsel %vm140, %v117, 0
    %v151 = vsel %vm140, %v118, 0
    %v154 = vsel %vm140, %v119, 0
    %v157 = vsel %vm140, %v120, 0
    %v160 = vsel %vm140, %v121, 0
    %v163 = vsel %vm140, %v122, 0
    %v166 = vsel %vm140, %v123, 0
    %v169 = vsel %vm140, %v124, 0
    %v172 = vsel %vm140, %v125, 0
    %v175 = vsel %vm140, %v126, 0
    %v178 = vsel %vm140, %v127, 0
    %v181 = vsel %vm140, %v128, 0
    %v184 = vsel %vm140, %v129, 0
    %v187 = vsel %vm140, %v130, 0
    %189 = vmatprep.subr.mxu0 0.0
    %190 = vmatpush1.msra.mxu0 0.0
    %191 = vmatprep.subr.mxu0 0.0
    %192 = vmatpush1.msra.mxu0 0.0
    %193 = vmatprep.subr.mxu0 0.0
    %194 = vmatpush1.msra.mxu0 0.0
    %195 = vmatprep.subr.mxu0 0.0
    %196 = vmatpush1.msra.mxu0 0.0
    %197 = vmatprep.subr.mxu0 0.0
    %198 = vmatpush1.msra.mxu0 0.0
    %199 = vmatprep.subr.mxu0 0.0
    %200 = vmatpush1.msra.mxu0 0.0
    %201 = vmatprep.subr.mxu0 0.0
    %202 = vmatpush1.msra.mxu0 0.0
    %203 = vmatprep.subr.mxu0 0.0
    %204 = vmatpush1.msra.mxu0 0.0
    %205 = vmatprep.subr.mxu0 0.0
    %206 = vmatpush1.msra.mxu0 0.0
    %207 = vmatprep.subr.mxu0 0.0
    %208 = vmatpush1.msra.mxu0 0.0
    %209 = vmatprep.subr.mxu0 0.0
    %210 = vmatpush1.msra.mxu0 0.0
    %211 = vmatprep.subr.mxu0 0.0
    %212 = vmatpush1.msra.mxu0 0.0
    %213 = vmatprep.subr.mxu0 0.0
    %214 = vmatpush1.msra.mxu0 0.0
    %215 = vmatprep.subr.mxu0 0.0
    %216 = vmatpush1.msra.mxu0 0.0
    %217 = vmatprep.subr.mxu0 0.0
    %218 = vmatpush1.msra.mxu0 %v132
    %219 = vmatprep.subr.mxu0 0.0
    %220 = vmatpush1.msra.mxu0 %v131
    %221 = vmatprep.subr.mxu0 0.0
    %222 = vmatpush2.msra.mxu0 0.0
    %223 = vmatprep.subr.mxu0 0.0
    %224 = vmatpush2.msra.mxu0 0.0
    %225 = vmatprep.subr.mxu0 0.0
    %226 = vmatpush2.msra.mxu0 0.0
    %227 = vmatprep.subr.mxu0 0.0
    %228 = vmatpush2.msra.mxu0 0.0
    %229 = vmatprep.subr.mxu0 0.0
    %230 = vmatpush2.msra.mxu0 0.0
    %231 = vmatprep.subr.mxu0 0.0
    %232 = vmatpush2.msra.mxu0 0.0
    %233 = vmatprep.subr.mxu0 0.0
    %234 = vmatpush2.msra.mxu0 0.0
    %235 = vmatprep.subr.mxu0 0.0
    %236 = vmatpush2.msra.mxu0 0.0
    %237 = vmatprep.subr.mxu0 0.0
    %238 = vmatpush2.msra.mxu0 0.0
    %239 = vmatprep.subr.mxu0 0.0
    %240 = vmatpush2.msra.mxu0 0.0
    %241 = vmatprep.subr.mxu0 0.0
    %242 = vmatpush2.msra.mxu0 0.0
    %243 = vmatprep.subr.mxu0 0.0
    %244 = vmatpush2.msra.mxu0 0.0
    %245 = vmatprep.subr.mxu0 0.0
    %246 = vmatpush2.msra.mxu0 0.0
    %247 = vmatprep.subr.mxu0 0.0
    %248 = vmatpush2.msra.mxu0 0.0
    %249 = vmatprep.subr.mxu0 0.0
    %250 = vmatpush2.msra.mxu0 0.0
    %251 = vmatprep.subr.mxu0 0.0
    %252 = vmatpush2.msra.mxu0 0.0
    %253 = vmatprep.mubr.f32.mxu0 0.0
    %254 = vmatmul.mubr.f32.gmra.mxu0 %v142
    %v255 = vpop.f32.mrf.mxu0
    %v256 = vadd.f32 %v138, %v255
    %v257 = vpop.f32.mrf.mxu0
    %258 = vmatprep.mubr.f32.mxu0 0.0
    %259 = vmatmul.mubr.f32.gmra.mxu0 %v145
    %v260 = vpop.f32.mrf.mxu0
    %v261 = vadd.f32 %v138, %v260
    %v262 = vpop.f32.mrf.mxu0
    %263 = vmatprep.mubr.f32.mxu0 0.0
    %264 = vmatmul.mubr.f32.gmra.mxu0 %v148
    %v265 = vpop.f32.mrf.mxu0
    %v266 = vadd.f32 %v138, %v265
    %v267 = vpop.f32.mrf.mxu0
    %268 = vmatprep.mubr.f32.mxu0 0.0
    %269 = vmatmul.mubr.f32.gmra.mxu0 %v151
    %v270 = vpop.f32.mrf.mxu0
    %v271 = vadd.f32 %v138, %v270
    %v272 = vpop.f32.mrf.mxu0
    %273 = vmatprep.mubr.f32.mxu0 0.0
    %274 = vmatmul.mubr.f32.gmra.mxu0 %v154
    %v275 = vpop.f32.mrf.mxu0
    %v276 = vadd.f32 %v138, %v275
    %v277 = vpop.f32.mrf.mxu0
    %278 = vmatprep.mubr.f32.mxu0 0.0
    %279 = vmatmul.mubr.f32.gmra.mxu0 %v157
    %v280 = vpop.f32.mrf.mxu0
    %v281 = vadd.f32 %v138, %v280
    %v282 = vpop.f32.mrf.mxu0
    %283 = vmatprep.mubr.f32.mxu0 0.0
    %284 = vmatmul.mubr.f32.gmra.mxu0 %v160
    %v285 = vpop.f32.mrf.mxu0
    %v286 = vadd.f32 %v138, %v285
    %v287 = vpop.f32.mrf.mxu0
    %288 = vmatprep.mubr.f32.mxu0 0.0
    %289 = vmatmul.mubr.f32.gmra.mxu0 %v163
    %v290 = vpop.f32.mrf.mxu0
    %v291 = vadd.f32 %v138, %v290
    %v292 = vpop.f32.mrf.mxu0
    %293 = vmatprep.mubr.f32.mxu0 0.0
    %294 = vmatmul.mubr.f32.gmra.mxu0 %v166
    %v295 = vpop.f32.mrf.mxu0
    %v296 = vadd.f32 %v138, %v295
    %v297 = vpop.f32.mrf.mxu0
    %298 = vmatprep.mubr.f32.mxu0 0.0
    %299 = vmatmul.mubr.f32.gmra.mxu0 %v169
    %v300 = vpop.f32.mrf.mxu0
    %v301 = vadd.f32 %v138, %v300
    %v302 = vpop.f32.mrf.mxu0
    %303 = vmatprep.mubr.f32.mxu0 0.0
    %304 = vmatmul.mubr.f32.gmra.mxu0 %v172
    %v305 = vpop.f32.mrf.mxu0
    %v306 = vadd.f32 %v138, %v305
    %v307 = vpop.f32.mrf.mxu0
    %308 = vmatprep.mubr.f32.mxu0 0.0
    %309 = vmatmul.mubr.f32.gmra.mxu0 %v175
    %v310 = vpop.f32.mrf.mxu0
    %v311 = vadd.f32 %v138, %v310
    %v312 = vpop.f32.mrf.mxu0
    %313 = vmatprep.mubr.f32.mxu0 0.0
    %314 = vmatmul.mubr.f32.gmra.mxu0 %v178
    %v315 = vpop.f32.mrf.mxu0
    %v316 = vadd.f32 %v138, %v315
    %v317 = vpop.f32.mrf.mxu0
    %318 = vmatprep.mubr.f32.mxu0 0.0
    %319 = vmatmul.mubr.f32.gmra.mxu0 %v181
    %v320 = vpop.f32.mrf.mxu0
    %v321 = vadd.f32 %v138, %v320
    %v322 = vpop.f32.mrf.mxu0
    %323 = vmatprep.mubr.f32.mxu0 0.0
    %324 = vmatmul.mubr.f32.gmra.mxu0 %v184
    %v325 = vpop.f32.mrf.mxu0
    %v326 = vadd.f32 %v138, %v325
    %v327 = vpop.f32.mrf.mxu0
    %328 = vmatprep.mubr.f32.mxu0 0.0
    %329 = vmatmul.mubr.f32.gmra.mxu0 %v187
    %v330 = vpop.f32.mrf.mxu0
    %v331 = vadd.f32 %v138, %v330
    %v332 = vpop.f32.mrf.mxu0
    %333 = vdwg.mxu0
    %v334 = vmax.f32 %v256, 0.0
    %v335 = vmax.f32 %v261, 0.0
    %v336 = vmax.f32 %v266, 0.0
    %v337 = vmax.f32 %v271, 0.0
    %v338 = vmax.f32 %v276, 0.0
    %v339 = vmax.f32 %v281, 0.0
    %v340 = vmax.f32 %v286, 0.0
    %v341 = vmax.f32 %v291, 0.0
    %v342 = vmax.f32 %v296, 0.0
    %v343 = vmax.f32 %v301, 0.0
    %v344 = vmax.f32 %v306, 0.0
    %v345 = vmax.f32 %v311, 0.0
    %v346 = vmax.f32 %v316, 0.0
    %v347 = vmax.f32 %v321, 0.0
    %v348 = vmax.f32 %v326, 0.0
    %v349 = vmax.f32 %v331, 0.0
    %v350 = vld [vmem:[#allocation2] sm:$0xff]
    %v351 = vld [vmem:[#allocation2 + $0x8] sm:$0xff]
    %v352 = vld [vmem:[#allocation2 + $0x10] sm:$0xff]
    %v353 = vld [vmem:[#allocation2 + $0x18] sm:$0xff]
    %354 = vmatprep.subr.mxu0 0.0
    %355 = vmatpush1.msra.mxu0 %v349
    %356 = vmatprep.subr.mxu0 0.0
    %357 = vmatpush1.msra.mxu0 %v348
    %358 = vmatprep.subr.mxu0 0.0
    %359 = vmatpush1.msra.mxu0 %v347
    %360 = vmatprep.subr.mxu0 0.0
    %361 = vmatpush1.msra.mxu0 %v346
    %362 = vmatprep.subr.mxu0 0.0
    %363 = vmatpush1.msra.mxu0 %v345
    %364 = vmatprep.subr.mxu0 0.0
    %365 = vmatpush1.msra.mxu0 %v344
    %366 = vmatprep.subr.mxu0 0.0
    %367 = vmatpush1.msra.mxu0 %v343
    %368 = vmatprep.subr.mxu0 0.0
    %369 = vmatpush1.msra.mxu0 %v342
    %370 = vmatprep.subr.mxu0 0.0
    %371 = vmatpush1.msra.mxu0 %v341
    %372 = vmatprep.subr.mxu0 0.0
    %373 = vmatpush1.msra.mxu0 %v340
    %374 = vmatprep.subr.mxu0 0.0
    %375 = vmatpush1.msra.mxu0 %v339
    %376 = vmatprep.subr.mxu0 0.0
    %377 = vmatpush1.msra.mxu0 %v338
    %378 = vmatprep.subr.mxu0 0.0
    %379 = vmatpush1.msra.mxu0 %v337
    %380 = vmatprep.subr.mxu0 0.0
    %381 = vmatpush1.msra.mxu0 %v336
    %382 = vmatprep.subr.mxu0 0.0
    %383 = vmatpush1.msra.mxu0 %v335
    %384 = vmatprep.subr.mxu0 0.0
    %385 = vmatpush1.msra.mxu0 %v334
    %386 = vmatprep.subr.mxu0 0.0
    %387 = vmatpush2.msra.mxu0 0.0
    %388 = vmatprep.subr.mxu0 0.0
    %389 = vmatpush2.msra.mxu0 0.0
    %390 = vmatprep.subr.mxu0 0.0
    %391 = vmatpush2.msra.mxu0 0.0
    %392 = vmatprep.subr.mxu0 0.0
    %393 = vmatpush2.msra.mxu0 0.0
    %394 = vmatprep.subr.mxu0 0.0
    %395 = vmatpush2.msra.mxu0 0.0
    %396 = vmatprep.subr.mxu0 0.0
    %397 = vmatpush2.msra.mxu0 0.0
    %398 = vmatprep.subr.mxu0 0.0
    %399 = vmatpush2.msra.mxu0 0.0
    %400 = vmatprep.subr.mxu0 0.0
    %401 = vmatpush2.msra.mxu0 0.0
    %402 = vmatprep.subr.mxu0 0.0
    %403 = vmatpush2.msra.mxu0 0.0
    %404 = vmatprep.subr.mxu0 0.0
    %405 = vmatpush2.msra.mxu0 0.0
    %406 = vmatprep.subr.mxu0 0.0
    %407 = vmatpush2.msra.mxu0 0.0
    %408 = vmatprep.subr.mxu0 0.0
    %409 = vmatpush2.msra.mxu0 0.0
    %410 = vmatprep.subr.mxu0 0.0
    %411 = vmatpush2.msra.mxu0 0.0
    %412 = vmatprep.subr.mxu0 0.0
    %413 = vmatpush2.msra.mxu0 0.0
    %414 = vmatprep.subr.mxu0 0.0
    %415 = vmatpush2.msra.mxu0 0.0
    %416 = vmatprep.subr.mxu0 0.0
    %417 = vmatpush2.msra.mxu0 0.0
    %418 = vmatprep.mubr.f32.mxu0 0.0
    %419 = vmatmul.mubr.f32.gmra.mxu0 %v350
    %v420 = vpop.f32.mrf.mxu0
    %v421 = vadd.f32 0.0, %v420
    %v422 = vpop.f32.mrf.mxu0
    %423 = vmatprep.mubr.f32.mxu0 0.0
    %424 = vmatmul.mubr.f32.gmra.mxu0 %v351
    %v425 = vpop.f32.mrf.mxu0
    %v426 = vadd.f32 0.0, %v425
    %v427 = vpop.f32.mrf.mxu0
    %428 = vmatprep.mubr.f32.mxu0 0.0
    %429 = vmatmul.mubr.f32.gmra.mxu0 %v352
    %v430 = vpop.f32.mrf.mxu0
    %v431 = vadd.f32 0.0, %v430
    %v432 = vpop.f32.mrf.mxu0
    %433 = vmatprep.mubr.f32.mxu0 0.0
    %434 = vmatmul.mubr.f32.gmra.mxu0 %v353
    %v435 = vpop.f32.mrf.mxu0
    %v436 = vadd.f32 0.0, %v435
    %v437 = vpop.f32.mrf.mxu0
    %438 = vdwg.mxu0
    %v439 = vld [vmem:[#allocation4] sm:$0xff]
    %v440 = vld [vmem:[#allocation4 + $0x8] sm:$0xff]
    %v441 = vld [vmem:[#allocation4 + $0x10] sm:$0xff]
    %v442 = vld [vmem:[#allocation4 + $0x18] sm:$0xff]
    %s443 = scalar_lea.vmem [#allocation2], 32
    %v444 = vld [vmem:[%s443] sm:$0xff]
    %v445 = vld [vmem:[%s443 + $0x8] sm:$0xff]
    %v446 = vld [vmem:[%s443 + $0x10] sm:$0xff]
    %v447 = vld [vmem:[%s443 + $0x18] sm:$0xff]
    %448 = vmatprep.subr.mxu0 0.0
    %449 = vmatpush1.msra.mxu0 %v349
    %450 = vmatprep.subr.mxu0 0.0
    %451 = vmatpush1.msra.mxu0 %v348
    %452 = vmatprep.subr.mxu0 0.0
    %453 = vmatpush1.msra.mxu0 %v347
    %454 = vmatprep.subr.mxu0 0.0
    %455 = vmatpush1.msra.mxu0 %v346
    %456 = vmatprep.subr.mxu0 0.0
    %457 = vmatpush1.msra.mxu0 %v345
    %458 = vmatprep.subr.mxu0 0.0
    %459 = vmatpush1.msra.mxu0 %v344
    %460 = vmatprep.subr.mxu0 0.0
    %461 = vmatpush1.msra.mxu0 %v343
    %462 = vmatprep.subr.mxu0 0.0
    %463 = vmatpush1.msra.mxu0 %v342
    %464 = vmatprep.subr.mxu0 0.0
    %465 = vmatpush1.msra.mxu0 %v341
    %466 = vmatprep.subr.mxu0 0.0
    %467 = vmatpush1.msra.mxu0 %v340
    %468 = vmatprep.subr.mxu0 0.0
    %469 = vmatpush1.msra.mxu0 %v339
    %470 = vmatprep.subr.mxu0 0.0
    %471 = vmatpush1.msra.mxu0 %v338
    %472 = vmatprep.subr.mxu0 0.0
    %473 = vmatpush1.msra.mxu0 %v337
    %474 = vmatprep.subr.mxu0 0.0
    %475 = vmatpush1.msra.mxu0 %v336
    %476 = vmatprep.subr.mxu0 0.0
    %477 = vmatpush1.msra.mxu0 %v335
    %478 = vmatprep.subr.mxu0 0.0
    %479 = vmatpush1.msra.mxu0 %v334
    %480 = vmatprep.subr.mxu0 0.0
    %481 = vmatpush2.msra.mxu0 0.0
    %482 = vmatprep.subr.mxu0 0.0
    %483 = vmatpush2.msra.mxu0 0.0
    %484 = vmatprep.subr.mxu0 0.0
    %485 = vmatpush2.msra.mxu0 0.0
    %486 = vmatprep.subr.mxu0 0.0
    %487 = vmatpush2.msra.mxu0 0.0
    %488 = vmatprep.subr.mxu0 0.0
    %489 = vmatpush2.msra.mxu0 0.0
    %490 = vmatprep.subr.mxu0 0.0
    %491 = vmatpush2.msra.mxu0 0.0
    %492 = vmatprep.subr.mxu0 0.0
    %493 = vmatpush2.msra.mxu0 0.0
    %494 = vmatprep.subr.mxu0 0.0
    %495 = vmatpush2.msra.mxu0 0.0
    %496 = vmatprep.subr.mxu0 0.0
    %497 = vmatpush2.msra.mxu0 0.0
    %498 = vmatprep.subr.mxu0 0.0
    %499 = vmatpush2.msra.mxu0 0.0
    %500 = vmatprep.subr.mxu0 0.0
    %501 = vmatpush2.msra.mxu0 0.0
    %502 = vmatprep.subr.mxu0 0.0
    %503 = vmatpush2.msra.mxu0 0.0
    %504 = vmatprep.subr.mxu0 0.0
    %505 = vmatpush2.msra.mxu0 0.0
    %506 = vmatprep.subr.mxu0 0.0
    %507 = vmatpush2.msra.mxu0 0.0
    %508 = vmatprep.subr.mxu0 0.0
    %509 = vmatpush2.msra.mxu0 0.0
    %510 = vmatprep.subr.mxu0 0.0
    %511 = vmatpush2.msra.mxu0 0.0
    %512 = vmatprep.mubr.f32.mxu0 0.0
    %513 = vmatmul.mubr.f32.gmra.mxu0 %v444
    %v514 = vpop.f32.mrf.mxu0
    %v515 = vadd.f32 0.0, %v514
    %v516 = vpop.f32.mrf.mxu0
    %517 = vmatprep.mubr.f32.mxu0 0.0
    %518 = vmatmul.mubr.f32.gmra.mxu0 %v445
    %v519 = vpop.f32.mrf.mxu0
    %v520 = vadd.f32 0.0, %v519
    %v521 = vpop.f32.mrf.mxu0
    %522 = vmatprep.mubr.f32.mxu0 0.0
    %523 = vmatmul.mubr.f32.gmra.mxu0 %v446
    %v524 = vpop.f32.mrf.mxu0
    %v525 = vadd.f32 0.0, %v524
    %v526 = vpop.f32.mrf.mxu0
    %527 = vmatprep.mubr.f32.mxu0 0.0
    %528 = vmatmul.mubr.f32.gmra.mxu0 %v447
    %v529 = vpop.f32.mrf.mxu0
    %v530 = vadd.f32 0.0, %v529
    %v531 = vpop.f32.mrf.mxu0
    %532 = vdwg.mxu0
    %s533 = scalar_lea.vmem [#allocation4], 32
    %v534 = vld [vmem:[%s533] sm:$0xff]
    %v535 = vld [vmem:[%s533 + $0x8] sm:$0xff]
    %v536 = vld [vmem:[%s533 + $0x10] sm:$0xff]
    %v537 = vld [vmem:[%s533 + $0x18] sm:$0xff]
    %vm538 = vcmask 261120
    %v540 = vsel %vm538, %v515, 0
    %v543 = vsel %vm538, %v520, 0
    %v546 = vsel %vm538, %v525, 0
    %v549 = vsel %vm538, %v530, 0
    %551 = vmatprep.subr.mxu0 0.0
    %552 = vmatpush1.msra.mxu0 0.0
    %553 = vmatprep.subr.mxu0 0.0
    %554 = vmatpush1.msra.mxu0 0.0
    %555 = vmatprep.subr.mxu0 0.0
    %556 = vmatpush1.msra.mxu0 0.0
    %557 = vmatprep.subr.mxu0 0.0
    %558 = vmatpush1.msra.mxu0 0.0
    %559 = vmatprep.subr.mxu0 0.0
    %560 = vmatpush1.msra.mxu0 0.0
    %561 = vmatprep.subr.mxu0 0.0
    %562 = vmatpush1.msra.mxu0 0.0
    %563 = vmatprep.subr.mxu0 0.0
    %564 = vmatpush1.msra.mxu0 0.0
    %565 = vmatprep.subr.mxu0 0.0
    %566 = vmatpush1.msra.mxu0 0.0
    %567 = vmatprep.subr.mxu0 0.0
    %568 = vmatpush1.msra.mxu0 0.0
    %569 = vmatprep.subr.mxu0 0.0
    %570 = vmatpush1.msra.mxu0 0.0
    %571 = vmatprep.subr.mxu0 0.0
    %572 = vmatpush1.msra.mxu0 0.0
    %573 = vmatprep.subr.mxu0 0.0
    %574 = vmatpush1.msra.mxu0 0.0
    %575 = vmatprep.subr.mxu0 0.0
    %576 = vmatpush1.msra.mxu0 %v537
    %577 = vmatprep.subr.mxu0 0.0
    %578 = vmatpush1.msra.mxu0 %v536
    %579 = vmatprep.subr.mxu0 0.0
    %580 = vmatpush1.msra.mxu0 %v535
    %581 = vmatprep.subr.mxu0 0.0
    %582 = vmatpush1.msra.mxu0 %v534
    %583 = vmatprep.subr.mxu0 0.0
    %584 = vmatpush2.msra.mxu0 0.0
    %585 = vmatprep.subr.mxu0 0.0
    %586 = vmatpush2.msra.mxu0 0.0
    %587 = vmatprep.subr.mxu0 0.0
    %588 = vmatpush2.msra.mxu0 0.0
    %589 = vmatprep.subr.mxu0 0.0
    %590 = vmatpush2.msra.mxu0 0.0
    %591 = vmatprep.subr.mxu0 0.0
    %592 = vmatpush2.msra.mxu0 0.0
    %593 = vmatprep.subr.mxu0 0.0
    %594 = vmatpush2.msra.mxu0 0.0
    %595 = vmatprep.subr.mxu0 0.0
    %596 = vmatpush2.msra.mxu0 0.0
    %597 = vmatprep.subr.mxu0 0.0
    %598 = vmatpush2.msra.mxu0 0.0
    %599 = vmatprep.subr.mxu0 0.0
    %600 = vmatpush2.msra.mxu0 0.0
    %601 = vmatprep.subr.mxu0 0.0
    %602 = vmatpush2.msra.mxu0 0.0
    %603 = vmatprep.subr.mxu0 0.0
    %604 = vmatpush2.msra.mxu0 0.0
    %605 = vmatprep.subr.mxu0 0.0
    %606 = vmatpush2.msra.mxu0 0.0
    %607 = vmatprep.subr.mxu0 0.0
    %608 = vmatpush2.msra.mxu0 0.0
    %609 = vmatprep.subr.mxu0 0.0
    %610 = vmatpush2.msra.mxu0 0.0
    %611 = vmatprep.subr.mxu0 0.0
    %612 = vmatpush2.msra.mxu0 0.0
    %613 = vmatprep.subr.mxu0 0.0
    %614 = vmatpush2.msra.mxu0 0.0
    %615 = vmatprep.mubr.f32.mxu0 0.0
    %616 = vmatmul.mubr.f32.gmra.mxu0 %v540
    %v617 = vpop.f32.mrf.mxu0
    %v618 = vadd.f32 0.0, %v617
    %v619 = vpop.f32.mrf.mxu0
    %620 = vmatprep.mubr.f32.mxu0 0.0
    %621 = vmatmul.mubr.f32.gmra.mxu0 %v543
    %v622 = vpop.f32.mrf.mxu0
    %v623 = vadd.f32 0.0, %v622
    %v624 = vpop.f32.mrf.mxu0
    %625 = vmatprep.mubr.f32.mxu0 0.0
    %626 = vmatmul.mubr.f32.gmra.mxu0 %v546
    %v627 = vpop.f32.mrf.mxu0
    %v628 = vadd.f32 0.0, %v627
    %v629 = vpop.f32.mrf.mxu0
    %630 = vmatprep.mubr.f32.mxu0 0.0
    %631 = vmatmul.mubr.f32.gmra.mxu0 %v549
    %v632 = vpop.f32.mrf.mxu0
    %v633 = vadd.f32 0.0, %v632
    %v634 = vpop.f32.mrf.mxu0
    %635 = vdwg.mxu0
    %v637 = vsel %vm538, %v421, 0
    %v640 = vsel %vm538, %v426, 0
    %v643 = vsel %vm538, %v431, 0
    %v646 = vsel %vm538, %v436, 0
    %648 = vmatprep.subr.mxu0 0.0
    %649 = vmatpush1.msra.mxu0 0.0
    %650 = vmatprep.subr.mxu0 0.0
    %651 = vmatpush1.msra.mxu0 0.0
    %652 = vmatprep.subr.mxu0 0.0
    %653 = vmatpush1.msra.mxu0 0.0
    %654 = vmatprep.subr.mxu0 0.0
    %655 = vmatpush1.msra.mxu0 0.0
    %656 = vmatprep.subr.mxu0 0.0
    %657 = vmatpush1.msra.mxu0 0.0
    %658 = vmatprep.subr.mxu0 0.0
    %659 = vmatpush1.msra.mxu0 0.0
    %660 = vmatprep.subr.mxu0 0.0
    %661 = vmatpush1.msra.mxu0 0.0
    %662 = vmatprep.subr.mxu0 0.0
    %663 = vmatpush1.msra.mxu0 0.0
    %664 = vmatprep.subr.mxu0 0.0
    %665 = vmatpush1.msra.mxu0 0.0
    %666 = vmatprep.subr.mxu0 0.0
    %667 = vmatpush1.msra.mxu0 0.0
    %668 = vmatprep.subr.mxu0 0.0
    %669 = vmatpush1.msra.mxu0 0.0
    %670 = vmatprep.subr.mxu0 0.0
    %671 = vmatpush1.msra.mxu0 0.0
    %672 = vmatprep.subr.mxu0 0.0
    %673 = vmatpush1.msra.mxu0 %v442
    %674 = vmatprep.subr.mxu0 0.0
    %675 = vmatpush1.msra.mxu0 %v441
    %676 = vmatprep.subr.mxu0 0.0
    %677 = vmatpush1.msra.mxu0 %v440
    %678 = vmatprep.subr.mxu0 0.0
    %679 = vmatpush1.msra.mxu0 %v439
    %680 = vmatprep.subr.mxu0 0.0
    %681 = vmatpush2.msra.mxu0 0.0
    %682 = vmatprep.subr.mxu0 0.0
    %683 = vmatpush2.msra.mxu0 0.0
    %684 = vmatprep.subr.mxu0 0.0
    %685 = vmatpush2.msra.mxu0 0.0
    %686 = vmatprep.subr.mxu0 0.0
    %687 = vmatpush2.msra.mxu0 0.0
    %688 = vmatprep.subr.mxu0 0.0
    %689 = vmatpush2.msra.mxu0 0.0
    %690 = vmatprep.subr.mxu0 0.0
    %691 = vmatpush2.msra.mxu0 0.0
    %692 = vmatprep.subr.mxu0 0.0
    %693 = vmatpush2.msra.mxu0 0.0
    %694 = vmatprep.subr.mxu0 0.0
    %695 = vmatpush2.msra.mxu0 0.0
    %696 = vmatprep.subr.mxu0 0.0
    %697 = vmatpush2.msra.mxu0 0.0
    %698 = vmatprep.subr.mxu0 0.0
    %699 = vmatpush2.msra.mxu0 0.0
    %700 = vmatprep.subr.mxu0 0.0
    %701 = vmatpush2.msra.mxu0 0.0
    %702 = vmatprep.subr.mxu0 0.0
    %703 = vmatpush2.msra.mxu0 0.0
    %704 = vmatprep.subr.mxu0 0.0
    %705 = vmatpush2.msra.mxu0 0.0
    %706 = vmatprep.subr.mxu0 0.0
    %707 = vmatpush2.msra.mxu0 0.0
    %708 = vmatprep.subr.mxu0 0.0
    %709 = vmatpush2.msra.mxu0 0.0
    %710 = vmatprep.subr.mxu0 0.0
    %711 = vmatpush2.msra.mxu0 0.0
    %712 = vmatprep.mubr.f32.mxu0 0.0
    %713 = vmatmul.mubr.f32.gmra.mxu0 %v637
    %v714 = vpop.f32.mrf.mxu0
    %v715 = vadd.f32 %v618, %v714
    %v716 = vpop.f32.mrf.mxu0
    %717 = vmatprep.mubr.f32.mxu0 0.0
    %718 = vmatmul.mubr.f32.gmra.mxu0 %v640
    %v719 = vpop.f32.mrf.mxu0
    %v720 = vadd.f32 %v623, %v719
    %v721 = vpop.f32.mrf.mxu0
    %722 = vmatprep.mubr.f32.mxu0 0.0
    %723 = vmatmul.mubr.f32.gmra.mxu0 %v643
    %v724 = vpop.f32.mrf.mxu0
    %v725 = vadd.f32 %v628, %v724
    %v726 = vpop.f32.mrf.mxu0
    %727 = vmatprep.mubr.f32.mxu0 0.0
    %728 = vmatmul.mubr.f32.gmra.mxu0 %v646
    %v729 = vpop.f32.mrf.mxu0
    %v730 = vadd.f32 %v633, %v729
    %v731 = vpop.f32.mrf.mxu0
    %732 = vdwg.mxu0
    %s733 = scalar_lea.vmem [#allocation2], 64
    %v734 = vld [vmem:[%s733] sm:$0xff]
    %v735 = vld [vmem:[%s733 + $0x8] sm:$0xff]
    %v736 = vld [vmem:[%s733 + $0x10] sm:$0xff]
    %v737 = vld [vmem:[%s733 + $0x18] sm:$0xff]
    %738 = vmatprep.subr.mxu0 0.0
    %739 = vmatpush1.msra.mxu0 %v349
    %740 = vmatprep.subr.mxu0 0.0
    %741 = vmatpush1.msra.mxu0 %v348
    %742 = vmatprep.subr.mxu0 0.0
    %743 = vmatpush1.msra.mxu0 %v347
    %744 = vmatprep.subr.mxu0 0.0
    %745 = vmatpush1.msra.mxu0 %v346
    %746 = vmatprep.subr.mxu0 0.0
    %747 = vmatpush1.msra.mxu0 %v345
    %748 = vmatprep.subr.mxu0 0.0
    %749 = vmatpush1.msra.mxu0 %v344
    %750 = vmatprep.subr.mxu0 0.0
    %751 = vmatpush1.msra.mxu0 %v343
    %752 = vmatprep.subr.mxu0 0.0
    %753 = vmatpush1.msra.mxu0 %v342
    %754 = vmatprep.subr.mxu0 0.0
    %755 = vmatpush1.msra.mxu0 %v341
    %756 = vmatprep.subr.mxu0 0.0
    %757 = vmatpush1.msra.mxu0 %v340
    %758 = vmatprep.subr.mxu0 0.0
    %759 = vmatpush1.msra.mxu0 %v339
    %760 = vmatprep.subr.mxu0 0.0
    %761 = vmatpush1.msra.mxu0 %v338
    %762 = vmatprep.subr.mxu0 0.0
    %763 = vmatpush1.msra.mxu0 %v337
    %764 = vmatprep.subr.mxu0 0.0
    %765 = vmatpush1.msra.mxu0 %v336
    %766 = vmatprep.subr.mxu0 0.0
    %767 = vmatpush1.msra.mxu0 %v335
    %768 = vmatprep.subr.mxu0 0.0
    %769 = vmatpush1.msra.mxu0 %v334
    %770 = vmatprep.subr.mxu0 0.0
    %771 = vmatpush2.msra.mxu0 0.0
    %772 = vmatprep.subr.mxu0 0.0
    %773 = vmatpush2.msra.mxu0 0.0
    %774 = vmatprep.subr.mxu0 0.0
    %775 = vmatpush2.msra.mxu0 0.0
    %776 = vmatprep.subr.mxu0 0.0
    %777 = vmatpush2.msra.mxu0 0.0
    %778 = vmatprep.subr.mxu0 0.0
    %779 = vmatpush2.msra.mxu0 0.0
    %780 = vmatprep.subr.mxu0 0.0
    %781 = vmatpush2.msra.mxu0 0.0
    %782 = vmatprep.subr.mxu0 0.0
    %783 = vmatpush2.msra.mxu0 0.0
    %784 = vmatprep.subr.mxu0 0.0
    %785 = vmatpush2.msra.mxu0 0.0
    %786 = vmatprep.subr.mxu0 0.0
    %787 = vmatpush2.msra.mxu0 0.0
    %788 = vmatprep.subr.mxu0 0.0
    %789 = vmatpush2.msra.mxu0 0.0
    %790 = vmatprep.subr.mxu0 0.0
    %791 = vmatpush2.msra.mxu0 0.0
    %792 = vmatprep.subr.mxu0 0.0
    %793 = vmatpush2.msra.mxu0 0.0
    %794 = vmatprep.subr.mxu0 0.0
    %795 = vmatpush2.msra.mxu0 0.0
    %796 = vmatprep.subr.mxu0 0.0
    %797 = vmatpush2.msra.mxu0 0.0
    %798 = vmatprep.subr.mxu0 0.0
    %799 = vmatpush2.msra.mxu0 0.0
    %800 = vmatprep.subr.mxu0 0.0
    %801 = vmatpush2.msra.mxu0 0.0
    %802 = vmatprep.mubr.f32.mxu0 0.0
    %803 = vmatmul.mubr.f32.gmra.mxu0 %v734
    %v804 = vpop.f32.mrf.mxu0
    %v805 = vadd.f32 0.0, %v804
    %v806 = vpop.f32.mrf.mxu0
    %807 = vmatprep.mubr.f32.mxu0 0.0
    %808 = vmatmul.mubr.f32.gmra.mxu0 %v735
    %v809 = vpop.f32.mrf.mxu0
    %v810 = vadd.f32 0.0, %v809
    %v811 = vpop.f32.mrf.mxu0
    %812 = vmatprep.mubr.f32.mxu0 0.0
    %813 = vmatmul.mubr.f32.gmra.mxu0 %v736
    %v814 = vpop.f32.mrf.mxu0
    %v815 = vadd.f32 0.0, %v814
    %v816 = vpop.f32.mrf.mxu0
    %817 = vmatprep.mubr.f32.mxu0 0.0
    %818 = vmatmul.mubr.f32.gmra.mxu0 %v737
    %v819 = vpop.f32.mrf.mxu0
    %v820 = vadd.f32 0.0, %v819
    %v821 = vpop.f32.mrf.mxu0
    %822 = vdwg.mxu0
    %s823 = scalar_lea.vmem [#allocation4], 64
    %v824 = vld [vmem:[%s823] sm:$0xff]
    %v825 = vld [vmem:[%s823 + $0x8] sm:$0xff]
    %v826 = vld [vmem:[%s823 + $0x10] sm:$0xff]
    %v827 = vld [vmem:[%s823 + $0x18] sm:$0xff]
    %v829 = vsel %vm538, %v805, 0
    %v832 = vsel %vm538, %v810, 0
    %v835 = vsel %vm538, %v815, 0
    %v838 = vsel %vm538, %v820, 0
    %840 = vmatprep.subr.mxu0 0.0
    %841 = vmatpush1.msra.mxu0 0.0
    %842 = vmatprep.subr.mxu0 0.0
    %843 = vmatpush1.msra.mxu0 0.0
    %844 = vmatprep.subr.mxu0 0.0
    %845 = vmatpush1.msra.mxu0 0.0
    %846 = vmatprep.subr.mxu0 0.0
    %847 = vmatpush1.msra.mxu0 0.0
    %848 = vmatprep.subr.mxu0 0.0
    %849 = vmatpush1.msra.mxu0 0.0
    %850 = vmatprep.subr.mxu0 0.0
    %851 = vmatpush1.msra.mxu0 0.0
    %852 = vmatprep.subr.mxu0 0.0
    %853 = vmatpush1.msra.mxu0 0.0
    %854 = vmatprep.subr.mxu0 0.0
    %855 = vmatpush1.msra.mxu0 0.0
    %856 = vmatprep.subr.mxu0 0.0
    %857 = vmatpush1.msra.mxu0 0.0
    %858 = vmatprep.subr.mxu0 0.0
    %859 = vmatpush1.msra.mxu0 0.0
    %860 = vmatprep.subr.mxu0 0.0
    %861 = vmatpush1.msra.mxu0 0.0
    %862 = vmatprep.subr.mxu0 0.0
    %863 = vmatpush1.msra.mxu0 0.0
    %864 = vmatprep.subr.mxu0 0.0
    %865 = vmatpush1.msra.mxu0 %v827
    %866 = vmatprep.subr.mxu0 0.0
    %867 = vmatpush1.msra.mxu0 %v826
    %868 = vmatprep.subr.mxu0 0.0
    %869 = vmatpush1.msra.mxu0 %v825
    %870 = vmatprep.subr.mxu0 0.0
    %871 = vmatpush1.msra.mxu0 %v824
    %872 = vmatprep.subr.mxu0 0.0
    %873 = vmatpush2.msra.mxu0 0.0
    %874 = vmatprep.subr.mxu0 0.0
    %875 = vmatpush2.msra.mxu0 0.0
    %876 = vmatprep.subr.mxu0 0.0
    %877 = vmatpush2.msra.mxu0 0.0
    %878 = vmatprep.subr.mxu0 0.0
    %879 = vmatpush2.msra.mxu0 0.0
    %880 = vmatprep.subr.mxu0 0.0
    %881 = vmatpush2.msra.mxu0 0.0
    %882 = vmatprep.subr.mxu0 0.0
    %883 = vmatpush2.msra.mxu0 0.0
    %884 = vmatprep.subr.mxu0 0.0
    %885 = vmatpush2.msra.mxu0 0.0
    %886 = vmatprep.subr.mxu0 0.0
    %887 = vmatpush2.msra.mxu0 0.0
    %888 = vmatprep.subr.mxu0 0.0
    %889 = vmatpush2.msra.mxu0 0.0
    %890 = vmatprep.subr.mxu0 0.0
    %891 = vmatpush2.msra.mxu0 0.0
    %892 = vmatprep.subr.mxu0 0.0
    %893 = vmatpush2.msra.mxu0 0.0
    %894 = vmatprep.subr.mxu0 0.0
    %895 = vmatpush2.msra.mxu0 0.0
    %896 = vmatprep.subr.mxu0 0.0
    %897 = vmatpush2.msra.mxu0 0.0
    %898 = vmatprep.subr.mxu0 0.0
    %899 = vmatpush2.msra.mxu0 0.0
    %900 = vmatprep.subr.mxu0 0.0
    %901 = vmatpush2.msra.mxu0 0.0
    %902 = vmatprep.subr.mxu0 0.0
    %903 = vmatpush2.msra.mxu0 0.0
    %904 = vmatprep.mubr.f32.mxu0 0.0
    %905 = vmatmul.mubr.f32.gmra.mxu0 %v829
    %v906 = vpop.f32.mrf.mxu0
    %v907 = vadd.f32 0.0, %v906
    %v908 = vpop.f32.mrf.mxu0
    %909 = vmatprep.mubr.f32.mxu0 0.0
    %910 = vmatmul.mubr.f32.gmra.mxu0 %v832
    %v911 = vpop.f32.mrf.mxu0
    %v912 = vadd.f32 0.0, %v911
    %v913 = vpop.f32.mrf.mxu0
    %914 = vmatprep.mubr.f32.mxu0 0.0
    %915 = vmatmul.mubr.f32.gmra.mxu0 %v835
    %v916 = vpop.f32.mrf.mxu0
    %v917 = vadd.f32 0.0, %v916
    %v918 = vpop.f32.mrf.mxu0
    %919 = vmatprep.mubr.f32.mxu0 0.0
    %920 = vmatmul.mubr.f32.gmra.mxu0 %v838
    %v921 = vpop.f32.mrf.mxu0
    %v922 = vadd.f32 0.0, %v921
    %v923 = vpop.f32.mrf.mxu0
    %924 = vdwg.mxu0
    %v925 = vadd.f32 %v715, %v907
    %v926 = vadd.f32 %v720, %v912
    %v927 = vadd.f32 %v725, %v917
    %v928 = vadd.f32 %v730, %v922
    %s929 = scalar_lea.vmem [#allocation2], 96
    %v930 = vld [vmem:[%s929] sm:$0xff]
    %v931 = vld [vmem:[%s929 + $0x8] sm:$0xff]
    %v932 = vld [vmem:[%s929 + $0x10] sm:$0xff]
    %v933 = vld [vmem:[%s929 + $0x18] sm:$0xff]
    %934 = vmatprep.subr.mxu0 0.0
    %935 = vmatpush1.msra.mxu0 %v349
    %936 = vmatprep.subr.mxu0 0.0
    %937 = vmatpush1.msra.mxu0 %v348
    %938 = vmatprep.subr.mxu0 0.0
    %939 = vmatpush1.msra.mxu0 %v347
    %940 = vmatprep.subr.mxu0 0.0
    %941 = vmatpush1.msra.mxu0 %v346
    %942 = vmatprep.subr.mxu0 0.0
    %943 = vmatpush1.msra.mxu0 %v345
    %944 = vmatprep.subr.mxu0 0.0
    %945 = vmatpush1.msra.mxu0 %v344
    %946 = vmatprep.subr.mxu0 0.0
    %947 = vmatpush1.msra.mxu0 %v343
    %948 = vmatprep.subr.mxu0 0.0
    %949 = vmatpush1.msra.mxu0 %v342
    %950 = vmatprep.subr.mxu0 0.0
    %951 = vmatpush1.msra.mxu0 %v341
    %952 = vmatprep.subr.mxu0 0.0
    %953 = vmatpush1.msra.mxu0 %v340
    %954 = vmatprep.subr.mxu0 0.0
    %955 = vmatpush1.msra.mxu0 %v339
    %956 = vmatprep.subr.mxu0 0.0
    %957 = vmatpush1.msra.mxu0 %v338
    %958 = vmatprep.subr.mxu0 0.0
    %959 = vmatpush1.msra.mxu0 %v337
    %960 = vmatprep.subr.mxu0 0.0
    %961 = vmatpush1.msra.mxu0 %v336
    %962 = vmatprep.subr.mxu0 0.0
    %963 = vmatpush1.msra.mxu0 %v335
    %964 = vmatprep.subr.mxu0 0.0
    %965 = vmatpush1.msra.mxu0 %v334
    %966 = vmatprep.subr.mxu0 0.0
    %967 = vmatpush2.msra.mxu0 0.0
    %968 = vmatprep.subr.mxu0 0.0
    %969 = vmatpush2.msra.mxu0 0.0
    %970 = vmatprep.subr.mxu0 0.0
    %971 = vmatpush2.msra.mxu0 0.0
    %972 = vmatprep.subr.mxu0 0.0
    %973 = vmatpush2.msra.mxu0 0.0
    %974 = vmatprep.subr.mxu0 0.0
    %975 = vmatpush2.msra.mxu0 0.0
    %976 = vmatprep.subr.mxu0 0.0
    %977 = vmatpush2.msra.mxu0 0.0
    %978 = vmatprep.subr.mxu0 0.0
    %979 = vmatpush2.msra.mxu0 0.0
    %980 = vmatprep.subr.mxu0 0.0
    %981 = vmatpush2.msra.mxu0 0.0
    %982 = vmatprep.subr.mxu0 0.0
    %983 = vmatpush2.msra.mxu0 0.0
    %984 = vmatprep.subr.mxu0 0.0
    %985 = vmatpush2.msra.mxu0 0.0
    %986 = vmatprep.subr.mxu0 0.0
    %987 = vmatpush2.msra.mxu0 0.0
    %988 = vmatprep.subr.mxu0 0.0
    %989 = vmatpush2.msra.mxu0 0.0
    %990 = vmatprep.subr.mxu0 0.0
    %991 = vmatpush2.msra.mxu0 0.0
    %992 = vmatprep.subr.mxu0 0.0
    %993 = vmatpush2.msra.mxu0 0.0
    %994 = vmatprep.subr.mxu0 0.0
    %995 = vmatpush2.msra.mxu0 0.0
    %996 = vmatprep.subr.mxu0 0.0
    %997 = vmatpush2.msra.mxu0 0.0
    %998 = vmatprep.mubr.f32.mxu0 0.0
    %999 = vmatmul.mubr.f32.gmra.mxu0 %v930
    %v1000 = vpop.f32.mrf.mxu0
    %v1001 = vadd.f32 0.0, %v1000
    %v1002 = vpop.f32.mrf.mxu0
    %1003 = vmatprep.mubr.f32.mxu0 0.0
    %1004 = vmatmul.mubr.f32.gmra.mxu0 %v931
    %v1005 = vpop.f32.mrf.mxu0
    %v1006 = vadd.f32 0.0, %v1005
    %v1007 = vpop.f32.mrf.mxu0
    %1008 = vmatprep.mubr.f32.mxu0 0.0
    %1009 = vmatmul.mubr.f32.gmra.mxu0 %v932
    %v1010 = vpop.f32.mrf.mxu0
    %v1011 = vadd.f32 0.0, %v1010
    %v1012 = vpop.f32.mrf.mxu0
    %1013 = vmatprep.mubr.f32.mxu0 0.0
    %1014 = vmatmul.mubr.f32.gmra.mxu0 %v933
    %v1015 = vpop.f32.mrf.mxu0
    %v1016 = vadd.f32 0.0, %v1015
    %v1017 = vpop.f32.mrf.mxu0
    %1018 = vdwg.mxu0
    %s1019 = scalar_lea.vmem [#allocation4], 96
    %v1020 = vld [vmem:[%s1019] sm:$0xff]
    %v1021 = vld [vmem:[%s1019 + $0x8] sm:$0xff]
    %v1022 = vld [vmem:[%s1019 + $0x10] sm:$0xff]
    %v1023 = vld [vmem:[%s1019 + $0x18] sm:$0xff]
    %v1025 = vsel %vm538, %v1001, 0
    %v1028 = vsel %vm538, %v1006, 0
    %v1031 = vsel %vm538, %v1011, 0
    %v1034 = vsel %vm538, %v1016, 0
    %1036 = vmatprep.subr.mxu0 0.0
    %1037 = vmatpush1.msra.mxu0 0.0
    %1038 = vmatprep.subr.mxu0 0.0
    %1039 = vmatpush1.msra.mxu0 0.0
    %1040 = vmatprep.subr.mxu0 0.0
    %1041 = vmatpush1.msra.mxu0 0.0
    %1042 = vmatprep.subr.mxu0 0.0
    %1043 = vmatpush1.msra.mxu0 0.0
    %1044 = vmatprep.subr.mxu0 0.0
    %1045 = vmatpush1.msra.mxu0 0.0
    %1046 = vmatprep.subr.mxu0 0.0
    %1047 = vmatpush1.msra.mxu0 0.0
    %1048 = vmatprep.subr.mxu0 0.0
    %1049 = vmatpush1.msra.mxu0 0.0
    %1050 = vmatprep.subr.mxu0 0.0
    %1051 = vmatpush1.msra.mxu0 0.0
    %1052 = vmatprep.subr.mxu0 0.0
    %1053 = vmatpush1.msra.mxu0 0.0
    %1054 = vmatprep.subr.mxu0 0.0
    %1055 = vmatpush1.msra.mxu0 0.0
    %1056 = vmatprep.subr.mxu0 0.0
    %1057 = vmatpush1.msra.mxu0 0.0
    %1058 = vmatprep.subr.mxu0 0.0
    %1059 = vmatpush1.msra.mxu0 0.0
    %1060 = vmatprep.subr.mxu0 0.0
    %1061 = vmatpush1.msra.mxu0 %v1023
    %1062 = vmatprep.subr.mxu0 0.0
    %1063 = vmatpush1.msra.mxu0 %v1022
    %1064 = vmatprep.subr.mxu0 0.0
    %1065 = vmatpush1.msra.mxu0 %v1021
    %1066 = vmatprep.subr.mxu0 0.0
    %1067 = vmatpush1.msra.mxu0 %v1020
    %1068 = vmatprep.subr.mxu0 0.0
    %1069 = vmatpush2.msra.mxu0 0.0
    %1070 = vmatprep.subr.mxu0 0.0
    %1071 = vmatpush2.msra.mxu0 0.0
    %1072 = vmatprep.subr.mxu0 0.0
    %1073 = vmatpush2.msra.mxu0 0.0
    %1074 = vmatprep.subr.mxu0 0.0
    %1075 = vmatpush2.msra.mxu0 0.0
    %1076 = vmatprep.subr.mxu0 0.0
    %1077 = vmatpush2.msra.mxu0 0.0
    %1078 = vmatprep.subr.mxu0 0.0
    %1079 = vmatpush2.msra.mxu0 0.0
    %1080 = vmatprep.subr.mxu0 0.0
    %1081 = vmatpush2.msra.mxu0 0.0
    %1082 = vmatprep.subr.mxu0 0.0
    %1083 = vmatpush2.msra.mxu0 0.0
    %1084 = vmatprep.subr.mxu0 0.0
    %1085 = vmatpush2.msra.mxu0 0.0
    %1086 = vmatprep.subr.mxu0 0.0
    %1087 = vmatpush2.msra.mxu0 0.0
    %1088 = vmatprep.subr.mxu0 0.0
    %1089 = vmatpush2.msra.mxu0 0.0
    %1090 = vmatprep.subr.mxu0 0.0
    %1091 = vmatpush2.msra.mxu0 0.0
    %1092 = vmatprep.subr.mxu0 0.0
    %1093 = vmatpush2.msra.mxu0 0.0
    %1094 = vmatprep.subr.mxu0 0.0
    %1095 = vmatpush2.msra.mxu0 0.0
    %1096 = vmatprep.subr.mxu0 0.0
    %1097 = vmatpush2.msra.mxu0 0.0
    %1098 = vmatprep.subr.mxu0 0.0
    %1099 = vmatpush2.msra.mxu0 0.0
    %1100 = vmatprep.mubr.f32.mxu0 0.0
    %1101 = vmatmul.mubr.f32.gmra.mxu0 %v1025
    %v1102 = vpop.f32.mrf.mxu0
    %v1103 = vadd.f32 0.0, %v1102
    %v1104 = vpop.f32.mrf.mxu0
    %1105 = vmatprep.mubr.f32.mxu0 0.0
    %1106 = vmatmul.mubr.f32.gmra.mxu0 %v1028
    %v1107 = vpop.f32.mrf.mxu0
    %v1108 = vadd.f32 0.0, %v1107
    %v1109 = vpop.f32.mrf.mxu0
    %1110 = vmatprep.mubr.f32.mxu0 0.0
    %1111 = vmatmul.mubr.f32.gmra.mxu0 %v1031
    %v1112 = vpop.f32.mrf.mxu0
    %v1113 = vadd.f32 0.0, %v1112
    %v1114 = vpop.f32.mrf.mxu0
    %1115 = vmatprep.mubr.f32.mxu0 0.0
    %1116 = vmatmul.mubr.f32.gmra.mxu0 %v1034
    %v1117 = vpop.f32.mrf.mxu0
    %v1118 = vadd.f32 0.0, %v1117
    %v1119 = vpop.f32.mrf.mxu0
    %1120 = vdwg.mxu0
    %v1121 = vadd.f32 %v925, %v1103
    %v1122 = vadd.f32 %v926, %v1108
    %v1123 = vadd.f32 %v927, %v1113
    %v1124 = vadd.f32 %v928, %v1118
    %v1125 = vld [vmem:[%s5] sm:$0x1]
    %v1127 = vlaneseq
    %v1128 = vshrl.u32 %v1127, 7
    %v1129 = vsub.s32 0, %v1128
    %v1130 = vrot.slane %v1125, %v1129
    %v1132 = vadd.f32 %v1121, %v1130
    %v1133 = vadd.f32 %v1122, %v1130
    %v1134 = vadd.f32 %v1123, %v1130
    %v1135 = vadd.f32 %v1124, %v1130
    %v1136 = vmax.f32 %v1132, 0.0
    %v1137 = vmax.f32 %v1133, 0.0
    %v1138 = vmax.f32 %v1134, 0.0
    %v1139 = vmax.f32 %v1135, 0.0
    %v1140 = vld [vmem:[#allocation6] sm:$0xff]
    %v1141 = vld [vmem:[#allocation6 + $0x8] sm:$0xff]
    %v1142 = vld [vmem:[#allocation6 + $0x10] sm:$0xff]
    %v1144 = vsel %vm538, %v1140, 0
    %v1147 = vsel %vm538, %v1141, 0
    %v1150 = vsel %vm538, %v1142, 0
    %1152 = vmatprep.subr.mxu0 0.0
    %1153 = vmatpush1.msra.mxu0 0.0
    %1154 = vmatprep.subr.mxu0 0.0
    %1155 = vmatpush1.msra.mxu0 0.0
    %1156 = vmatprep.subr.mxu0 0.0
    %1157 = vmatpush1.msra.mxu0 0.0
    %1158 = vmatprep.subr.mxu0 0.0
    %1159 = vmatpush1.msra.mxu0 0.0
    %1160 = vmatprep.subr.mxu0 0.0
    %1161 = vmatpush1.msra.mxu0 0.0
    %1162 = vmatprep.subr.mxu0 0.0
    %1163 = vmatpush1.msra.mxu0 0.0
    %1164 = vmatprep.subr.mxu0 0.0
    %1165 = vmatpush1.msra.mxu0 0.0
    %1166 = vmatprep.subr.mxu0 0.0
    %1167 = vmatpush1.msra.mxu0 0.0
    %1168 = vmatprep.subr.mxu0 0.0
    %1169 = vmatpush1.msra.mxu0 0.0
    %1170 = vmatprep.subr.mxu0 0.0
    %1171 = vmatpush1.msra.mxu0 0.0
    %1172 = vmatprep.subr.mxu0 0.0
    %1173 = vmatpush1.msra.mxu0 0.0
    %1174 = vmatprep.subr.mxu0 0.0
    %1175 = vmatpush1.msra.mxu0 0.0
    %1176 = vmatprep.subr.mxu0 0.0
    %1177 = vmatpush1.msra.mxu0 %v1139
    %1178 = vmatprep.subr.mxu0 0.0
    %1179 = vmatpush1.msra.mxu0 %v1138
    %1180 = vmatprep.subr.mxu0 0.0
    %1181 = vmatpush1.msra.mxu0 %v1137
    %1182 = vmatprep.subr.mxu0 0.0
    %1183 = vmatpush1.msra.mxu0 %v1136
    %1184 = vmatprep.subr.mxu0 0.0
    %1185 = vmatpush2.msra.mxu0 0.0
    %1186 = vmatprep.subr.mxu0 0.0
    %1187 = vmatpush2.msra.mxu0 0.0
    %1188 = vmatprep.subr.mxu0 0.0
    %1189 = vmatpush2.msra.mxu0 0.0
    %1190 = vmatprep.subr.mxu0 0.0
    %1191 = vmatpush2.msra.mxu0 0.0
    %1192 = vmatprep.subr.mxu0 0.0
    %1193 = vmatpush2.msra.mxu0 0.0
    %1194 = vmatprep.subr.mxu0 0.0
    %1195 = vmatpush2.msra.mxu0 0.0
    %1196 = vmatprep.subr.mxu0 0.0
    %1197 = vmatpush2.msra.mxu0 0.0
    %1198 = vmatprep.subr.mxu0 0.0
    %1199 = vmatpush2.msra.mxu0 0.0
    %1200 = vmatprep.subr.mxu0 0.0
    %1201 = vmatpush2.msra.mxu0 0.0
    %1202 = vmatprep.subr.mxu0 0.0
    %1203 = vmatpush2.msra.mxu0 0.0
    %1204 = vmatprep.subr.mxu0 0.0
    %1205 = vmatpush2.msra.mxu0 0.0
    %1206 = vmatprep.subr.mxu0 0.0
    %1207 = vmatpush2.msra.mxu0 0.0
    %1208 = vmatprep.subr.mxu0 0.0
    %1209 = vmatpush2.msra.mxu0 0.0
    %1210 = vmatprep.subr.mxu0 0.0
    %1211 = vmatpush2.msra.mxu0 0.0
    %1212 = vmatprep.subr.mxu0 0.0
    %1213 = vmatpush2.msra.mxu0 0.0
    %1214 = vmatprep.subr.mxu0 0.0
    %1215 = vmatpush2.msra.mxu0 0.0
    %1216 = vmatprep.mubr.f32.mxu0 0.0
    %1217 = vmatmul.mubr.f32.gmra.mxu0 %v1144
    %v1218 = vpop.f32.mrf.mxu0
    %v1219 = vadd.f32 0.0, %v1218
    %v1220 = vpop.f32.mrf.mxu0
    %1221 = vmatprep.mubr.f32.mxu0 0.0
    %1222 = vmatmul.mubr.f32.gmra.mxu0 %v1147
    %v1223 = vpop.f32.mrf.mxu0
    %v1224 = vadd.f32 0.0, %v1223
    %v1225 = vpop.f32.mrf.mxu0
    %1226 = vmatprep.mubr.f32.mxu0 0.0
    %1227 = vmatmul.mubr.f32.gmra.mxu0 %v1150
    %v1228 = vpop.f32.mrf.mxu0
    %v1229 = vadd.f32 0.0, %v1228
    %v1230 = vpop.f32.mrf.mxu0
    %1231 = vdwg.mxu0
    %v1232 = vld [vmem:[%s7] sm:$0xff]
    %v1233 = vld [vmem:[%s7 + $0x8] sm:$0xff]
    %v1234 = vld [vmem:[%s7 + $0x10] sm:$0xff]
    %v1235 = vld [vmem:[%s7 + $0x18] sm:$0xff]
    %v1236 = vld [vmem:[%s7 + $0x20] sm:$0xff]
    %v1237 = vld [vmem:[%s7 + $0x28] sm:$0xff]
    %v1238 = vld [vmem:[%s7 + $0x30] sm:$0xff]
    %v1239 = vld [vmem:[%s7 + $0x38] sm:$0xff]
    %s1240 = scalar_lea.vmem [#allocation6], 24
    %v1241 = vld [vmem:[%s1240] sm:$0xff]
    %v1242 = vld [vmem:[%s1240 + $0x8] sm:$0xff]
    %v1243 = vld [vmem:[%s1240 + $0x10] sm:$0xff]
    %v1245 = vsel %vm538, %v1241, 0
    %v1248 = vsel %vm538, %v1242, 0
    %v1251 = vsel %vm538, %v1243, 0
    %1253 = vmatprep.subr.mxu0 0.0
    %1254 = vmatpush1.msra.mxu0 0.0
    %1255 = vmatprep.subr.mxu0 0.0
    %1256 = vmatpush1.msra.mxu0 0.0
    %1257 = vmatprep.subr.mxu0 0.0
    %1258 = vmatpush1.msra.mxu0 0.0
    %1259 = vmatprep.subr.mxu0 0.0
    %1260 = vmatpush1.msra.mxu0 0.0
    %1261 = vmatprep.subr.mxu0 0.0
    %1262 = vmatpush1.msra.mxu0 0.0
    %1263 = vmatprep.subr.mxu0 0.0
    %1264 = vmatpush1.msra.mxu0 0.0
    %1265 = vmatprep.subr.mxu0 0.0
    %1266 = vmatpush1.msra.mxu0 0.0
    %1267 = vmatprep.subr.mxu0 0.0
    %1268 = vmatpush1.msra.mxu0 0.0
    %1269 = vmatprep.subr.mxu0 0.0
    %1270 = vmatpush1.msra.mxu0 0.0
    %1271 = vmatprep.subr.mxu0 0.0
    %1272 = vmatpush1.msra.mxu0 0.0
    %1273 = vmatprep.subr.mxu0 0.0
    %1274 = vmatpush1.msra.mxu0 0.0
    %1275 = vmatprep.subr.mxu0 0.0
    %1276 = vmatpush1.msra.mxu0 0.0
    %1277 = vmatprep.subr.mxu0 0.0
    %1278 = vmatpush1.msra.mxu0 %v1139
    %1279 = vmatprep.subr.mxu0 0.0
    %1280 = vmatpush1.msra.mxu0 %v1138
    %1281 = vmatprep.subr.mxu0 0.0
    %1282 = vmatpush1.msra.mxu0 %v1137
    %1283 = vmatprep.subr.mxu0 0.0
    %1284 = vmatpush1.msra.mxu0 %v1136
    %1285 = vmatprep.subr.mxu0 0.0
    %1286 = vmatpush2.msra.mxu0 0.0
    %1287 = vmatprep.subr.mxu0 0.0
    %1288 = vmatpush2.msra.mxu0 0.0
    %1289 = vmatprep.subr.mxu0 0.0
    %1290 = vmatpush2.msra.mxu0 0.0
    %1291 = vmatprep.subr.mxu0 0.0
    %1292 = vmatpush2.msra.mxu0 0.0
    %1293 = vmatprep.subr.mxu0 0.0
    %1294 = vmatpush2.msra.mxu0 0.0
    %1295 = vmatprep.subr.mxu0 0.0
    %1296 = vmatpush2.msra.mxu0 0.0
    %1297 = vmatprep.subr.mxu0 0.0
    %1298 = vmatpush2.msra.mxu0 0.0
    %1299 = vmatprep.subr.mxu0 0.0
    %1300 = vmatpush2.msra.mxu0 0.0
    %1301 = vmatprep.subr.mxu0 0.0
    %1302 = vmatpush2.msra.mxu0 0.0
    %1303 = vmatprep.subr.mxu0 0.0
    %1304 = vmatpush2.msra.mxu0 0.0
    %1305 = vmatprep.subr.mxu0 0.0
    %1306 = vmatpush2.msra.mxu0 0.0
    %1307 = vmatprep.subr.mxu0 0.0
    %1308 = vmatpush2.msra.mxu0 0.0
    %1309 = vmatprep.subr.mxu0 0.0
    %1310 = vmatpush2.msra.mxu0 0.0
    %1311 = vmatprep.subr.mxu0 0.0
    %1312 = vmatpush2.msra.mxu0 0.0
    %1313 = vmatprep.subr.mxu0 0.0
    %1314 = vmatpush2.msra.mxu0 0.0
    %1315 = vmatprep.subr.mxu0 0.0
    %1316 = vmatpush2.msra.mxu0 0.0
    %1317 = vmatprep.mubr.f32.mxu0 0.0
    %1318 = vmatmul.mubr.f32.gmra.mxu0 %v1245
    %v1319 = vpop.f32.mrf.mxu0
    %v1320 = vadd.f32 0.0, %v1319
    %v1321 = vpop.f32.mrf.mxu0
    %1322 = vmatprep.mubr.f32.mxu0 0.0
    %1323 = vmatmul.mubr.f32.gmra.mxu0 %v1248
    %v1324 = vpop.f32.mrf.mxu0
    %v1325 = vadd.f32 0.0, %v1324
    %v1326 = vpop.f32.mrf.mxu0
    %1327 = vmatprep.mubr.f32.mxu0 0.0
    %1328 = vmatmul.mubr.f32.gmra.mxu0 %v1251
    %v1329 = vpop.f32.mrf.mxu0
    %v1330 = vadd.f32 0.0, %v1329
    %v1331 = vpop.f32.mrf.mxu0
    %1332 = vdwg.mxu0
    %s1333 = scalar_lea.vmem %s7, 64
    %v1334 = vld [vmem:[%s1333] sm:$0xff]
    %v1335 = vld [vmem:[%s1333 + $0x8] sm:$0xff]
    %v1336 = vld [vmem:[%s1333 + $0x10] sm:$0xff]
    %v1337 = vld [vmem:[%s1333 + $0x18] sm:$0xff]
    %v1338 = vld [vmem:[%s1333 + $0x20] sm:$0xff]
    %v1339 = vld [vmem:[%s1333 + $0x28] sm:$0xff]
    %v1340 = vld [vmem:[%s1333 + $0x30] sm:$0xff]
    %v1341 = vld [vmem:[%s1333 + $0x38] sm:$0xff]
    %vm1342 = vcmask 523264
    %v1344 = vsel %vm1342, %v1320, 0
    %v1347 = vsel %vm1342, %v1325, 0
    %v1350 = vsel %vm1342, %v1330, 0
    %1352 = vmatprep.subr.mxu0 0.0
    %1353 = vmatpush1.msra.mxu0 0.0
    %1354 = vmatprep.subr.mxu0 0.0
    %1355 = vmatpush1.msra.mxu0 0.0
    %1356 = vmatprep.subr.mxu0 0.0
    %1357 = vmatpush1.msra.mxu0 0.0
    %1358 = vmatprep.subr.mxu0 0.0
    %1359 = vmatpush1.msra.mxu0 0.0
    %1360 = vmatprep.subr.mxu0 0.0
    %1361 = vmatpush1.msra.mxu0 0.0
    %1362 = vmatprep.subr.mxu0 0.0
    %1363 = vmatpush1.msra.mxu0 0.0
    %1364 = vmatprep.subr.mxu0 0.0
    %1365 = vmatpush1.msra.mxu0 0.0
    %1366 = vmatprep.subr.mxu0 0.0
    %1367 = vmatpush1.msra.mxu0 0.0
    %1368 = vmatprep.subr.mxu0 0.0
    %1369 = vmatpush1.msra.mxu0 %v1341
    %1370 = vmatprep.subr.mxu0 0.0
    %1371 = vmatpush1.msra.mxu0 %v1340
    %1372 = vmatprep.subr.mxu0 0.0
    %1373 = vmatpush1.msra.mxu0 %v1339
    %1374 = vmatprep.subr.mxu0 0.0
    %1375 = vmatpush1.msra.mxu0 %v1338
    %1376 = vmatprep.subr.mxu0 0.0
    %1377 = vmatpush1.msra.mxu0 %v1337
    %1378 = vmatprep.subr.mxu0 0.0
    %1379 = vmatpush1.msra.mxu0 %v1336
    %1380 = vmatprep.subr.mxu0 0.0
    %1381 = vmatpush1.msra.mxu0 %v1335
    %1382 = vmatprep.subr.mxu0 0.0
    %1383 = vmatpush1.msra.mxu0 %v1334
    %1384 = vmatprep.subr.mxu0 0.0
    %1385 = vmatpush2.msra.mxu0 0.0
    %1386 = vmatprep.subr.mxu0 0.0
    %1387 = vmatpush2.msra.mxu0 0.0
    %1388 = vmatprep.subr.mxu0 0.0
    %1389 = vmatpush2.msra.mxu0 0.0
    %1390 = vmatprep.subr.mxu0 0.0
    %1391 = vmatpush2.msra.mxu0 0.0
    %1392 = vmatprep.subr.mxu0 0.0
    %1393 = vmatpush2.msra.mxu0 0.0
    %1394 = vmatprep.subr.mxu0 0.0
    %1395 = vmatpush2.msra.mxu0 0.0
    %1396 = vmatprep.subr.mxu0 0.0
    %1397 = vmatpush2.msra.mxu0 0.0
    %1398 = vmatprep.subr.mxu0 0.0
    %1399 = vmatpush2.msra.mxu0 0.0
    %1400 = vmatprep.subr.mxu0 0.0
    %1401 = vmatpush2.msra.mxu0 0.0
    %1402 = vmatprep.subr.mxu0 0.0
    %1403 = vmatpush2.msra.mxu0 0.0
    %1404 = vmatprep.subr.mxu0 0.0
    %1405 = vmatpush2.msra.mxu0 0.0
    %1406 = vmatprep.subr.mxu0 0.0
    %1407 = vmatpush2.msra.mxu0 0.0
    %1408 = vmatprep.subr.mxu0 0.0
    %1409 = vmatpush2.msra.mxu0 0.0
    %1410 = vmatprep.subr.mxu0 0.0
    %1411 = vmatpush2.msra.mxu0 0.0
    %1412 = vmatprep.subr.mxu0 0.0
    %1413 = vmatpush2.msra.mxu0 0.0
    %1414 = vmatprep.subr.mxu0 0.0
    %1415 = vmatpush2.msra.mxu0 0.0
    %1416 = vmatprep.mubr.f32.mxu0 0.0
    %1417 = vmatmul.mubr.f32.gmra.mxu0 %v1344
    %v1418 = vpop.f32.mrf.mxu0
    %v1419 = vadd.f32 0.0, %v1418
    %v1420 = vpop.f32.mrf.mxu0
    %1421 = vmatprep.mubr.f32.mxu0 0.0
    %1422 = vmatmul.mubr.f32.gmra.mxu0 %v1347
    %v1423 = vpop.f32.mrf.mxu0
    %v1424 = vadd.f32 0.0, %v1423
    %v1425 = vpop.f32.mrf.mxu0
    %1426 = vmatprep.mubr.f32.mxu0 0.0
    %1427 = vmatmul.mubr.f32.gmra.mxu0 %v1350
    %v1428 = vpop.f32.mrf.mxu0
    %v1429 = vadd.f32 0.0, %v1428
    %v1430 = vpop.f32.mrf.mxu0
    %1431 = vdwg.mxu0
    %v1433 = vsel %vm1342, %v1219, 0
    %v1436 = vsel %vm1342, %v1224, 0
    %v1439 = vsel %vm1342, %v1229, 0
    %1441 = vmatprep.subr.mxu0 0.0
    %1442 = vmatpush1.msra.mxu0 0.0
    %1443 = vmatprep.subr.mxu0 0.0
    %1444 = vmatpush1.msra.mxu0 0.0
    %1445 = vmatprep.subr.mxu0 0.0
    %1446 = vmatpush1.msra.mxu0 0.0
    %1447 = vmatprep.subr.mxu0 0.0
    %1448 = vmatpush1.msra.mxu0 0.0
    %1449 = vmatprep.subr.mxu0 0.0
    %1450 = vmatpush1.msra.mxu0 0.0
    %1451 = vmatprep.subr.mxu0 0.0
    %1452 = vmatpush1.msra.mxu0 0.0
    %1453 = vmatprep.subr.mxu0 0.0
    %1454 = vmatpush1.msra.mxu0 0.0
    %1455 = vmatprep.subr.mxu0 0.0
    %1456 = vmatpush1.msra.mxu0 0.0
    %1457 = vmatprep.subr.mxu0 0.0
    %1458 = vmatpush1.msra.mxu0 %v1239
    %1459 = vmatprep.subr.mxu0 0.0
    %1460 = vmatpush1.msra.mxu0 %v1238
    %1461 = vmatprep.subr.mxu0 0.0
    %1462 = vmatpush1.msra.mxu0 %v1237
    %1463 = vmatprep.subr.mxu0 0.0
    %1464 = vmatpush1.msra.mxu0 %v1236
    %1465 = vmatprep.subr.mxu0 0.0
    %1466 = vmatpush1.msra.mxu0 %v1235
    %1467 = vmatprep.subr.mxu0 0.0
    %1468 = vmatpush1.msra.mxu0 %v1234
    %1469 = vmatprep.subr.mxu0 0.0
    %1470 = vmatpush1.msra.mxu0 %v1233
    %1471 = vmatprep.subr.mxu0 0.0
    %1472 = vmatpush1.msra.mxu0 %v1232
    %1473 = vmatprep.subr.mxu0 0.0
    %1474 = vmatpush2.msra.mxu0 0.0
    %1475 = vmatprep.subr.mxu0 0.0
    %1476 = vmatpush2.msra.mxu0 0.0
    %1477 = vmatprep.subr.mxu0 0.0
    %1478 = vmatpush2.msra.mxu0 0.0
    %1479 = vmatprep.subr.mxu0 0.0
    %1480 = vmatpush2.msra.mxu0 0.0
    %1481 = vmatprep.subr.mxu0 0.0
    %1482 = vmatpush2.msra.mxu0 0.0
    %1483 = vmatprep.subr.mxu0 0.0
    %1484 = vmatpush2.msra.mxu0 0.0
    %1485 = vmatprep.subr.mxu0 0.0
    %1486 = vmatpush2.msra.mxu0 0.0
    %1487 = vmatprep.subr.mxu0 0.0
    %1488 = vmatpush2.msra.mxu0 0.0
    %1489 = vmatprep.subr.mxu0 0.0
    %1490 = vmatpush2.msra.mxu0 0.0
    %1491 = vmatprep.subr.mxu0 0.0
    %1492 = vmatpush2.msra.mxu0 0.0
    %1493 = vmatprep.subr.mxu0 0.0
    %1494 = vmatpush2.msra.mxu0 0.0
    %1495 = vmatprep.subr.mxu0 0.0
    %1496 = vmatpush2.msra.mxu0 0.0
    %1497 = vmatprep.subr.mxu0 0.0
    %1498 = vmatpush2.msra.mxu0 0.0
    %1499 = vmatprep.subr.mxu0 0.0
    %1500 = vmatpush2.msra.mxu0 0.0
    %1501 = vmatprep.subr.mxu0 0.0
    %1502 = vmatpush2.msra.mxu0 0.0
    %1503 = vmatprep.subr.mxu0 0.0
    %1504 = vmatpush2.msra.mxu0 0.0
    %1505 = vmatprep.mubr.f32.mxu0 0.0
    %1506 = vmatmul.mubr.f32.gmra.mxu0 %v1433
    %v1507 = vpop.f32.mrf.mxu0
    %v1508 = vadd.f32 %v1419, %v1507
    %v1509 = vpop.f32.mrf.mxu0
    %1510 = vmatprep.mubr.f32.mxu0 0.0
    %1511 = vmatmul.mubr.f32.gmra.mxu0 %v1436
    %v1512 = vpop.f32.mrf.mxu0
    %v1513 = vadd.f32 %v1424, %v1512
    %v1514 = vpop.f32.mrf.mxu0
    %1515 = vmatprep.mubr.f32.mxu0 0.0
    %1516 = vmatmul.mubr.f32.gmra.mxu0 %v1439
    %v1517 = vpop.f32.mrf.mxu0
    %v1518 = vadd.f32 %v1429, %v1517
    %v1519 = vpop.f32.mrf.mxu0
    %1520 = vdwg.mxu0
    %s1521 = scalar_lea.vmem [#allocation6], 48
    %v1522 = vld [vmem:[%s1521] sm:$0xff]
    %v1523 = vld [vmem:[%s1521 + $0x8] sm:$0xff]
    %v1524 = vld [vmem:[%s1521 + $0x10] sm:$0xff]
    %v1526 = vsel %vm538, %v1522, 0
    %v1529 = vsel %vm538, %v1523, 0
    %v1532 = vsel %vm538, %v1524, 0
    %1534 = vmatprep.subr.mxu0 0.0
    %1535 = vmatpush1.msra.mxu0 0.0
    %1536 = vmatprep.subr.mxu0 0.0
    %1537 = vmatpush1.msra.mxu0 0.0
    %1538 = vmatprep.subr.mxu0 0.0
    %1539 = vmatpush1.msra.mxu0 0.0
    %1540 = vmatprep.subr.mxu0 0.0
    %1541 = vmatpush1.msra.mxu0 0.0
    %1542 = vmatprep.subr.mxu0 0.0
    %1543 = vmatpush1.msra.mxu0 0.0
    %1544 = vmatprep.subr.mxu0 0.0
    %1545 = vmatpush1.msra.mxu0 0.0
    %1546 = vmatprep.subr.mxu0 0.0
    %1547 = vmatpush1.msra.mxu0 0.0
    %1548 = vmatprep.subr.mxu0 0.0
    %1549 = vmatpush1.msra.mxu0 0.0
    %1550 = vmatprep.subr.mxu0 0.0
    %1551 = vmatpush1.msra.mxu0 0.0
    %1552 = vmatprep.subr.mxu0 0.0
    %1553 = vmatpush1.msra.mxu0 0.0
    %1554 = vmatprep.subr.mxu0 0.0
    %1555 = vmatpush1.msra.mxu0 0.0
    %1556 = vmatprep.subr.mxu0 0.0
    %1557 = vmatpush1.msra.mxu0 0.0
    %1558 = vmatprep.subr.mxu0 0.0
    %1559 = vmatpush1.msra.mxu0 %v1139
    %1560 = vmatprep.subr.mxu0 0.0
    %1561 = vmatpush1.msra.mxu0 %v1138
    %1562 = vmatprep.subr.mxu0 0.0
    %1563 = vmatpush1.msra.mxu0 %v1137
    %1564 = vmatprep.subr.mxu0 0.0
    %1565 = vmatpush1.msra.mxu0 %v1136
    %1566 = vmatprep.subr.mxu0 0.0
    %1567 = vmatpush2.msra.mxu0 0.0
    %1568 = vmatprep.subr.mxu0 0.0
    %1569 = vmatpush2.msra.mxu0 0.0
    %1570 = vmatprep.subr.mxu0 0.0
    %1571 = vmatpush2.msra.mxu0 0.0
    %1572 = vmatprep.subr.mxu0 0.0
    %1573 = vmatpush2.msra.mxu0 0.0
    %1574 = vmatprep.subr.mxu0 0.0
    %1575 = vmatpush2.msra.mxu0 0.0
    %1576 = vmatprep.subr.mxu0 0.0
    %1577 = vmatpush2.msra.mxu0 0.0
    %1578 = vmatprep.subr.mxu0 0.0
    %1579 = vmatpush2.msra.mxu0 0.0
    %1580 = vmatprep.subr.mxu0 0.0
    %1581 = vmatpush2.msra.mxu0 0.0
    %1582 = vmatprep.subr.mxu0 0.0
    %1583 = vmatpush2.msra.mxu0 0.0
    %1584 = vmatprep.subr.mxu0 0.0
    %1585 = vmatpush2.msra.mxu0 0.0
    %1586 = vmatprep.subr.mxu0 0.0
    %1587 = vmatpush2.msra.mxu0 0.0
    %1588 = vmatprep.subr.mxu0 0.0
    %1589 = vmatpush2.msra.mxu0 0.0
    %1590 = vmatprep.subr.mxu0 0.0
    %1591 = vmatpush2.msra.mxu0 0.0
    %1592 = vmatprep.subr.mxu0 0.0
    %1593 = vmatpush2.msra.mxu0 0.0
    %1594 = vmatprep.subr.mxu0 0.0
    %1595 = vmatpush2.msra.mxu0 0.0
    %1596 = vmatprep.subr.mxu0 0.0
    %1597 = vmatpush2.msra.mxu0 0.0
    %1598 = vmatprep.mubr.f32.mxu0 0.0
    %1599 = vmatmul.mubr.f32.gmra.mxu0 %v1526
    %v1600 = vpop.f32.mrf.mxu0
    %v1601 = vadd.f32 0.0, %v1600
    %v1602 = vpop.f32.mrf.mxu0
    %1603 = vmatprep.mubr.f32.mxu0 0.0
    %1604 = vmatmul.mubr.f32.gmra.mxu0 %v1529
    %v1605 = vpop.f32.mrf.mxu0
    %v1606 = vadd.f32 0.0, %v1605
    %v1607 = vpop.f32.mrf.mxu0
    %1608 = vmatprep.mubr.f32.mxu0 0.0
    %1609 = vmatmul.mubr.f32.gmra.mxu0 %v1532
    %v1610 = vpop.f32.mrf.mxu0
    %v1611 = vadd.f32 0.0, %v1610
    %v1612 = vpop.f32.mrf.mxu0
    %1613 = vdwg.mxu0
    %s1614 = scalar_lea.vmem %s7, 128
    %v1615 = vld [vmem:[%s1614] sm:$0xff]
    %v1616 = vld [vmem:[%s1614 + $0x8] sm:$0xff]
    %v1617 = vld [vmem:[%s1614 + $0x10] sm:$0xff]
    %v1618 = vld [vmem:[%s1614 + $0x18] sm:$0xff]
    %v1619 = vld [vmem:[%s1614 + $0x20] sm:$0xff]
    %v1620 = vld [vmem:[%s1614 + $0x28] sm:$0xff]
    %v1621 = vld [vmem:[%s1614 + $0x30] sm:$0xff]
    %v1622 = vld [vmem:[%s1614 + $0x38] sm:$0xff]
    %v1624 = vsel %vm1342, %v1601, 0
    %v1627 = vsel %vm1342, %v1606, 0
    %v1630 = vsel %vm1342, %v1611, 0
    %1632 = vmatprep.subr.mxu0 0.0
    %1633 = vmatpush1.msra.mxu0 0.0
    %1634 = vmatprep.subr.mxu0 0.0
    %1635 = vmatpush1.msra.mxu0 0.0
    %1636 = vmatprep.subr.mxu0 0.0
    %1637 = vmatpush1.msra.mxu0 0.0
    %1638 = vmatprep.subr.mxu0 0.0
    %1639 = vmatpush1.msra.mxu0 0.0
    %1640 = vmatprep.subr.mxu0 0.0
    %1641 = vmatpush1.msra.mxu0 0.0
    %1642 = vmatprep.subr.mxu0 0.0
    %1643 = vmatpush1.msra.mxu0 0.0
    %1644 = vmatprep.subr.mxu0 0.0
    %1645 = vmatpush1.msra.mxu0 0.0
    %1646 = vmatprep.subr.mxu0 0.0
    %1647 = vmatpush1.msra.mxu0 0.0
    %1648 = vmatprep.subr.mxu0 0.0
    %1649 = vmatpush1.msra.mxu0 %v1622
    %1650 = vmatprep.subr.mxu0 0.0
    %1651 = vmatpush1.msra.mxu0 %v1621
    %1652 = vmatprep.subr.mxu0 0.0
    %1653 = vmatpush1.msra.mxu0 %v1620
    %1654 = vmatprep.subr.mxu0 0.0
    %1655 = vmatpush1.msra.mxu0 %v1619
    %1656 = vmatprep.subr.mxu0 0.0
    %1657 = vmatpush1.msra.mxu0 %v1618
    %1658 = vmatprep.subr.mxu0 0.0
    %1659 = vmatpush1.msra.mxu0 %v1617
    %1660 = vmatprep.subr.mxu0 0.0
    %1661 = vmatpush1.msra.mxu0 %v1616
    %1662 = vmatprep.subr.mxu0 0.0
    %1663 = vmatpush1.msra.mxu0 %v1615
    %1664 = vmatprep.subr.mxu0 0.0
    %1665 = vmatpush2.msra.mxu0 0.0
    %1666 = vmatprep.subr.mxu0 0.0
    %1667 = vmatpush2.msra.mxu0 0.0
    %1668 = vmatprep.subr.mxu0 0.0
    %1669 = vmatpush2.msra.mxu0 0.0
    %1670 = vmatprep.subr.mxu0 0.0
    %1671 = vmatpush2.msra.mxu0 0.0
    %1672 = vmatprep.subr.mxu0 0.0
    %1673 = vmatpush2.msra.mxu0 0.0
    %1674 = vmatprep.subr.mxu0 0.0
    %1675 = vmatpush2.msra.mxu0 0.0
    %1676 = vmatprep.subr.mxu0 0.0
    %1677 = vmatpush2.msra.mxu0 0.0
    %1678 = vmatprep.subr.mxu0 0.0
    %1679 = vmatpush2.msra.mxu0 0.0
    %1680 = vmatprep.subr.mxu0 0.0
    %1681 = vmatpush2.msra.mxu0 0.0
    %1682 = vmatprep.subr.mxu0 0.0
    %1683 = vmatpush2.msra.mxu0 0.0
    %1684 = vmatprep.subr.mxu0 0.0
    %1685 = vmatpush2.msra.mxu0 0.0
    %1686 = vmatprep.subr.mxu0 0.0
    %1687 = vmatpush2.msra.mxu0 0.0
    %1688 = vmatprep.subr.mxu0 0.0
    %1689 = vmatpush2.msra.mxu0 0.0
    %1690 = vmatprep.subr.mxu0 0.0
    %1691 = vmatpush2.msra.mxu0 0.0
    %1692 = vmatprep.subr.mxu0 0.0
    %1693 = vmatpush2.msra.mxu0 0.0
    %1694 = vmatprep.subr.mxu0 0.0
    %1695 = vmatpush2.msra.mxu0 0.0
    %1696 = vmatprep.mubr.f32.mxu0 0.0
    %1697 = vmatmul.mubr.f32.gmra.mxu0 %v1624
    %v1698 = vpop.f32.mrf.mxu0
    %v1699 = vadd.f32 0.0, %v1698
    %v1700 = vpop.f32.mrf.mxu0
    %1701 = vmatprep.mubr.f32.mxu0 0.0
    %1702 = vmatmul.mubr.f32.gmra.mxu0 %v1627
    %v1703 = vpop.f32.mrf.mxu0
    %v1704 = vadd.f32 0.0, %v1703
    %v1705 = vpop.f32.mrf.mxu0
    %1706 = vmatprep.mubr.f32.mxu0 0.0
    %1707 = vmatmul.mubr.f32.gmra.mxu0 %v1630
    %v1708 = vpop.f32.mrf.mxu0
    %v1709 = vadd.f32 0.0, %v1708
    %v1710 = vpop.f32.mrf.mxu0
    %1711 = vdwg.mxu0
    %v1712 = vadd.f32 %v1508, %v1699
    %v1713 = vadd.f32 %v1513, %v1704
    %v1714 = vadd.f32 %v1518, %v1709
    %s1715 = scalar_lea.vmem [#allocation6], 72
    %v1716 = vld [vmem:[%s1715] sm:$0xff]
    %v1717 = vld [vmem:[%s1715 + $0x8] sm:$0xff]
    %v1718 = vld [vmem:[%s1715 + $0x10] sm:$0xff]
    %v1720 = vsel %vm538, %v1716, 0
    %v1723 = vsel %vm538, %v1717, 0
    %v1726 = vsel %vm538, %v1718, 0
    %1728 = vmatprep.subr.mxu0 0.0
    %1729 = vmatpush1.msra.mxu0 0.0
    %1730 = vmatprep.subr.mxu0 0.0
    %1731 = vmatpush1.msra.mxu0 0.0
    %1732 = vmatprep.subr.mxu0 0.0
    %1733 = vmatpush1.msra.mxu0 0.0
    %1734 = vmatprep.subr.mxu0 0.0
    %1735 = vmatpush1.msra.mxu0 0.0
    %1736 = vmatprep.subr.mxu0 0.0
    %1737 = vmatpush1.msra.mxu0 0.0
    %1738 = vmatprep.subr.mxu0 0.0
    %1739 = vmatpush1.msra.mxu0 0.0
    %1740 = vmatprep.subr.mxu0 0.0
    %1741 = vmatpush1.msra.mxu0 0.0
    %1742 = vmatprep.subr.mxu0 0.0
    %1743 = vmatpush1.msra.mxu0 0.0
    %1744 = vmatprep.subr.mxu0 0.0
    %1745 = vmatpush1.msra.mxu0 0.0
    %1746 = vmatprep.subr.mxu0 0.0
    %1747 = vmatpush1.msra.mxu0 0.0
    %1748 = vmatprep.subr.mxu0 0.0
    %1749 = vmatpush1.msra.mxu0 0.0
    %1750 = vmatprep.subr.mxu0 0.0
    %1751 = vmatpush1.msra.mxu0 0.0
    %1752 = vmatprep.subr.mxu0 0.0
    %1753 = vmatpush1.msra.mxu0 %v1139
    %1754 = vmatprep.subr.mxu0 0.0
    %1755 = vmatpush1.msra.mxu0 %v1138
    %1756 = vmatprep.subr.mxu0 0.0
    %1757 = vmatpush1.msra.mxu0 %v1137
    %1758 = vmatprep.subr.mxu0 0.0
    %1759 = vmatpush1.msra.mxu0 %v1136
    %1760 = vmatprep.subr.mxu0 0.0
    %1761 = vmatpush2.msra.mxu0 0.0
    %1762 = vmatprep.subr.mxu0 0.0
    %1763 = vmatpush2.msra.mxu0 0.0
    %1764 = vmatprep.subr.mxu0 0.0
    %1765 = vmatpush2.msra.mxu0 0.0
    %1766 = vmatprep.subr.mxu0 0.0
    %1767 = vmatpush2.msra.mxu0 0.0
    %1768 = vmatprep.subr.mxu0 0.0
    %1769 = vmatpush2.msra.mxu0 0.0
    %1770 = vmatprep.subr.mxu0 0.0
    %1771 = vmatpush2.msra.mxu0 0.0
    %1772 = vmatprep.subr.mxu0 0.0
    %1773 = vmatpush2.msra.mxu0 0.0
    %1774 = vmatprep.subr.mxu0 0.0
    %1775 = vmatpush2.msra.mxu0 0.0
    %1776 = vmatprep.subr.mxu0 0.0
    %1777 = vmatpush2.msra.mxu0 0.0
    %1778 = vmatprep.subr.mxu0 0.0
    %1779 = vmatpush2.msra.mxu0 0.0
    %1780 = vmatprep.subr.mxu0 0.0
    %1781 = vmatpush2.msra.mxu0 0.0
    %1782 = vmatprep.subr.mxu0 0.0
    %1783 = vmatpush2.msra.mxu0 0.0
    %1784 = vmatprep.subr.mxu0 0.0
    %1785 = vmatpush2.msra.mxu0 0.0
    %1786 = vmatprep.subr.mxu0 0.0
    %1787 = vmatpush2.msra.mxu0 0.0
    %1788 = vmatprep.subr.mxu0 0.0
    %1789 = vmatpush2.msra.mxu0 0.0
    %1790 = vmatprep.subr.mxu0 0.0
    %1791 = vmatpush2.msra.mxu0 0.0
    %1792 = vmatprep.mubr.f32.mxu0 0.0
    %1793 = vmatmul.mubr.f32.gmra.mxu0 %v1720
    %v1794 = vpop.f32.mrf.mxu0
    %v1795 = vadd.f32 0.0, %v1794
    %v1796 = vpop.f32.mrf.mxu0
    %1797 = vmatprep.mubr.f32.mxu0 0.0
    %1798 = vmatmul.mubr.f32.gmra.mxu0 %v1723
    %v1799 = vpop.f32.mrf.mxu0
    %v1800 = vadd.f32 0.0, %v1799
    %v1801 = vpop.f32.mrf.mxu0
    %1802 = vmatprep.mubr.f32.mxu0 0.0
    %1803 = vmatmul.mubr.f32.gmra.mxu0 %v1726
    %v1804 = vpop.f32.mrf.mxu0
    %v1805 = vadd.f32 0.0, %v1804
    %v1806 = vpop.f32.mrf.mxu0
    %1807 = vdwg.mxu0
    %s1808 = scalar_lea.vmem %s7, 192
    %v1809 = vld [vmem:[%s1808] sm:$0xff]
    %v1810 = vld [vmem:[%s1808 + $0x8] sm:$0xff]
    %v1811 = vld [vmem:[%s1808 + $0x10] sm:$0xff]
    %v1812 = vld [vmem:[%s1808 + $0x18] sm:$0xff]
    %v1813 = vld [vmem:[%s1808 + $0x20] sm:$0xff]
    %v1814 = vld [vmem:[%s1808 + $0x28] sm:$0xff]
    %v1815 = vld [vmem:[%s1808 + $0x30] sm:$0xff]
    %v1816 = vld [vmem:[%s1808 + $0x38] sm:$0xff]
    %v1818 = vsel %vm1342, %v1795, 0
    %v1821 = vsel %vm1342, %v1800, 0
    %v1824 = vsel %vm1342, %v1805, 0
    %1826 = vmatprep.subr.mxu0 0.0
    %1827 = vmatpush1.msra.mxu0 0.0
    %1828 = vmatprep.subr.mxu0 0.0
    %1829 = vmatpush1.msra.mxu0 0.0
    %1830 = vmatprep.subr.mxu0 0.0
    %1831 = vmatpush1.msra.mxu0 0.0
    %1832 = vmatprep.subr.mxu0 0.0
    %1833 = vmatpush1.msra.mxu0 0.0
    %1834 = vmatprep.subr.mxu0 0.0
    %1835 = vmatpush1.msra.mxu0 0.0
    %1836 = vmatprep.subr.mxu0 0.0
    %1837 = vmatpush1.msra.mxu0 0.0
    %1838 = vmatprep.subr.mxu0 0.0
    %1839 = vmatpush1.msra.mxu0 0.0
    %1840 = vmatprep.subr.mxu0 0.0
    %1841 = vmatpush1.msra.mxu0 0.0
    %1842 = vmatprep.subr.mxu0 0.0
    %1843 = vmatpush1.msra.mxu0 %v1816
    %1844 = vmatprep.subr.mxu0 0.0
    %1845 = vmatpush1.msra.mxu0 %v1815
    %1846 = vmatprep.subr.mxu0 0.0
    %1847 = vmatpush1.msra.mxu0 %v1814
    %1848 = vmatprep.subr.mxu0 0.0
    %1849 = vmatpush1.msra.mxu0 %v1813
    %1850 = vmatprep.subr.mxu0 0.0
    %1851 = vmatpush1.msra.mxu0 %v1812
    %1852 = vmatprep.subr.mxu0 0.0
    %1853 = vmatpush1.msra.mxu0 %v1811
    %1854 = vmatprep.subr.mxu0 0.0
    %1855 = vmatpush1.msra.mxu0 %v1810
    %1856 = vmatprep.subr.mxu0 0.0
    %1857 = vmatpush1.msra.mxu0 %v1809
    %1858 = vmatprep.subr.mxu0 0.0
    %1859 = vmatpush2.msra.mxu0 0.0
    %1860 = vmatprep.subr.mxu0 0.0
    %1861 = vmatpush2.msra.mxu0 0.0
    %1862 = vmatprep.subr.mxu0 0.0
    %1863 = vmatpush2.msra.mxu0 0.0
    %1864 = vmatprep.subr.mxu0 0.0
    %1865 = vmatpush2.msra.mxu0 0.0
    %1866 = vmatprep.subr.mxu0 0.0
    %1867 = vmatpush2.msra.mxu0 0.0
    %1868 = vmatprep.subr.mxu0 0.0
    %1869 = vmatpush2.msra.mxu0 0.0
    %1870 = vmatprep.subr.mxu0 0.0
    %1871 = vmatpush2.msra.mxu0 0.0
    %1872 = vmatprep.subr.mxu0 0.0
    %1873 = vmatpush2.msra.mxu0 0.0
    %1874 = vmatprep.subr.mxu0 0.0
    %1875 = vmatpush2.msra.mxu0 0.0
    %1876 = vmatprep.subr.mxu0 0.0
    %1877 = vmatpush2.msra.mxu0 0.0
    %1878 = vmatprep.subr.mxu0 0.0
    %1879 = vmatpush2.msra.mxu0 0.0
    %1880 = vmatprep.subr.mxu0 0.0
    %1881 = vmatpush2.msra.mxu0 0.0
    %1882 = vmatprep.subr.mxu0 0.0
    %1883 = vmatpush2.msra.mxu0 0.0
    %1884 = vmatprep.subr.mxu0 0.0
    %1885 = vmatpush2.msra.mxu0 0.0
    %1886 = vmatprep.subr.mxu0 0.0
    %1887 = vmatpush2.msra.mxu0 0.0
    %1888 = vmatprep.subr.mxu0 0.0
    %1889 = vmatpush2.msra.mxu0 0.0
    %1890 = vmatprep.mubr.f32.mxu0 0.0
    %1891 = vmatmul.mubr.f32.gmra.mxu0 %v1818
    %v1892 = vpop.f32.mrf.mxu0
    %v1893 = vadd.f32 0.0, %v1892
    %v1894 = vpop.f32.mrf.mxu0
    %1895 = vmatprep.mubr.f32.mxu0 0.0
    %1896 = vmatmul.mubr.f32.gmra.mxu0 %v1821
    %v1897 = vpop.f32.mrf.mxu0
    %v1898 = vadd.f32 0.0, %v1897
    %v1899 = vpop.f32.mrf.mxu0
    %1900 = vmatprep.mubr.f32.mxu0 0.0
    %1901 = vmatmul.mubr.f32.gmra.mxu0 %v1824
    %v1902 = vpop.f32.mrf.mxu0
    %v1903 = vadd.f32 0.0, %v1902
    %v1904 = vpop.f32.mrf.mxu0
    %1905 = vdwg.mxu0
    %v1906 = vadd.f32 %v1712, %v1893
    %v1907 = vadd.f32 %v1713, %v1898
    %v1908 = vadd.f32 %v1714, %v1903
    %v1909 = vld [vmem:[%s8] sm:$0x1]
    %v1911 = vlaneseq
    %v1912 = vshrl.u32 %v1911, 7
    %v1913 = vsub.s32 0, %v1912
    %v1914 = vrot.slane %v1909, %v1913
    %v1916 = vadd.f32 %v1906, %v1914
    %v1917 = vadd.f32 %v1907, %v1914
    %v1918 = vadd.f32 %v1908, %v1914
    %v1919 = vmax.f32 %v1916, 0.0
    %v1920 = vmax.f32 %v1917, 0.0
    %v1921 = vmax.f32 %v1918, 0.0
    %v1922 = vld [vmem:[#allocation7] sm:$0xff]
    %vm1923 = vcmask 195584
    %v1925 = vsel %vm1923, %v1922, 0
    %1927 = vmatprep.subr.mxu0 0.0
    %1928 = vmatpush1.msra.mxu0 0.0
    %1929 = vmatprep.subr.mxu0 0.0
    %1930 = vmatpush1.msra.mxu0 0.0
    %1931 = vmatprep.subr.mxu0 0.0
    %1932 = vmatpush1.msra.mxu0 0.0
    %1933 = vmatprep.subr.mxu0 0.0
    %1934 = vmatpush1.msra.mxu0 0.0
    %1935 = vmatprep.subr.mxu0 0.0
    %1936 = vmatpush1.msra.mxu0 0.0
    %1937 = vmatprep.subr.mxu0 0.0
    %1938 = vmatpush1.msra.mxu0 0.0
    %1939 = vmatprep.subr.mxu0 0.0
    %1940 = vmatpush1.msra.mxu0 0.0
    %1941 = vmatprep.subr.mxu0 0.0
    %1942 = vmatpush1.msra.mxu0 0.0
    %1943 = vmatprep.subr.mxu0 0.0
    %1944 = vmatpush1.msra.mxu0 0.0
    %1945 = vmatprep.subr.mxu0 0.0
    %1946 = vmatpush1.msra.mxu0 0.0
    %1947 = vmatprep.subr.mxu0 0.0
    %1948 = vmatpush1.msra.mxu0 0.0
    %1949 = vmatprep.subr.mxu0 0.0
    %1950 = vmatpush1.msra.mxu0 0.0
    %1951 = vmatprep.subr.mxu0 0.0
    %1952 = vmatpush1.msra.mxu0 0.0
    %1953 = vmatprep.subr.mxu0 0.0
    %1954 = vmatpush1.msra.mxu0 %v1921
    %1955 = vmatprep.subr.mxu0 0.0
    %1956 = vmatpush1.msra.mxu0 %v1920
    %1957 = vmatprep.subr.mxu0 0.0
    %1958 = vmatpush1.msra.mxu0 %v1919
    %1959 = vmatprep.subr.mxu0 0.0
    %1960 = vmatpush2.msra.mxu0 0.0
    %1961 = vmatprep.subr.mxu0 0.0
    %1962 = vmatpush2.msra.mxu0 0.0
    %1963 = vmatprep.subr.mxu0 0.0
    %1964 = vmatpush2.msra.mxu0 0.0
    %1965 = vmatprep.subr.mxu0 0.0
    %1966 = vmatpush2.msra.mxu0 0.0
    %1967 = vmatprep.subr.mxu0 0.0
    %1968 = vmatpush2.msra.mxu0 0.0
    %1969 = vmatprep.subr.mxu0 0.0
    %1970 = vmatpush2.msra.mxu0 0.0
    %1971 = vmatprep.subr.mxu0 0.0
    %1972 = vmatpush2.msra.mxu0 0.0
    %1973 = vmatprep.subr.mxu0 0.0
    %1974 = vmatpush2.msra.mxu0 0.0
    %1975 = vmatprep.subr.mxu0 0.0
    %1976 = vmatpush2.msra.mxu0 0.0
    %1977 = vmatprep.subr.mxu0 0.0
    %1978 = vmatpush2.msra.mxu0 0.0
    %1979 = vmatprep.subr.mxu0 0.0
    %1980 = vmatpush2.msra.mxu0 0.0
    %1981 = vmatprep.subr.mxu0 0.0
    %1982 = vmatpush2.msra.mxu0 0.0
    %1983 = vmatprep.subr.mxu0 0.0
    %1984 = vmatpush2.msra.mxu0 0.0
    %1985 = vmatprep.subr.mxu0 0.0
    %1986 = vmatpush2.msra.mxu0 0.0
    %1987 = vmatprep.subr.mxu0 0.0
    %1988 = vmatpush2.msra.mxu0 0.0
    %1989 = vmatprep.subr.mxu0 0.0
    %1990 = vmatpush2.msra.mxu0 0.0
    %1991 = vmatprep.mubr.f32.mxu0 0.0
    %1992 = vmatmul.mubr.f32.gmra.mxu0 %v1925
    %v1993 = vpop.f32.mrf.mxu0
    %v1994 = vadd.f32 0.0, %v1993
    %v1995 = vpop.f32.mrf.mxu0
    %1996 = vdwg.mxu0
    %v1997 = vld [vmem:[%s10] sm:$0xff]
    %v1998 = vld [vmem:[%s10 + $0x8] sm:$0xff]
    %v1999 = vld [vmem:[%s10 + $0x10] sm:$0xff]
    %v2000 = vld [vmem:[%s10 + $0x18] sm:$0xff]
    %v2001 = vld [vmem:[%s10 + $0x20] sm:$0xff]
    %v2002 = vld [vmem:[%s10 + $0x28] sm:$0xff]
    %v2003 = vld [vmem:[%s10 + $0x30] sm:$0xff]
    %v2004 = vld [vmem:[%s10 + $0x38] sm:$0xff]
    %v2005 = vld [vmem:[%s10 + $0x40] sm:$0xff]
    %v2006 = vld [vmem:[%s10 + $0x48] sm:$0xff]
    %v2007 = vld [vmem:[%s10 + $0x50] sm:$0xff]
    %v2008 = vld [vmem:[%s10 + $0x58] sm:$0xff]
    %v2009 = vld [vmem:[%s10 + $0x60] sm:$0xff]
    %v2010 = vld [vmem:[%s10 + $0x68] sm:$0xff]
    %v2011 = vld [vmem:[%s10 + $0x70] sm:$0xff]
    %v2012 = vld [vmem:[%s10 + $0x78] sm:$0xff]
    %s2013 = scalar_lea.vmem [#allocation7], 8
    %v2014 = vld [vmem:[%s2013] sm:$0xff]
    %v2016 = vsel %vm1923, %v2014, 0
    %2018 = vmatprep.subr.mxu0 0.0
    %2019 = vmatpush1.msra.mxu0 0.0
    %2020 = vmatprep.subr.mxu0 0.0
    %2021 = vmatpush1.msra.mxu0 0.0
    %2022 = vmatprep.subr.mxu0 0.0
    %2023 = vmatpush1.msra.mxu0 0.0
    %2024 = vmatprep.subr.mxu0 0.0
    %2025 = vmatpush1.msra.mxu0 0.0
    %2026 = vmatprep.subr.mxu0 0.0
    %2027 = vmatpush1.msra.mxu0 0.0
    %2028 = vmatprep.subr.mxu0 0.0
    %2029 = vmatpush1.msra.mxu0 0.0
    %2030 = vmatprep.subr.mxu0 0.0
    %2031 = vmatpush1.msra.mxu0 0.0
    %2032 = vmatprep.subr.mxu0 0.0
    %2033 = vmatpush1.msra.mxu0 0.0
    %2034 = vmatprep.subr.mxu0 0.0
    %2035 = vmatpush1.msra.mxu0 0.0
    %2036 = vmatprep.subr.mxu0 0.0
    %2037 = vmatpush1.msra.mxu0 0.0
    %2038 = vmatprep.subr.mxu0 0.0
    %2039 = vmatpush1.msra.mxu0 0.0
    %2040 = vmatprep.subr.mxu0 0.0
    %2041 = vmatpush1.msra.mxu0 0.0
    %2042 = vmatprep.subr.mxu0 0.0
    %2043 = vmatpush1.msra.mxu0 0.0
    %2044 = vmatprep.subr.mxu0 0.0
    %2045 = vmatpush1.msra.mxu0 %v1921
    %2046 = vmatprep.subr.mxu0 0.0
    %2047 = vmatpush1.msra.mxu0 %v1920
    %2048 = vmatprep.subr.mxu0 0.0
    %2049 = vmatpush1.msra.mxu0 %v1919
    %2050 = vmatprep.subr.mxu0 0.0
    %2051 = vmatpush2.msra.mxu0 0.0
    %2052 = vmatprep.subr.mxu0 0.0
    %2053 = vmatpush2.msra.mxu0 0.0
    %2054 = vmatprep.subr.mxu0 0.0
    %2055 = vmatpush2.msra.mxu0 0.0
    %2056 = vmatprep.subr.mxu0 0.0
    %2057 = vmatpush2.msra.mxu0 0.0
    %2058 = vmatprep.subr.mxu0 0.0
    %2059 = vmatpush2.msra.mxu0 0.0
    %2060 = vmatprep.subr.mxu0 0.0
    %2061 = vmatpush2.msra.mxu0 0.0
    %2062 = vmatprep.subr.mxu0 0.0
    %2063 = vmatpush2.msra.mxu0 0.0
    %2064 = vmatprep.subr.mxu0 0.0
    %2065 = vmatpush2.msra.mxu0 0.0
    %2066 = vmatprep.subr.mxu0 0.0
    %2067 = vmatpush2.msra.mxu0 0.0
    %2068 = vmatprep.subr.mxu0 0.0
    %2069 = vmatpush2.msra.mxu0 0.0
    %2070 = vmatprep.subr.mxu0 0.0
    %2071 = vmatpush2.msra.mxu0 0.0
    %2072 = vmatprep.subr.mxu0 0.0
    %2073 = vmatpush2.msra.mxu0 0.0
    %2074 = vmatprep.subr.mxu0 0.0
    %2075 = vmatpush2.msra.mxu0 0.0
    %2076 = vmatprep.subr.mxu0 0.0
    %2077 = vmatpush2.msra.mxu0 0.0
    %2078 = vmatprep.subr.mxu0 0.0
    %2079 = vmatpush2.msra.mxu0 0.0
    %2080 = vmatprep.subr.mxu0 0.0
    %2081 = vmatpush2.msra.mxu0 0.0
    %2082 = vmatprep.mubr.f32.mxu0 0.0
    %2083 = vmatmul.mubr.f32.gmra.mxu0 %v2016
    %v2084 = vpop.f32.mrf.mxu0
    %v2085 = vadd.f32 0.0, %v2084
    %v2086 = vpop.f32.mrf.mxu0
    %2087 = vdwg.mxu0
    %s2088 = scalar_lea.vmem %s10, 128
    %v2089 = vld [vmem:[%s2088] sm:$0xff]
    %v2090 = vld [vmem:[%s2088 + $0x8] sm:$0xff]
    %v2091 = vld [vmem:[%s2088 + $0x10] sm:$0xff]
    %v2092 = vld [vmem:[%s2088 + $0x18] sm:$0xff]
    %v2093 = vld [vmem:[%s2088 + $0x20] sm:$0xff]
    %v2094 = vld [vmem:[%s2088 + $0x28] sm:$0xff]
    %v2095 = vld [vmem:[%s2088 + $0x30] sm:$0xff]
    %v2096 = vld [vmem:[%s2088 + $0x38] sm:$0xff]
    %v2097 = vld [vmem:[%s2088 + $0x40] sm:$0xff]
    %v2098 = vld [vmem:[%s2088 + $0x48] sm:$0xff]
    %v2099 = vld [vmem:[%s2088 + $0x50] sm:$0xff]
    %v2100 = vld [vmem:[%s2088 + $0x58] sm:$0xff]
    %v2101 = vld [vmem:[%s2088 + $0x60] sm:$0xff]
    %v2102 = vld [vmem:[%s2088 + $0x68] sm:$0xff]
    %v2103 = vld [vmem:[%s2088 + $0x70] sm:$0xff]
    %v2104 = vld [vmem:[%s2088 + $0x78] sm:$0xff]
    %2105 = vmatprep.subr.mxu0 0.0
    %2106 = vmatpush1.msra.mxu0 %v2104
    %2107 = vmatprep.subr.mxu0 0.0
    %2108 = vmatpush1.msra.mxu0 %v2103
    %2109 = vmatprep.subr.mxu0 0.0
    %2110 = vmatpush1.msra.mxu0 %v2102
    %2111 = vmatprep.subr.mxu0 0.0
    %2112 = vmatpush1.msra.mxu0 %v2101
    %2113 = vmatprep.subr.mxu0 0.0
    %2114 = vmatpush1.msra.mxu0 %v2100
    %2115 = vmatprep.subr.mxu0 0.0
    %2116 = vmatpush1.msra.mxu0 %v2099
    %2117 = vmatprep.subr.mxu0 0.0
    %2118 = vmatpush1.msra.mxu0 %v2098
    %2119 = vmatprep.subr.mxu0 0.0
    %2120 = vmatpush1.msra.mxu0 %v2097
    %2121 = vmatprep.subr.mxu0 0.0
    %2122 = vmatpush1.msra.mxu0 %v2096
    %2123 = vmatprep.subr.mxu0 0.0
    %2124 = vmatpush1.msra.mxu0 %v2095
    %2125 = vmatprep.subr.mxu0 0.0
    %2126 = vmatpush1.msra.mxu0 %v2094
    %2127 = vmatprep.subr.mxu0 0.0
    %2128 = vmatpush1.msra.mxu0 %v2093
    %2129 = vmatprep.subr.mxu0 0.0
    %2130 = vmatpush1.msra.mxu0 %v2092
    %2131 = vmatprep.subr.mxu0 0.0
    %2132 = vmatpush1.msra.mxu0 %v2091
    %2133 = vmatprep.subr.mxu0 0.0
    %2134 = vmatpush1.msra.mxu0 %v2090
    %2135 = vmatprep.subr.mxu0 0.0
    %2136 = vmatpush1.msra.mxu0 %v2089
    %2137 = vmatprep.subr.mxu0 0.0
    %2138 = vmatpush2.msra.mxu0 0.0
    %2139 = vmatprep.subr.mxu0 0.0
    %2140 = vmatpush2.msra.mxu0 0.0
    %2141 = vmatprep.subr.mxu0 0.0
    %2142 = vmatpush2.msra.mxu0 0.0
    %2143 = vmatprep.subr.mxu0 0.0
    %2144 = vmatpush2.msra.mxu0 0.0
    %2145 = vmatprep.subr.mxu0 0.0
    %2146 = vmatpush2.msra.mxu0 0.0
    %2147 = vmatprep.subr.mxu0 0.0
    %2148 = vmatpush2.msra.mxu0 0.0
    %2149 = vmatprep.subr.mxu0 0.0
    %2150 = vmatpush2.msra.mxu0 0.0
    %2151 = vmatprep.subr.mxu0 0.0
    %2152 = vmatpush2.msra.mxu0 0.0
    %2153 = vmatprep.subr.mxu0 0.0
    %2154 = vmatpush2.msra.mxu0 0.0
    %2155 = vmatprep.subr.mxu0 0.0
    %2156 = vmatpush2.msra.mxu0 0.0
    %2157 = vmatprep.subr.mxu0 0.0
    %2158 = vmatpush2.msra.mxu0 0.0
    %2159 = vmatprep.subr.mxu0 0.0
    %2160 = vmatpush2.msra.mxu0 0.0
    %2161 = vmatprep.subr.mxu0 0.0
    %2162 = vmatpush2.msra.mxu0 0.0
    %2163 = vmatprep.subr.mxu0 0.0
    %2164 = vmatpush2.msra.mxu0 0.0
    %2165 = vmatprep.subr.mxu0 0.0
    %2166 = vmatpush2.msra.mxu0 0.0
    %2167 = vmatprep.subr.mxu0 0.0
    %2168 = vmatpush2.msra.mxu0 0.0
    %2169 = vmatprep.mubr.f32.mxu0 0.0
    %2170 = vmatmul.mubr.f32.gmra.mxu0 %v2085
    %v2171 = vpop.f32.mrf.mxu0
    %v2172 = vadd.f32 0.0, %v2171
    %v2173 = vpop.f32.mrf.mxu0
    %2174 = vdwg.mxu0
    %2175 = vmatprep.subr.mxu0 0.0
    %2176 = vmatpush1.msra.mxu0 %v2012
    %2177 = vmatprep.subr.mxu0 0.0
    %2178 = vmatpush1.msra.mxu0 %v2011
    %2179 = vmatprep.subr.mxu0 0.0
    %2180 = vmatpush1.msra.mxu0 %v2010
    %2181 = vmatprep.subr.mxu0 0.0
    %2182 = vmatpush1.msra.mxu0 %v2009
    %2183 = vmatprep.subr.mxu0 0.0
    %2184 = vmatpush1.msra.mxu0 %v2008
    %2185 = vmatprep.subr.mxu0 0.0
    %2186 = vmatpush1.msra.mxu0 %v2007
    %2187 = vmatprep.subr.mxu0 0.0
    %2188 = vmatpush1.msra.mxu0 %v2006
    %2189 = vmatprep.subr.mxu0 0.0
    %2190 = vmatpush1.msra.mxu0 %v2005
    %2191 = vmatprep.subr.mxu0 0.0
    %2192 = vmatpush1.msra.mxu0 %v2004
    %2193 = vmatprep.subr.mxu0 0.0
    %2194 = vmatpush1.msra.mxu0 %v2003
    %2195 = vmatprep.subr.mxu0 0.0
    %2196 = vmatpush1.msra.mxu0 %v2002
    %2197 = vmatprep.subr.mxu0 0.0
    %2198 = vmatpush1.msra.mxu0 %v2001
    %2199 = vmatprep.subr.mxu0 0.0
    %2200 = vmatpush1.msra.mxu0 %v2000
    %2201 = vmatprep.subr.mxu0 0.0
    %2202 = vmatpush1.msra.mxu0 %v1999
    %2203 = vmatprep.subr.mxu0 0.0
    %2204 = vmatpush1.msra.mxu0 %v1998
    %2205 = vmatprep.subr.mxu0 0.0
    %2206 = vmatpush1.msra.mxu0 %v1997
    %2207 = vmatprep.subr.mxu0 0.0
    %2208 = vmatpush2.msra.mxu0 0.0
    %2209 = vmatprep.subr.mxu0 0.0
    %2210 = vmatpush2.msra.mxu0 0.0
    %2211 = vmatprep.subr.mxu0 0.0
    %2212 = vmatpush2.msra.mxu0 0.0
    %2213 = vmatprep.subr.mxu0 0.0
    %2214 = vmatpush2.msra.mxu0 0.0
    %2215 = vmatprep.subr.mxu0 0.0
    %2216 = vmatpush2.msra.mxu0 0.0
    %2217 = vmatprep.subr.mxu0 0.0
    %2218 = vmatpush2.msra.mxu0 0.0
    %2219 = vmatprep.subr.mxu0 0.0
    %2220 = vmatpush2.msra.mxu0 0.0
    %2221 = vmatprep.subr.mxu0 0.0
    %2222 = vmatpush2.msra.mxu0 0.0
    %2223 = vmatprep.subr.mxu0 0.0
    %2224 = vmatpush2.msra.mxu0 0.0
    %2225 = vmatprep.subr.mxu0 0.0
    %2226 = vmatpush2.msra.mxu0 0.0
    %2227 = vmatprep.subr.mxu0 0.0
    %2228 = vmatpush2.msra.mxu0 0.0
    %2229 = vmatprep.subr.mxu0 0.0
    %2230 = vmatpush2.msra.mxu0 0.0
    %2231 = vmatprep.subr.mxu0 0.0
    %2232 = vmatpush2.msra.mxu0 0.0
    %2233 = vmatprep.subr.mxu0 0.0
    %2234 = vmatpush2.msra.mxu0 0.0
    %2235 = vmatprep.subr.mxu0 0.0
    %2236 = vmatpush2.msra.mxu0 0.0
    %2237 = vmatprep.subr.mxu0 0.0
    %2238 = vmatpush2.msra.mxu0 0.0
    %2239 = vmatprep.mubr.f32.mxu0 0.0
    %2240 = vmatmul.mubr.f32.gmra.mxu0 %v1994
    %v2241 = vpop.f32.mrf.mxu0
    %v2242 = vadd.f32 %v2172, %v2241
    %v2243 = vpop.f32.mrf.mxu0
    %2244 = vdwg.mxu0
    %s2245 = scalar_lea.vmem [#allocation7], 16
    %v2246 = vld [vmem:[%s2245] sm:$0xff]
    %v2248 = vsel %vm1923, %v2246, 0
    %2250 = vmatprep.subr.mxu0 0.0
    %2251 = vmatpush1.msra.mxu0 0.0
    %2252 = vmatprep.subr.mxu0 0.0
    %2253 = vmatpush1.msra.mxu0 0.0
    %2254 = vmatprep.subr.mxu0 0.0
    %2255 = vmatpush1.msra.mxu0 0.0
    %2256 = vmatprep.subr.mxu0 0.0
    %2257 = vmatpush1.msra.mxu0 0.0
    %2258 = vmatprep.subr.mxu0 0.0
    %2259 = vmatpush1.msra.mxu0 0.0
    %2260 = vmatprep.subr.mxu0 0.0
    %2261 = vmatpush1.msra.mxu0 0.0
    %2262 = vmatprep.subr.mxu0 0.0
    %2263 = vmatpush1.msra.mxu0 0.0
    %2264 = vmatprep.subr.mxu0 0.0
    %2265 = vmatpush1.msra.mxu0 0.0
    %2266 = vmatprep.subr.mxu0 0.0
    %2267 = vmatpush1.msra.mxu0 0.0
    %2268 = vmatprep.subr.mxu0 0.0
    %2269 = vmatpush1.msra.mxu0 0.0
    %2270 = vmatprep.subr.mxu0 0.0
    %2271 = vmatpush1.msra.mxu0 0.0
    %2272 = vmatprep.subr.mxu0 0.0
    %2273 = vmatpush1.msra.mxu0 0.0
    %2274 = vmatprep.subr.mxu0 0.0
    %2275 = vmatpush1.msra.mxu0 0.0
    %2276 = vmatprep.subr.mxu0 0.0
    %2277 = vmatpush1.msra.mxu0 %v1921
    %2278 = vmatprep.subr.mxu0 0.0
    %2279 = vmatpush1.msra.mxu0 %v1920
    %2280 = vmatprep.subr.mxu0 0.0
    %2281 = vmatpush1.msra.mxu0 %v1919
    %2282 = vmatprep.subr.mxu0 0.0
    %2283 = vmatpush2.msra.mxu0 0.0
    %2284 = vmatprep.subr.mxu0 0.0
    %2285 = vmatpush2.msra.mxu0 0.0
    %2286 = vmatprep.subr.mxu0 0.0
    %2287 = vmatpush2.msra.mxu0 0.0
    %2288 = vmatprep.subr.mxu0 0.0
    %2289 = vmatpush2.msra.mxu0 0.0
    %2290 = vmatprep.subr.mxu0 0.0
    %2291 = vmatpush2.msra.mxu0 0.0
    %2292 = vmatprep.subr.mxu0 0.0
    %2293 = vmatpush2.msra.mxu0 0.0
    %2294 = vmatprep.subr.mxu0 0.0
    %2295 = vmatpush2.msra.mxu0 0.0
    %2296 = vmatprep.subr.mxu0 0.0
    %2297 = vmatpush2.msra.mxu0 0.0
    %2298 = vmatprep.subr.mxu0 0.0
    %2299 = vmatpush2.msra.mxu0 0.0
    %2300 = vmatprep.subr.mxu0 0.0
    %2301 = vmatpush2.msra.mxu0 0.0
    %2302 = vmatprep.subr.mxu0 0.0
    %2303 = vmatpush2.msra.mxu0 0.0
    %2304 = vmatprep.subr.mxu0 0.0
    %2305 = vmatpush2.msra.mxu0 0.0
    %2306 = vmatprep.subr.mxu0 0.0
    %2307 = vmatpush2.msra.mxu0 0.0
    %2308 = vmatprep.subr.mxu0 0.0
    %2309 = vmatpush2.msra.mxu0 0.0
    %2310 = vmatprep.subr.mxu0 0.0
    %2311 = vmatpush2.msra.mxu0 0.0
    %2312 = vmatprep.subr.mxu0 0.0
    %2313 = vmatpush2.msra.mxu0 0.0
    %2314 = vmatprep.mubr.f32.mxu0 0.0
    %2315 = vmatmul.mubr.f32.gmra.mxu0 %v2248
    %v2316 = vpop.f32.mrf.mxu0
    %v2317 = vadd.f32 0.0, %v2316
    %v2318 = vpop.f32.mrf.mxu0
    %2319 = vdwg.mxu0
    %s2320 = scalar_lea.vmem %s10, 256
    %v2321 = vld [vmem:[%s2320] sm:$0xff]
    %v2322 = vld [vmem:[%s2320 + $0x8] sm:$0xff]
    %v2323 = vld [vmem:[%s2320 + $0x10] sm:$0xff]
    %v2324 = vld [vmem:[%s2320 + $0x18] sm:$0xff]
    %v2325 = vld [vmem:[%s2320 + $0x20] sm:$0xff]
    %v2326 = vld [vmem:[%s2320 + $0x28] sm:$0xff]
    %v2327 = vld [vmem:[%s2320 + $0x30] sm:$0xff]
    %v2328 = vld [vmem:[%s2320 + $0x38] sm:$0xff]
    %v2329 = vld [vmem:[%s2320 + $0x40] sm:$0xff]
    %v2330 = vld [vmem:[%s2320 + $0x48] sm:$0xff]
    %v2331 = vld [vmem:[%s2320 + $0x50] sm:$0xff]
    %v2332 = vld [vmem:[%s2320 + $0x58] sm:$0xff]
    %v2333 = vld [vmem:[%s2320 + $0x60] sm:$0xff]
    %v2334 = vld [vmem:[%s2320 + $0x68] sm:$0xff]
    %v2335 = vld [vmem:[%s2320 + $0x70] sm:$0xff]
    %v2336 = vld [vmem:[%s2320 + $0x78] sm:$0xff]
    %2337 = vmatprep.subr.mxu0 0.0
    %2338 = vmatpush1.msra.mxu0 %v2336
    %2339 = vmatprep.subr.mxu0 0.0
    %2340 = vmatpush1.msra.mxu0 %v2335
    %2341 = vmatprep.subr.mxu0 0.0
    %2342 = vmatpush1.msra.mxu0 %v2334
    %2343 = vmatprep.subr.mxu0 0.0
    %2344 = vmatpush1.msra.mxu0 %v2333
    %2345 = vmatprep.subr.mxu0 0.0
    %2346 = vmatpush1.msra.mxu0 %v2332
    %2347 = vmatprep.subr.mxu0 0.0
    %2348 = vmatpush1.msra.mxu0 %v2331
    %2349 = vmatprep.subr.mxu0 0.0
    %2350 = vmatpush1.msra.mxu0 %v2330
    %2351 = vmatprep.subr.mxu0 0.0
    %2352 = vmatpush1.msra.mxu0 %v2329
    %2353 = vmatprep.subr.mxu0 0.0
    %2354 = vmatpush1.msra.mxu0 %v2328
    %2355 = vmatprep.subr.mxu0 0.0
    %2356 = vmatpush1.msra.mxu0 %v2327
    %2357 = vmatprep.subr.mxu0 0.0
    %2358 = vmatpush1.msra.mxu0 %v2326
    %2359 = vmatprep.subr.mxu0 0.0
    %2360 = vmatpush1.msra.mxu0 %v2325
    %2361 = vmatprep.subr.mxu0 0.0
    %2362 = vmatpush1.msra.mxu0 %v2324
    %2363 = vmatprep.subr.mxu0 0.0
    %2364 = vmatpush1.msra.mxu0 %v2323
    %2365 = vmatprep.subr.mxu0 0.0
    %2366 = vmatpush1.msra.mxu0 %v2322
    %2367 = vmatprep.subr.mxu0 0.0
    %2368 = vmatpush1.msra.mxu0 %v2321
    %2369 = vmatprep.subr.mxu0 0.0
    %2370 = vmatpush2.msra.mxu0 0.0
    %2371 = vmatprep.subr.mxu0 0.0
    %2372 = vmatpush2.msra.mxu0 0.0
    %2373 = vmatprep.subr.mxu0 0.0
    %2374 = vmatpush2.msra.mxu0 0.0
    %2375 = vmatprep.subr.mxu0 0.0
    %2376 = vmatpush2.msra.mxu0 0.0
    %2377 = vmatprep.subr.mxu0 0.0
    %2378 = vmatpush2.msra.mxu0 0.0
    %2379 = vmatprep.subr.mxu0 0.0
    %2380 = vmatpush2.msra.mxu0 0.0
    %2381 = vmatprep.subr.mxu0 0.0
    %2382 = vmatpush2.msra.mxu0 0.0
    %2383 = vmatprep.subr.mxu0 0.0
    %2384 = vmatpush2.msra.mxu0 0.0
    %2385 = vmatprep.subr.mxu0 0.0
    %2386 = vmatpush2.msra.mxu0 0.0
    %2387 = vmatprep.subr.mxu0 0.0
    %2388 = vmatpush2.msra.mxu0 0.0
    %2389 = vmatprep.subr.mxu0 0.0
    %2390 = vmatpush2.msra.mxu0 0.0
    %2391 = vmatprep.subr.mxu0 0.0
    %2392 = vmatpush2.msra.mxu0 0.0
    %2393 = vmatprep.subr.mxu0 0.0
    %2394 = vmatpush2.msra.mxu0 0.0
    %2395 = vmatprep.subr.mxu0 0.0
    %2396 = vmatpush2.msra.mxu0 0.0
    %2397 = vmatprep.subr.mxu0 0.0
    %2398 = vmatpush2.msra.mxu0 0.0
    %2399 = vmatprep.subr.mxu0 0.0
    %2400 = vmatpush2.msra.mxu0 0.0
    %2401 = vmatprep.mubr.f32.mxu0 0.0
    %2402 = vmatmul.mubr.f32.gmra.mxu0 %v2317
    %v2403 = vpop.f32.mrf.mxu0
    %v2404 = vadd.f32 0.0, %v2403
    %v2405 = vpop.f32.mrf.mxu0
    %2406 = vdwg.mxu0
    %v2407 = vadd.f32 %v2242, %v2404
    %s2408 = scalar_lea.vmem [#allocation7], 24
    %v2409 = vld [vmem:[%s2408] sm:$0xff]
    %v2411 = vsel %vm1923, %v2409, 0
    %2413 = vmatprep.subr.mxu0 0.0
    %2414 = vmatpush1.msra.mxu0 0.0
    %2415 = vmatprep.subr.mxu0 0.0
    %2416 = vmatpush1.msra.mxu0 0.0
    %2417 = vmatprep.subr.mxu0 0.0
    %2418 = vmatpush1.msra.mxu0 0.0
    %2419 = vmatprep.subr.mxu0 0.0
    %2420 = vmatpush1.msra.mxu0 0.0
    %2421 = vmatprep.subr.mxu0 0.0
    %2422 = vmatpush1.msra.mxu0 0.0
    %2423 = vmatprep.subr.mxu0 0.0
    %2424 = vmatpush1.msra.mxu0 0.0
    %2425 = vmatprep.subr.mxu0 0.0
    %2426 = vmatpush1.msra.mxu0 0.0
    %2427 = vmatprep.subr.mxu0 0.0
    %2428 = vmatpush1.msra.mxu0 0.0
    %2429 = vmatprep.subr.mxu0 0.0
    %2430 = vmatpush1.msra.mxu0 0.0
    %2431 = vmatprep.subr.mxu0 0.0
    %2432 = vmatpush1.msra.mxu0 0.0
    %2433 = vmatprep.subr.mxu0 0.0
    %2434 = vmatpush1.msra.mxu0 0.0
    %2435 = vmatprep.subr.mxu0 0.0
    %2436 = vmatpush1.msra.mxu0 0.0
    %2437 = vmatprep.subr.mxu0 0.0
    %2438 = vmatpush1.msra.mxu0 0.0
    %2439 = vmatprep.subr.mxu0 0.0
    %2440 = vmatpush1.msra.mxu0 %v1921
    %2441 = vmatprep.subr.mxu0 0.0
    %2442 = vmatpush1.msra.mxu0 %v1920
    %2443 = vmatprep.subr.mxu0 0.0
    %2444 = vmatpush1.msra.mxu0 %v1919
    %2445 = vmatprep.subr.mxu0 0.0
    %2446 = vmatpush2.msra.mxu0 0.0
    %2447 = vmatprep.subr.mxu0 0.0
    %2448 = vmatpush2.msra.mxu0 0.0
    %2449 = vmatprep.subr.mxu0 0.0
    %2450 = vmatpush2.msra.mxu0 0.0
    %2451 = vmatprep.subr.mxu0 0.0
    %2452 = vmatpush2.msra.mxu0 0.0
    %2453 = vmatprep.subr.mxu0 0.0
    %2454 = vmatpush2.msra.mxu0 0.0
    %2455 = vmatprep.subr.mxu0 0.0
    %2456 = vmatpush2.msra.mxu0 0.0
    %2457 = vmatprep.subr.mxu0 0.0
    %2458 = vmatpush2.msra.mxu0 0.0
    %2459 = vmatprep.subr.mxu0 0.0
    %2460 = vmatpush2.msra.mxu0 0.0
    %2461 = vmatprep.subr.mxu0 0.0
    %2462 = vmatpush2.msra.mxu0 0.0
    %2463 = vmatprep.subr.mxu0 0.0
    %2464 = vmatpush2.msra.mxu0 0.0
    %2465 = vmatprep.subr.mxu0 0.0
    %2466 = vmatpush2.msra.mxu0 0.0
    %2467 = vmatprep.subr.mxu0 0.0
    %2468 = vmatpush2.msra.mxu0 0.0
    %2469 = vmatprep.subr.mxu0 0.0
    %2470 = vmatpush2.msra.mxu0 0.0
    %2471 = vmatprep.subr.mxu0 0.0
    %2472 = vmatpush2.msra.mxu0 0.0
    %2473 = vmatprep.subr.mxu0 0.0
    %2474 = vmatpush2.msra.mxu0 0.0
    %2475 = vmatprep.subr.mxu0 0.0
    %2476 = vmatpush2.msra.mxu0 0.0
    %2477 = vmatprep.mubr.f32.mxu0 0.0
    %2478 = vmatmul.mubr.f32.gmra.mxu0 %v2411
    %v2479 = vpop.f32.mrf.mxu0
    %v2480 = vadd.f32 0.0, %v2479
    %v2481 = vpop.f32.mrf.mxu0
    %2482 = vdwg.mxu0
    %s2483 = scalar_lea.vmem %s10, 384
    %v2484 = vld [vmem:[%s2483] sm:$0xff]
    %v2485 = vld [vmem:[%s2483 + $0x8] sm:$0xff]
    %v2486 = vld [vmem:[%s2483 + $0x10] sm:$0xff]
    %v2487 = vld [vmem:[%s2483 + $0x18] sm:$0xff]
    %v2488 = vld [vmem:[%s2483 + $0x20] sm:$0xff]
    %v2489 = vld [vmem:[%s2483 + $0x28] sm:$0xff]
    %v2490 = vld [vmem:[%s2483 + $0x30] sm:$0xff]
    %v2491 = vld [vmem:[%s2483 + $0x38] sm:$0xff]
    %v2492 = vld [vmem:[%s2483 + $0x40] sm:$0xff]
    %v2493 = vld [vmem:[%s2483 + $0x48] sm:$0xff]
    %v2494 = vld [vmem:[%s2483 + $0x50] sm:$0xff]
    %v2495 = vld [vmem:[%s2483 + $0x58] sm:$0xff]
    %v2496 = vld [vmem:[%s2483 + $0x60] sm:$0xff]
    %v2497 = vld [vmem:[%s2483 + $0x68] sm:$0xff]
    %v2498 = vld [vmem:[%s2483 + $0x70] sm:$0xff]
    %v2499 = vld [vmem:[%s2483 + $0x78] sm:$0xff]
    %2500 = vmatprep.subr.mxu0 0.0
    %2501 = vmatpush1.msra.mxu0 %v2499
    %2502 = vmatprep.subr.mxu0 0.0
    %2503 = vmatpush1.msra.mxu0 %v2498
    %2504 = vmatprep.subr.mxu0 0.0
    %2505 = vmatpush1.msra.mxu0 %v2497
    %2506 = vmatprep.subr.mxu0 0.0
    %2507 = vmatpush1.msra.mxu0 %v2496
    %2508 = vmatprep.subr.mxu0 0.0
    %2509 = vmatpush1.msra.mxu0 %v2495
    %2510 = vmatprep.subr.mxu0 0.0
    %2511 = vmatpush1.msra.mxu0 %v2494
    %2512 = vmatprep.subr.mxu0 0.0
    %2513 = vmatpush1.msra.mxu0 %v2493
    %2514 = vmatprep.subr.mxu0 0.0
    %2515 = vmatpush1.msra.mxu0 %v2492
    %2516 = vmatprep.subr.mxu0 0.0
    %2517 = vmatpush1.msra.mxu0 %v2491
    %2518 = vmatprep.subr.mxu0 0.0
    %2519 = vmatpush1.msra.mxu0 %v2490
    %2520 = vmatprep.subr.mxu0 0.0
    %2521 = vmatpush1.msra.mxu0 %v2489
    %2522 = vmatprep.subr.mxu0 0.0
    %2523 = vmatpush1.msra.mxu0 %v2488
    %2524 = vmatprep.subr.mxu0 0.0
    %2525 = vmatpush1.msra.mxu0 %v2487
    %2526 = vmatprep.subr.mxu0 0.0
    %2527 = vmatpush1.msra.mxu0 %v2486
    %2528 = vmatprep.subr.mxu0 0.0
    %2529 = vmatpush1.msra.mxu0 %v2485
    %2530 = vmatprep.subr.mxu0 0.0
    %2531 = vmatpush1.msra.mxu0 %v2484
    %2532 = vmatprep.subr.mxu0 0.0
    %2533 = vmatpush2.msra.mxu0 0.0
    %2534 = vmatprep.subr.mxu0 0.0
    %2535 = vmatpush2.msra.mxu0 0.0
    %2536 = vmatprep.subr.mxu0 0.0
    %2537 = vmatpush2.msra.mxu0 0.0
    %2538 = vmatprep.subr.mxu0 0.0
    %2539 = vmatpush2.msra.mxu0 0.0
    %2540 = vmatprep.subr.mxu0 0.0
    %2541 = vmatpush2.msra.mxu0 0.0
    %2542 = vmatprep.subr.mxu0 0.0
    %2543 = vmatpush2.msra.mxu0 0.0
    %2544 = vmatprep.subr.mxu0 0.0
    %2545 = vmatpush2.msra.mxu0 0.0
    %2546 = vmatprep.subr.mxu0 0.0
    %2547 = vmatpush2.msra.mxu0 0.0
    %2548 = vmatprep.subr.mxu0 0.0
    %2549 = vmatpush2.msra.mxu0 0.0
    %2550 = vmatprep.subr.mxu0 0.0
    %2551 = vmatpush2.msra.mxu0 0.0
    %2552 = vmatprep.subr.mxu0 0.0
    %2553 = vmatpush2.msra.mxu0 0.0
    %2554 = vmatprep.subr.mxu0 0.0
    %2555 = vmatpush2.msra.mxu0 0.0
    %2556 = vmatprep.subr.mxu0 0.0
    %2557 = vmatpush2.msra.mxu0 0.0
    %2558 = vmatprep.subr.mxu0 0.0
    %2559 = vmatpush2.msra.mxu0 0.0
    %2560 = vmatprep.subr.mxu0 0.0
    %2561 = vmatpush2.msra.mxu0 0.0
    %2562 = vmatprep.subr.mxu0 0.0
    %2563 = vmatpush2.msra.mxu0 0.0
    %2564 = vmatprep.mubr.f32.mxu0 0.0
    %2565 = vmatmul.mubr.f32.gmra.mxu0 %v2480
    %v2566 = vpop.f32.mrf.mxu0
    %v2567 = vadd.f32 0.0, %v2566
    %v2568 = vpop.f32.mrf.mxu0
    %2569 = vdwg.mxu0
    %v2570 = vadd.f32 %v2407, %v2567
    %s2571 = scalar_lea.vmem [#allocation7], 32
    %v2572 = vld [vmem:[%s2571] sm:$0xff]
    %v2574 = vsel %vm1923, %v2572, 0
    %2576 = vmatprep.subr.mxu0 0.0
    %2577 = vmatpush1.msra.mxu0 0.0
    %2578 = vmatprep.subr.mxu0 0.0
    %2579 = vmatpush1.msra.mxu0 0.0
    %2580 = vmatprep.subr.mxu0 0.0
    %2581 = vmatpush1.msra.mxu0 0.0
    %2582 = vmatprep.subr.mxu0 0.0
    %2583 = vmatpush1.msra.mxu0 0.0
    %2584 = vmatprep.subr.mxu0 0.0
    %2585 = vmatpush1.msra.mxu0 0.0
    %2586 = vmatprep.subr.mxu0 0.0
    %2587 = vmatpush1.msra.mxu0 0.0
    %2588 = vmatprep.subr.mxu0 0.0
    %2589 = vmatpush1.msra.mxu0 0.0
    %2590 = vmatprep.subr.mxu0 0.0
    %2591 = vmatpush1.msra.mxu0 0.0
    %2592 = vmatprep.subr.mxu0 0.0
    %2593 = vmatpush1.msra.mxu0 0.0
    %2594 = vmatprep.subr.mxu0 0.0
    %2595 = vmatpush1.msra.mxu0 0.0
    %2596 = vmatprep.subr.mxu0 0.0
    %2597 = vmatpush1.msra.mxu0 0.0
    %2598 = vmatprep.subr.mxu0 0.0
    %2599 = vmatpush1.msra.mxu0 0.0
    %2600 = vmatprep.subr.mxu0 0.0
    %2601 = vmatpush1.msra.mxu0 0.0
    %2602 = vmatprep.subr.mxu0 0.0
    %2603 = vmatpush1.msra.mxu0 %v1921
    %2604 = vmatprep.subr.mxu0 0.0
    %2605 = vmatpush1.msra.mxu0 %v1920
    %2606 = vmatprep.subr.mxu0 0.0
    %2607 = vmatpush1.msra.mxu0 %v1919
    %2608 = vmatprep.subr.mxu0 0.0
    %2609 = vmatpush2.msra.mxu0 0.0
    %2610 = vmatprep.subr.mxu0 0.0
    %2611 = vmatpush2.msra.mxu0 0.0
    %2612 = vmatprep.subr.mxu0 0.0
    %2613 = vmatpush2.msra.mxu0 0.0
    %2614 = vmatprep.subr.mxu0 0.0
    %2615 = vmatpush2.msra.mxu0 0.0
    %2616 = vmatprep.subr.mxu0 0.0
    %2617 = vmatpush2.msra.mxu0 0.0
    %2618 = vmatprep.subr.mxu0 0.0
    %2619 = vmatpush2.msra.mxu0 0.0
    %2620 = vmatprep.subr.mxu0 0.0
    %2621 = vmatpush2.msra.mxu0 0.0
    %2622 = vmatprep.subr.mxu0 0.0
    %2623 = vmatpush2.msra.mxu0 0.0
    %2624 = vmatprep.subr.mxu0 0.0
    %2625 = vmatpush2.msra.mxu0 0.0
    %2626 = vmatprep.subr.mxu0 0.0
    %2627 = vmatpush2.msra.mxu0 0.0
    %2628 = vmatprep.subr.mxu0 0.0
    %2629 = vmatpush2.msra.mxu0 0.0
    %2630 = vmatprep.subr.mxu0 0.0
    %2631 = vmatpush2.msra.mxu0 0.0
    %2632 = vmatprep.subr.mxu0 0.0
    %2633 = vmatpush2.msra.mxu0 0.0
    %2634 = vmatprep.subr.mxu0 0.0
    %2635 = vmatpush2.msra.mxu0 0.0
    %2636 = vmatprep.subr.mxu0 0.0
    %2637 = vmatpush2.msra.mxu0 0.0
    %2638 = vmatprep.subr.mxu0 0.0
    %2639 = vmatpush2.msra.mxu0 0.0
    %2640 = vmatprep.mubr.f32.mxu0 0.0
    %2641 = vmatmul.mubr.f32.gmra.mxu0 %v2574
    %v2642 = vpop.f32.mrf.mxu0
    %v2643 = vadd.f32 0.0, %v2642
    %v2644 = vpop.f32.mrf.mxu0
    %2645 = vdwg.mxu0
    %s2646 = scalar_lea.vmem %s10, 512
    %v2647 = vld [vmem:[%s2646] sm:$0xff]
    %v2648 = vld [vmem:[%s2646 + $0x8] sm:$0xff]
    %v2649 = vld [vmem:[%s2646 + $0x10] sm:$0xff]
    %v2650 = vld [vmem:[%s2646 + $0x18] sm:$0xff]
    %v2651 = vld [vmem:[%s2646 + $0x20] sm:$0xff]
    %v2652 = vld [vmem:[%s2646 + $0x28] sm:$0xff]
    %v2653 = vld [vmem:[%s2646 + $0x30] sm:$0xff]
    %v2654 = vld [vmem:[%s2646 + $0x38] sm:$0xff]
    %v2655 = vld [vmem:[%s2646 + $0x40] sm:$0xff]
    %v2656 = vld [vmem:[%s2646 + $0x48] sm:$0xff]
    %v2657 = vld [vmem:[%s2646 + $0x50] sm:$0xff]
    %v2658 = vld [vmem:[%s2646 + $0x58] sm:$0xff]
    %v2659 = vld [vmem:[%s2646 + $0x60] sm:$0xff]
    %v2660 = vld [vmem:[%s2646 + $0x68] sm:$0xff]
    %v2661 = vld [vmem:[%s2646 + $0x70] sm:$0xff]
    %v2662 = vld [vmem:[%s2646 + $0x78] sm:$0xff]
    %2663 = vmatprep.subr.mxu0 0.0
    %2664 = vmatpush1.msra.mxu0 %v2662
    %2665 = vmatprep.subr.mxu0 0.0
    %2666 = vmatpush1.msra.mxu0 %v2661
    %2667 = vmatprep.subr.mxu0 0.0
    %2668 = vmatpush1.msra.mxu0 %v2660
    %2669 = vmatprep.subr.mxu0 0.0
    %2670 = vmatpush1.msra.mxu0 %v2659
    %2671 = vmatprep.subr.mxu0 0.0
    %2672 = vmatpush1.msra.mxu0 %v2658
    %2673 = vmatprep.subr.mxu0 0.0
    %2674 = vmatpush1.msra.mxu0 %v2657
    %2675 = vmatprep.subr.mxu0 0.0
    %2676 = vmatpush1.msra.mxu0 %v2656
    %2677 = vmatprep.subr.mxu0 0.0
    %2678 = vmatpush1.msra.mxu0 %v2655
    %2679 = vmatprep.subr.mxu0 0.0
    %2680 = vmatpush1.msra.mxu0 %v2654
    %2681 = vmatprep.subr.mxu0 0.0
    %2682 = vmatpush1.msra.mxu0 %v2653
    %2683 = vmatprep.subr.mxu0 0.0
    %2684 = vmatpush1.msra.mxu0 %v2652
    %2685 = vmatprep.subr.mxu0 0.0
    %2686 = vmatpush1.msra.mxu0 %v2651
    %2687 = vmatprep.subr.mxu0 0.0
    %2688 = vmatpush1.msra.mxu0 %v2650
    %2689 = vmatprep.subr.mxu0 0.0
    %2690 = vmatpush1.msra.mxu0 %v2649
    %2691 = vmatprep.subr.mxu0 0.0
    %2692 = vmatpush1.msra.mxu0 %v2648
    %2693 = vmatprep.subr.mxu0 0.0
    %2694 = vmatpush1.msra.mxu0 %v2647
    %2695 = vmatprep.subr.mxu0 0.0
    %2696 = vmatpush2.msra.mxu0 0.0
    %2697 = vmatprep.subr.mxu0 0.0
    %2698 = vmatpush2.msra.mxu0 0.0
    %2699 = vmatprep.subr.mxu0 0.0
    %2700 = vmatpush2.msra.mxu0 0.0
    %2701 = vmatprep.subr.mxu0 0.0
    %2702 = vmatpush2.msra.mxu0 0.0
    %2703 = vmatprep.subr.mxu0 0.0
    %2704 = vmatpush2.msra.mxu0 0.0
    %2705 = vmatprep.subr.mxu0 0.0
    %2706 = vmatpush2.msra.mxu0 0.0
    %2707 = vmatprep.subr.mxu0 0.0
    %2708 = vmatpush2.msra.mxu0 0.0
    %2709 = vmatprep.subr.mxu0 0.0
    %2710 = vmatpush2.msra.mxu0 0.0
    %2711 = vmatprep.subr.mxu0 0.0
    %2712 = vmatpush2.msra.mxu0 0.0
    %2713 = vmatprep.subr.mxu0 0.0
    %2714 = vmatpush2.msra.mxu0 0.0
    %2715 = vmatprep.subr.mxu0 0.0
    %2716 = vmatpush2.msra.mxu0 0.0
    %2717 = vmatprep.subr.mxu0 0.0
    %2718 = vmatpush2.msra.mxu0 0.0
    %2719 = vmatprep.subr.mxu0 0.0
    %2720 = vmatpush2.msra.mxu0 0.0
    %2721 = vmatprep.subr.mxu0 0.0
    %2722 = vmatpush2.msra.mxu0 0.0
    %2723 = vmatprep.subr.mxu0 0.0
    %2724 = vmatpush2.msra.mxu0 0.0
    %2725 = vmatprep.subr.mxu0 0.0
    %2726 = vmatpush2.msra.mxu0 0.0
    %2727 = vmatprep.mubr.f32.mxu0 0.0
    %2728 = vmatmul.mubr.f32.gmra.mxu0 %v2643
    %v2729 = vpop.f32.mrf.mxu0
    %v2730 = vadd.f32 0.0, %v2729
    %v2731 = vpop.f32.mrf.mxu0
    %2732 = vdwg.mxu0
    %v2733 = vadd.f32 %v2570, %v2730
    %s2734 = scalar_lea.vmem [#allocation7], 40
    %v2735 = vld [vmem:[%s2734] sm:$0xff]
    %v2737 = vsel %vm1923, %v2735, 0
    %2739 = vmatprep.subr.mxu0 0.0
    %2740 = vmatpush1.msra.mxu0 0.0
    %2741 = vmatprep.subr.mxu0 0.0
    %2742 = vmatpush1.msra.mxu0 0.0
    %2743 = vmatprep.subr.mxu0 0.0
    %2744 = vmatpush1.msra.mxu0 0.0
    %2745 = vmatprep.subr.mxu0 0.0
    %2746 = vmatpush1.msra.mxu0 0.0
    %2747 = vmatprep.subr.mxu0 0.0
    %2748 = vmatpush1.msra.mxu0 0.0
    %2749 = vmatprep.subr.mxu0 0.0
    %2750 = vmatpush1.msra.mxu0 0.0
    %2751 = vmatprep.subr.mxu0 0.0
    %2752 = vmatpush1.msra.mxu0 0.0
    %2753 = vmatprep.subr.mxu0 0.0
    %2754 = vmatpush1.msra.mxu0 0.0
    %2755 = vmatprep.subr.mxu0 0.0
    %2756 = vmatpush1.msra.mxu0 0.0
    %2757 = vmatprep.subr.mxu0 0.0
    %2758 = vmatpush1.msra.mxu0 0.0
    %2759 = vmatprep.subr.mxu0 0.0
    %2760 = vmatpush1.msra.mxu0 0.0
    %2761 = vmatprep.subr.mxu0 0.0
    %2762 = vmatpush1.msra.mxu0 0.0
    %2763 = vmatprep.subr.mxu0 0.0
    %2764 = vmatpush1.msra.mxu0 0.0
    %2765 = vmatprep.subr.mxu0 0.0
    %2766 = vmatpush1.msra.mxu0 %v1921
    %2767 = vmatprep.subr.mxu0 0.0
    %2768 = vmatpush1.msra.mxu0 %v1920
    %2769 = vmatprep.subr.mxu0 0.0
    %2770 = vmatpush1.msra.mxu0 %v1919
    %2771 = vmatprep.subr.mxu0 0.0
    %2772 = vmatpush2.msra.mxu0 0.0
    %2773 = vmatprep.subr.mxu0 0.0
    %2774 = vmatpush2.msra.mxu0 0.0
    %2775 = vmatprep.subr.mxu0 0.0
    %2776 = vmatpush2.msra.mxu0 0.0
    %2777 = vmatprep.subr.mxu0 0.0
    %2778 = vmatpush2.msra.mxu0 0.0
    %2779 = vmatprep.subr.mxu0 0.0
    %2780 = vmatpush2.msra.mxu0 0.0
    %2781 = vmatprep.subr.mxu0 0.0
    %2782 = vmatpush2.msra.mxu0 0.0
    %2783 = vmatprep.subr.mxu0 0.0
    %2784 = vmatpush2.msra.mxu0 0.0
    %2785 = vmatprep.subr.mxu0 0.0
    %2786 = vmatpush2.msra.mxu0 0.0
    %2787 = vmatprep.subr.mxu0 0.0
    %2788 = vmatpush2.msra.mxu0 0.0
    %2789 = vmatprep.subr.mxu0 0.0
    %2790 = vmatpush2.msra.mxu0 0.0
    %2791 = vmatprep.subr.mxu0 0.0
    %2792 = vmatpush2.msra.mxu0 0.0
    %2793 = vmatprep.subr.mxu0 0.0
    %2794 = vmatpush2.msra.mxu0 0.0
    %2795 = vmatprep.subr.mxu0 0.0
    %2796 = vmatpush2.msra.mxu0 0.0
    %2797 = vmatprep.subr.mxu0 0.0
    %2798 = vmatpush2.msra.mxu0 0.0
    %2799 = vmatprep.subr.mxu0 0.0
    %2800 = vmatpush2.msra.mxu0 0.0
    %2801 = vmatprep.subr.mxu0 0.0
    %2802 = vmatpush2.msra.mxu0 0.0
    %2803 = vmatprep.mubr.f32.mxu0 0.0
    %2804 = vmatmul.mubr.f32.gmra.mxu0 %v2737
    %v2805 = vpop.f32.mrf.mxu0
    %v2806 = vadd.f32 0.0, %v2805
    %v2807 = vpop.f32.mrf.mxu0
    %2808 = vdwg.mxu0
    %s2809 = scalar_lea.vmem %s10, 640
    %v2810 = vld [vmem:[%s2809] sm:$0xff]
    %v2811 = vld [vmem:[%s2809 + $0x8] sm:$0xff]
    %v2812 = vld [vmem:[%s2809 + $0x10] sm:$0xff]
    %v2813 = vld [vmem:[%s2809 + $0x18] sm:$0xff]
    %v2814 = vld [vmem:[%s2809 + $0x20] sm:$0xff]
    %v2815 = vld [vmem:[%s2809 + $0x28] sm:$0xff]
    %v2816 = vld [vmem:[%s2809 + $0x30] sm:$0xff]
    %v2817 = vld [vmem:[%s2809 + $0x38] sm:$0xff]
    %v2818 = vld [vmem:[%s2809 + $0x40] sm:$0xff]
    %v2819 = vld [vmem:[%s2809 + $0x48] sm:$0xff]
    %v2820 = vld [vmem:[%s2809 + $0x50] sm:$0xff]
    %v2821 = vld [vmem:[%s2809 + $0x58] sm:$0xff]
    %v2822 = vld [vmem:[%s2809 + $0x60] sm:$0xff]
    %v2823 = vld [vmem:[%s2809 + $0x68] sm:$0xff]
    %v2824 = vld [vmem:[%s2809 + $0x70] sm:$0xff]
    %v2825 = vld [vmem:[%s2809 + $0x78] sm:$0xff]
    %2826 = vmatprep.subr.mxu0 0.0
    %2827 = vmatpush1.msra.mxu0 %v2825
    %2828 = vmatprep.subr.mxu0 0.0
    %2829 = vmatpush1.msra.mxu0 %v2824
    %2830 = vmatprep.subr.mxu0 0.0
    %2831 = vmatpush1.msra.mxu0 %v2823
    %2832 = vmatprep.subr.mxu0 0.0
    %2833 = vmatpush1.msra.mxu0 %v2822
    %2834 = vmatprep.subr.mxu0 0.0
    %2835 = vmatpush1.msra.mxu0 %v2821
    %2836 = vmatprep.subr.mxu0 0.0
    %2837 = vmatpush1.msra.mxu0 %v2820
    %2838 = vmatprep.subr.mxu0 0.0
    %2839 = vmatpush1.msra.mxu0 %v2819
    %2840 = vmatprep.subr.mxu0 0.0
    %2841 = vmatpush1.msra.mxu0 %v2818
    %2842 = vmatprep.subr.mxu0 0.0
    %2843 = vmatpush1.msra.mxu0 %v2817
    %2844 = vmatprep.subr.mxu0 0.0
    %2845 = vmatpush1.msra.mxu0 %v2816
    %2846 = vmatprep.subr.mxu0 0.0
    %2847 = vmatpush1.msra.mxu0 %v2815
    %2848 = vmatprep.subr.mxu0 0.0
    %2849 = vmatpush1.msra.mxu0 %v2814
    %2850 = vmatprep.subr.mxu0 0.0
    %2851 = vmatpush1.msra.mxu0 %v2813
    %2852 = vmatprep.subr.mxu0 0.0
    %2853 = vmatpush1.msra.mxu0 %v2812
    %2854 = vmatprep.subr.mxu0 0.0
    %2855 = vmatpush1.msra.mxu0 %v2811
    %2856 = vmatprep.subr.mxu0 0.0
    %2857 = vmatpush1.msra.mxu0 %v2810
    %2858 = vmatprep.subr.mxu0 0.0
    %2859 = vmatpush2.msra.mxu0 0.0
    %2860 = vmatprep.subr.mxu0 0.0
    %2861 = vmatpush2.msra.mxu0 0.0
    %2862 = vmatprep.subr.mxu0 0.0
    %2863 = vmatpush2.msra.mxu0 0.0
    %2864 = vmatprep.subr.mxu0 0.0
    %2865 = vmatpush2.msra.mxu0 0.0
    %2866 = vmatprep.subr.mxu0 0.0
    %2867 = vmatpush2.msra.mxu0 0.0
    %2868 = vmatprep.subr.mxu0 0.0
    %2869 = vmatpush2.msra.mxu0 0.0
    %2870 = vmatprep.subr.mxu0 0.0
    %2871 = vmatpush2.msra.mxu0 0.0
    %2872 = vmatprep.subr.mxu0 0.0
    %2873 = vmatpush2.msra.mxu0 0.0
    %2874 = vmatprep.subr.mxu0 0.0
    %2875 = vmatpush2.msra.mxu0 0.0
    %2876 = vmatprep.subr.mxu0 0.0
    %2877 = vmatpush2.msra.mxu0 0.0
    %2878 = vmatprep.subr.mxu0 0.0
    %2879 = vmatpush2.msra.mxu0 0.0
    %2880 = vmatprep.subr.mxu0 0.0
    %2881 = vmatpush2.msra.mxu0 0.0
    %2882 = vmatprep.subr.mxu0 0.0
    %2883 = vmatpush2.msra.mxu0 0.0
    %2884 = vmatprep.subr.mxu0 0.0
    %2885 = vmatpush2.msra.mxu0 0.0
    %2886 = vmatprep.subr.mxu0 0.0
    %2887 = vmatpush2.msra.mxu0 0.0
    %2888 = vmatprep.subr.mxu0 0.0
    %2889 = vmatpush2.msra.mxu0 0.0
    %2890 = vmatprep.mubr.f32.mxu0 0.0
    %2891 = vmatmul.mubr.f32.gmra.mxu0 %v2806
    %v2892 = vpop.f32.mrf.mxu0
    %v2893 = vadd.f32 0.0, %v2892
    %v2894 = vpop.f32.mrf.mxu0
    %2895 = vdwg.mxu0
    %v2896 = vadd.f32 %v2733, %v2893
    %s2897 = scalar_lea.vmem [#allocation7], 48
    %v2898 = vld [vmem:[%s2897] sm:$0xff]
    %v2900 = vsel %vm1923, %v2898, 0
    %2902 = vmatprep.subr.mxu0 0.0
    %2903 = vmatpush1.msra.mxu0 0.0
    %2904 = vmatprep.subr.mxu0 0.0
    %2905 = vmatpush1.msra.mxu0 0.0
    %2906 = vmatprep.subr.mxu0 0.0
    %2907 = vmatpush1.msra.mxu0 0.0
    %2908 = vmatprep.subr.mxu0 0.0
    %2909 = vmatpush1.msra.mxu0 0.0
    %2910 = vmatprep.subr.mxu0 0.0
    %2911 = vmatpush1.msra.mxu0 0.0
    %2912 = vmatprep.subr.mxu0 0.0
    %2913 = vmatpush1.msra.mxu0 0.0
    %2914 = vmatprep.subr.mxu0 0.0
    %2915 = vmatpush1.msra.mxu0 0.0
    %2916 = vmatprep.subr.mxu0 0.0
    %2917 = vmatpush1.msra.mxu0 0.0
    %2918 = vmatprep.subr.mxu0 0.0
    %2919 = vmatpush1.msra.mxu0 0.0
    %2920 = vmatprep.subr.mxu0 0.0
    %2921 = vmatpush1.msra.mxu0 0.0
    %2922 = vmatprep.subr.mxu0 0.0
    %2923 = vmatpush1.msra.mxu0 0.0
    %2924 = vmatprep.subr.mxu0 0.0
    %2925 = vmatpush1.msra.mxu0 0.0
    %2926 = vmatprep.subr.mxu0 0.0
    %2927 = vmatpush1.msra.mxu0 0.0
    %2928 = vmatprep.subr.mxu0 0.0
    %2929 = vmatpush1.msra.mxu0 %v1921
    %2930 = vmatprep.subr.mxu0 0.0
    %2931 = vmatpush1.msra.mxu0 %v1920
    %2932 = vmatprep.subr.mxu0 0.0
    %2933 = vmatpush1.msra.mxu0 %v1919
    %2934 = vmatprep.subr.mxu0 0.0
    %2935 = vmatpush2.msra.mxu0 0.0
    %2936 = vmatprep.subr.mxu0 0.0
    %2937 = vmatpush2.msra.mxu0 0.0
    %2938 = vmatprep.subr.mxu0 0.0
    %2939 = vmatpush2.msra.mxu0 0.0
    %2940 = vmatprep.subr.mxu0 0.0
    %2941 = vmatpush2.msra.mxu0 0.0
    %2942 = vmatprep.subr.mxu0 0.0
    %2943 = vmatpush2.msra.mxu0 0.0
    %2944 = vmatprep.subr.mxu0 0.0
    %2945 = vmatpush2.msra.mxu0 0.0
    %2946 = vmatprep.subr.mxu0 0.0
    %2947 = vmatpush2.msra.mxu0 0.0
    %2948 = vmatprep.subr.mxu0 0.0
    %2949 = vmatpush2.msra.mxu0 0.0
    %2950 = vmatprep.subr.mxu0 0.0
    %2951 = vmatpush2.msra.mxu0 0.0
    %2952 = vmatprep.subr.mxu0 0.0
    %2953 = vmatpush2.msra.mxu0 0.0
    %2954 = vmatprep.subr.mxu0 0.0
    %2955 = vmatpush2.msra.mxu0 0.0
    %2956 = vmatprep.subr.mxu0 0.0
    %2957 = vmatpush2.msra.mxu0 0.0
    %2958 = vmatprep.subr.mxu0 0.0
    %2959 = vmatpush2.msra.mxu0 0.0
    %2960 = vmatprep.subr.mxu0 0.0
    %2961 = vmatpush2.msra.mxu0 0.0
    %2962 = vmatprep.subr.mxu0 0.0
    %2963 = vmatpush2.msra.mxu0 0.0
    %2964 = vmatprep.subr.mxu0 0.0
    %2965 = vmatpush2.msra.mxu0 0.0
    %2966 = vmatprep.mubr.f32.mxu0 0.0
    %2967 = vmatmul.mubr.f32.gmra.mxu0 %v2900
    %v2968 = vpop.f32.mrf.mxu0
    %v2969 = vadd.f32 0.0, %v2968
    %v2970 = vpop.f32.mrf.mxu0
    %2971 = vdwg.mxu0
    %s2972 = scalar_lea.vmem %s10, 768
    %v2973 = vld [vmem:[%s2972] sm:$0xff]
    %v2974 = vld [vmem:[%s2972 + $0x8] sm:$0xff]
    %v2975 = vld [vmem:[%s2972 + $0x10] sm:$0xff]
    %v2976 = vld [vmem:[%s2972 + $0x18] sm:$0xff]
    %v2977 = vld [vmem:[%s2972 + $0x20] sm:$0xff]
    %v2978 = vld [vmem:[%s2972 + $0x28] sm:$0xff]
    %v2979 = vld [vmem:[%s2972 + $0x30] sm:$0xff]
    %v2980 = vld [vmem:[%s2972 + $0x38] sm:$0xff]
    %v2981 = vld [vmem:[%s2972 + $0x40] sm:$0xff]
    %v2982 = vld [vmem:[%s2972 + $0x48] sm:$0xff]
    %v2983 = vld [vmem:[%s2972 + $0x50] sm:$0xff]
    %v2984 = vld [vmem:[%s2972 + $0x58] sm:$0xff]
    %v2985 = vld [vmem:[%s2972 + $0x60] sm:$0xff]
    %v2986 = vld [vmem:[%s2972 + $0x68] sm:$0xff]
    %v2987 = vld [vmem:[%s2972 + $0x70] sm:$0xff]
    %v2988 = vld [vmem:[%s2972 + $0x78] sm:$0xff]
    %2989 = vmatprep.subr.mxu0 0.0
    %2990 = vmatpush1.msra.mxu0 %v2988
    %2991 = vmatprep.subr.mxu0 0.0
    %2992 = vmatpush1.msra.mxu0 %v2987
    %2993 = vmatprep.subr.mxu0 0.0
    %2994 = vmatpush1.msra.mxu0 %v2986
    %2995 = vmatprep.subr.mxu0 0.0
    %2996 = vmatpush1.msra.mxu0 %v2985
    %2997 = vmatprep.subr.mxu0 0.0
    %2998 = vmatpush1.msra.mxu0 %v2984
    %2999 = vmatprep.subr.mxu0 0.0
    %3000 = vmatpush1.msra.mxu0 %v2983
    %3001 = vmatprep.subr.mxu0 0.0
    %3002 = vmatpush1.msra.mxu0 %v2982
    %3003 = vmatprep.subr.mxu0 0.0
    %3004 = vmatpush1.msra.mxu0 %v2981
    %3005 = vmatprep.subr.mxu0 0.0
    %3006 = vmatpush1.msra.mxu0 %v2980
    %3007 = vmatprep.subr.mxu0 0.0
    %3008 = vmatpush1.msra.mxu0 %v2979
    %3009 = vmatprep.subr.mxu0 0.0
    %3010 = vmatpush1.msra.mxu0 %v2978
    %3011 = vmatprep.subr.mxu0 0.0
    %3012 = vmatpush1.msra.mxu0 %v2977
    %3013 = vmatprep.subr.mxu0 0.0
    %3014 = vmatpush1.msra.mxu0 %v2976
    %3015 = vmatprep.subr.mxu0 0.0
    %3016 = vmatpush1.msra.mxu0 %v2975
    %3017 = vmatprep.subr.mxu0 0.0
    %3018 = vmatpush1.msra.mxu0 %v2974
    %3019 = vmatprep.subr.mxu0 0.0
    %3020 = vmatpush1.msra.mxu0 %v2973
    %3021 = vmatprep.subr.mxu0 0.0
    %3022 = vmatpush2.msra.mxu0 0.0
    %3023 = vmatprep.subr.mxu0 0.0
    %3024 = vmatpush2.msra.mxu0 0.0
    %3025 = vmatprep.subr.mxu0 0.0
    %3026 = vmatpush2.msra.mxu0 0.0
    %3027 = vmatprep.subr.mxu0 0.0
    %3028 = vmatpush2.msra.mxu0 0.0
    %3029 = vmatprep.subr.mxu0 0.0
    %3030 = vmatpush2.msra.mxu0 0.0
    %3031 = vmatprep.subr.mxu0 0.0
    %3032 = vmatpush2.msra.mxu0 0.0
    %3033 = vmatprep.subr.mxu0 0.0
    %3034 = vmatpush2.msra.mxu0 0.0
    %3035 = vmatprep.subr.mxu0 0.0
    %3036 = vmatpush2.msra.mxu0 0.0
    %3037 = vmatprep.subr.mxu0 0.0
    %3038 = vmatpush2.msra.mxu0 0.0
    %3039 = vmatprep.subr.mxu0 0.0
    %3040 = vmatpush2.msra.mxu0 0.0
    %3041 = vmatprep.subr.mxu0 0.0
    %3042 = vmatpush2.msra.mxu0 0.0
    %3043 = vmatprep.subr.mxu0 0.0
    %3044 = vmatpush2.msra.mxu0 0.0
    %3045 = vmatprep.subr.mxu0 0.0
    %3046 = vmatpush2.msra.mxu0 0.0
    %3047 = vmatprep.subr.mxu0 0.0
    %3048 = vmatpush2.msra.mxu0 0.0
    %3049 = vmatprep.subr.mxu0 0.0
    %3050 = vmatpush2.msra.mxu0 0.0
    %3051 = vmatprep.subr.mxu0 0.0
    %3052 = vmatpush2.msra.mxu0 0.0
    %3053 = vmatprep.mubr.f32.mxu0 0.0
    %3054 = vmatmul.mubr.f32.gmra.mxu0 %v2969
    %v3055 = vpop.f32.mrf.mxu0
    %v3056 = vadd.f32 0.0, %v3055
    %v3057 = vpop.f32.mrf.mxu0
    %3058 = vdwg.mxu0
    %v3059 = vadd.f32 %v2896, %v3056
    %s3060 = scalar_lea.vmem [#allocation7], 56
    %v3061 = vld [vmem:[%s3060] sm:$0xff]
    %v3063 = vsel %vm1923, %v3061, 0
    %3065 = vmatprep.subr.mxu0 0.0
    %3066 = vmatpush1.msra.mxu0 0.0
    %3067 = vmatprep.subr.mxu0 0.0
    %3068 = vmatpush1.msra.mxu0 0.0
    %3069 = vmatprep.subr.mxu0 0.0
    %3070 = vmatpush1.msra.mxu0 0.0
    %3071 = vmatprep.subr.mxu0 0.0
    %3072 = vmatpush1.msra.mxu0 0.0
    %3073 = vmatprep.subr.mxu0 0.0
    %3074 = vmatpush1.msra.mxu0 0.0
    %3075 = vmatprep.subr.mxu0 0.0
    %3076 = vmatpush1.msra.mxu0 0.0
    %3077 = vmatprep.subr.mxu0 0.0
    %3078 = vmatpush1.msra.mxu0 0.0
    %3079 = vmatprep.subr.mxu0 0.0
    %3080 = vmatpush1.msra.mxu0 0.0
    %3081 = vmatprep.subr.mxu0 0.0
    %3082 = vmatpush1.msra.mxu0 0.0
    %3083 = vmatprep.subr.mxu0 0.0
    %3084 = vmatpush1.msra.mxu0 0.0
    %3085 = vmatprep.subr.mxu0 0.0
    %3086 = vmatpush1.msra.mxu0 0.0
    %3087 = vmatprep.subr.mxu0 0.0
    %3088 = vmatpush1.msra.mxu0 0.0
    %3089 = vmatprep.subr.mxu0 0.0
    %3090 = vmatpush1.msra.mxu0 0.0
    %3091 = vmatprep.subr.mxu0 0.0
    %3092 = vmatpush1.msra.mxu0 %v1921
    %3093 = vmatprep.subr.mxu0 0.0
    %3094 = vmatpush1.msra.mxu0 %v1920
    %3095 = vmatprep.subr.mxu0 0.0
    %3096 = vmatpush1.msra.mxu0 %v1919
    %3097 = vmatprep.subr.mxu0 0.0
    %3098 = vmatpush2.msra.mxu0 0.0
    %3099 = vmatprep.subr.mxu0 0.0
    %3100 = vmatpush2.msra.mxu0 0.0
    %3101 = vmatprep.subr.mxu0 0.0
    %3102 = vmatpush2.msra.mxu0 0.0
    %3103 = vmatprep.subr.mxu0 0.0
    %3104 = vmatpush2.msra.mxu0 0.0
    %3105 = vmatprep.subr.mxu0 0.0
    %3106 = vmatpush2.msra.mxu0 0.0
    %3107 = vmatprep.subr.mxu0 0.0
    %3108 = vmatpush2.msra.mxu0 0.0
    %3109 = vmatprep.subr.mxu0 0.0
    %3110 = vmatpush2.msra.mxu0 0.0
    %3111 = vmatprep.subr.mxu0 0.0
    %3112 = vmatpush2.msra.mxu0 0.0
    %3113 = vmatprep.subr.mxu0 0.0
    %3114 = vmatpush2.msra.mxu0 0.0
    %3115 = vmatprep.subr.mxu0 0.0
    %3116 = vmatpush2.msra.mxu0 0.0
    %3117 = vmatprep.subr.mxu0 0.0
    %3118 = vmatpush2.msra.mxu0 0.0
    %3119 = vmatprep.subr.mxu0 0.0
    %3120 = vmatpush2.msra.mxu0 0.0
    %3121 = vmatprep.subr.mxu0 0.0
    %3122 = vmatpush2.msra.mxu0 0.0
    %3123 = vmatprep.subr.mxu0 0.0
    %3124 = vmatpush2.msra.mxu0 0.0
    %3125 = vmatprep.subr.mxu0 0.0
    %3126 = vmatpush2.msra.mxu0 0.0
    %3127 = vmatprep.subr.mxu0 0.0
    %3128 = vmatpush2.msra.mxu0 0.0
    %3129 = vmatprep.mubr.f32.mxu0 0.0
    %3130 = vmatmul.mubr.f32.gmra.mxu0 %v3063
    %v3131 = vpop.f32.mrf.mxu0
    %v3132 = vadd.f32 0.0, %v3131
    %v3133 = vpop.f32.mrf.mxu0
    %3134 = vdwg.mxu0
    %s3135 = scalar_lea.vmem %s10, 896
    %v3136 = vld [vmem:[%s3135] sm:$0xff]
    %v3137 = vld [vmem:[%s3135 + $0x8] sm:$0xff]
    %v3138 = vld [vmem:[%s3135 + $0x10] sm:$0xff]
    %v3139 = vld [vmem:[%s3135 + $0x18] sm:$0xff]
    %v3140 = vld [vmem:[%s3135 + $0x20] sm:$0xff]
    %v3141 = vld [vmem:[%s3135 + $0x28] sm:$0xff]
    %v3142 = vld [vmem:[%s3135 + $0x30] sm:$0xff]
    %v3143 = vld [vmem:[%s3135 + $0x38] sm:$0xff]
    %v3144 = vld [vmem:[%s3135 + $0x40] sm:$0xff]
    %v3145 = vld [vmem:[%s3135 + $0x48] sm:$0xff]
    %v3146 = vld [vmem:[%s3135 + $0x50] sm:$0xff]
    %v3147 = vld [vmem:[%s3135 + $0x58] sm:$0xff]
    %v3148 = vld [vmem:[%s3135 + $0x60] sm:$0xff]
    %v3149 = vld [vmem:[%s3135 + $0x68] sm:$0xff]
    %v3150 = vld [vmem:[%s3135 + $0x70] sm:$0xff]
    %v3151 = vld [vmem:[%s3135 + $0x78] sm:$0xff]
    %3152 = vmatprep.subr.mxu0 0.0
    %3153 = vmatpush1.msra.mxu0 %v3151
    %3154 = vmatprep.subr.mxu0 0.0
    %3155 = vmatpush1.msra.mxu0 %v3150
    %3156 = vmatprep.subr.mxu0 0.0
    %3157 = vmatpush1.msra.mxu0 %v3149
    %3158 = vmatprep.subr.mxu0 0.0
    %3159 = vmatpush1.msra.mxu0 %v3148
    %3160 = vmatprep.subr.mxu0 0.0
    %3161 = vmatpush1.msra.mxu0 %v3147
    %3162 = vmatprep.subr.mxu0 0.0
    %3163 = vmatpush1.msra.mxu0 %v3146
    %3164 = vmatprep.subr.mxu0 0.0
    %3165 = vmatpush1.msra.mxu0 %v3145
    %3166 = vmatprep.subr.mxu0 0.0
    %3167 = vmatpush1.msra.mxu0 %v3144
    %3168 = vmatprep.subr.mxu0 0.0
    %3169 = vmatpush1.msra.mxu0 %v3143
    %3170 = vmatprep.subr.mxu0 0.0
    %3171 = vmatpush1.msra.mxu0 %v3142
    %3172 = vmatprep.subr.mxu0 0.0
    %3173 = vmatpush1.msra.mxu0 %v3141
    %3174 = vmatprep.subr.mxu0 0.0
    %3175 = vmatpush1.msra.mxu0 %v3140
    %3176 = vmatprep.subr.mxu0 0.0
    %3177 = vmatpush1.msra.mxu0 %v3139
    %3178 = vmatprep.subr.mxu0 0.0
    %3179 = vmatpush1.msra.mxu0 %v3138
    %3180 = vmatprep.subr.mxu0 0.0
    %3181 = vmatpush1.msra.mxu0 %v3137
    %3182 = vmatprep.subr.mxu0 0.0
    %3183 = vmatpush1.msra.mxu0 %v3136
    %3184 = vmatprep.subr.mxu0 0.0
    %3185 = vmatpush2.msra.mxu0 0.0
    %3186 = vmatprep.subr.mxu0 0.0
    %3187 = vmatpush2.msra.mxu0 0.0
    %3188 = vmatprep.subr.mxu0 0.0
    %3189 = vmatpush2.msra.mxu0 0.0
    %3190 = vmatprep.subr.mxu0 0.0
    %3191 = vmatpush2.msra.mxu0 0.0
    %3192 = vmatprep.subr.mxu0 0.0
    %3193 = vmatpush2.msra.mxu0 0.0
    %3194 = vmatprep.subr.mxu0 0.0
    %3195 = vmatpush2.msra.mxu0 0.0
    %3196 = vmatprep.subr.mxu0 0.0
    %3197 = vmatpush2.msra.mxu0 0.0
    %3198 = vmatprep.subr.mxu0 0.0
    %3199 = vmatpush2.msra.mxu0 0.0
    %3200 = vmatprep.subr.mxu0 0.0
    %3201 = vmatpush2.msra.mxu0 0.0
    %3202 = vmatprep.subr.mxu0 0.0
    %3203 = vmatpush2.msra.mxu0 0.0
    %3204 = vmatprep.subr.mxu0 0.0
    %3205 = vmatpush2.msra.mxu0 0.0
    %3206 = vmatprep.subr.mxu0 0.0
    %3207 = vmatpush2.msra.mxu0 0.0
    %3208 = vmatprep.subr.mxu0 0.0
    %3209 = vmatpush2.msra.mxu0 0.0
    %3210 = vmatprep.subr.mxu0 0.0
    %3211 = vmatpush2.msra.mxu0 0.0
    %3212 = vmatprep.subr.mxu0 0.0
    %3213 = vmatpush2.msra.mxu0 0.0
    %3214 = vmatprep.subr.mxu0 0.0
    %3215 = vmatpush2.msra.mxu0 0.0
    %3216 = vmatprep.mubr.f32.mxu0 0.0
    %3217 = vmatmul.mubr.f32.gmra.mxu0 %v3132
    %v3218 = vpop.f32.mrf.mxu0
    %v3219 = vadd.f32 0.0, %v3218
    %v3220 = vpop.f32.mrf.mxu0
    %3221 = vdwg.mxu0
    %v3222 = vadd.f32 %v3059, %v3219
    %s3223 = scalar_lea.vmem [#allocation7], 64
    %v3224 = vld [vmem:[%s3223] sm:$0xff]
    %v3226 = vsel %vm1923, %v3224, 0
    %3228 = vmatprep.subr.mxu0 0.0
    %3229 = vmatpush1.msra.mxu0 0.0
    %3230 = vmatprep.subr.mxu0 0.0
    %3231 = vmatpush1.msra.mxu0 0.0
    %3232 = vmatprep.subr.mxu0 0.0
    %3233 = vmatpush1.msra.mxu0 0.0
    %3234 = vmatprep.subr.mxu0 0.0
    %3235 = vmatpush1.msra.mxu0 0.0
    %3236 = vmatprep.subr.mxu0 0.0
    %3237 = vmatpush1.msra.mxu0 0.0
    %3238 = vmatprep.subr.mxu0 0.0
    %3239 = vmatpush1.msra.mxu0 0.0
    %3240 = vmatprep.subr.mxu0 0.0
    %3241 = vmatpush1.msra.mxu0 0.0
    %3242 = vmatprep.subr.mxu0 0.0
    %3243 = vmatpush1.msra.mxu0 0.0
    %3244 = vmatprep.subr.mxu0 0.0
    %3245 = vmatpush1.msra.mxu0 0.0
    %3246 = vmatprep.subr.mxu0 0.0
    %3247 = vmatpush1.msra.mxu0 0.0
    %3248 = vmatprep.subr.mxu0 0.0
    %3249 = vmatpush1.msra.mxu0 0.0
    %3250 = vmatprep.subr.mxu0 0.0
    %3251 = vmatpush1.msra.mxu0 0.0
    %3252 = vmatprep.subr.mxu0 0.0
    %3253 = vmatpush1.msra.mxu0 0.0
    %3254 = vmatprep.subr.mxu0 0.0
    %3255 = vmatpush1.msra.mxu0 %v1921
    %3256 = vmatprep.subr.mxu0 0.0
    %3257 = vmatpush1.msra.mxu0 %v1920
    %3258 = vmatprep.subr.mxu0 0.0
    %3259 = vmatpush1.msra.mxu0 %v1919
    %3260 = vmatprep.subr.mxu0 0.0
    %3261 = vmatpush2.msra.mxu0 0.0
    %3262 = vmatprep.subr.mxu0 0.0
    %3263 = vmatpush2.msra.mxu0 0.0
    %3264 = vmatprep.subr.mxu0 0.0
    %3265 = vmatpush2.msra.mxu0 0.0
    %3266 = vmatprep.subr.mxu0 0.0
    %3267 = vmatpush2.msra.mxu0 0.0
    %3268 = vmatprep.subr.mxu0 0.0
    %3269 = vmatpush2.msra.mxu0 0.0
    %3270 = vmatprep.subr.mxu0 0.0
    %3271 = vmatpush2.msra.mxu0 0.0
    %3272 = vmatprep.subr.mxu0 0.0
    %3273 = vmatpush2.msra.mxu0 0.0
    %3274 = vmatprep.subr.mxu0 0.0
    %3275 = vmatpush2.msra.mxu0 0.0
    %3276 = vmatprep.subr.mxu0 0.0
    %3277 = vmatpush2.msra.mxu0 0.0
    %3278 = vmatprep.subr.mxu0 0.0
    %3279 = vmatpush2.msra.mxu0 0.0
    %3280 = vmatprep.subr.mxu0 0.0
    %3281 = vmatpush2.msra.mxu0 0.0
    %3282 = vmatprep.subr.mxu0 0.0
    %3283 = vmatpush2.msra.mxu0 0.0
    %3284 = vmatprep.subr.mxu0 0.0
    %3285 = vmatpush2.msra.mxu0 0.0
    %3286 = vmatprep.subr.mxu0 0.0
    %3287 = vmatpush2.msra.mxu0 0.0
    %3288 = vmatprep.subr.mxu0 0.0
    %3289 = vmatpush2.msra.mxu0 0.0
    %3290 = vmatprep.subr.mxu0 0.0
    %3291 = vmatpush2.msra.mxu0 0.0
    %3292 = vmatprep.mubr.f32.mxu0 0.0
    %3293 = vmatmul.mubr.f32.gmra.mxu0 %v3226
    %v3294 = vpop.f32.mrf.mxu0
    %v3295 = vadd.f32 0.0, %v3294
    %v3296 = vpop.f32.mrf.mxu0
    %3297 = vdwg.mxu0
    %s3298 = scalar_lea.vmem %s10, 1024
    %v3299 = vld [vmem:[%s3298] sm:$0xff]
    %v3300 = vld [vmem:[%s3298 + $0x8] sm:$0xff]
    %v3301 = vld [vmem:[%s3298 + $0x10] sm:$0xff]
    %v3302 = vld [vmem:[%s3298 + $0x18] sm:$0xff]
    %v3303 = vld [vmem:[%s3298 + $0x20] sm:$0xff]
    %v3304 = vld [vmem:[%s3298 + $0x28] sm:$0xff]
    %v3305 = vld [vmem:[%s3298 + $0x30] sm:$0xff]
    %v3306 = vld [vmem:[%s3298 + $0x38] sm:$0xff]
    %v3307 = vld [vmem:[%s3298 + $0x40] sm:$0xff]
    %v3308 = vld [vmem:[%s3298 + $0x48] sm:$0xff]
    %v3309 = vld [vmem:[%s3298 + $0x50] sm:$0xff]
    %v3310 = vld [vmem:[%s3298 + $0x58] sm:$0xff]
    %v3311 = vld [vmem:[%s3298 + $0x60] sm:$0xff]
    %v3312 = vld [vmem:[%s3298 + $0x68] sm:$0xff]
    %v3313 = vld [vmem:[%s3298 + $0x70] sm:$0xff]
    %v3314 = vld [vmem:[%s3298 + $0x78] sm:$0xff]
    %3315 = vmatprep.subr.mxu0 0.0
    %3316 = vmatpush1.msra.mxu0 %v3314
    %3317 = vmatprep.subr.mxu0 0.0
    %3318 = vmatpush1.msra.mxu0 %v3313
    %3319 = vmatprep.subr.mxu0 0.0
    %3320 = vmatpush1.msra.mxu0 %v3312
    %3321 = vmatprep.subr.mxu0 0.0
    %3322 = vmatpush1.msra.mxu0 %v3311
    %3323 = vmatprep.subr.mxu0 0.0
    %3324 = vmatpush1.msra.mxu0 %v3310
    %3325 = vmatprep.subr.mxu0 0.0
    %3326 = vmatpush1.msra.mxu0 %v3309
    %3327 = vmatprep.subr.mxu0 0.0
    %3328 = vmatpush1.msra.mxu0 %v3308
    %3329 = vmatprep.subr.mxu0 0.0
    %3330 = vmatpush1.msra.mxu0 %v3307
    %3331 = vmatprep.subr.mxu0 0.0
    %3332 = vmatpush1.msra.mxu0 %v3306
    %3333 = vmatprep.subr.mxu0 0.0
    %3334 = vmatpush1.msra.mxu0 %v3305
    %3335 = vmatprep.subr.mxu0 0.0
    %3336 = vmatpush1.msra.mxu0 %v3304
    %3337 = vmatprep.subr.mxu0 0.0
    %3338 = vmatpush1.msra.mxu0 %v3303
    %3339 = vmatprep.subr.mxu0 0.0
    %3340 = vmatpush1.msra.mxu0 %v3302
    %3341 = vmatprep.subr.mxu0 0.0
    %3342 = vmatpush1.msra.mxu0 %v3301
    %3343 = vmatprep.subr.mxu0 0.0
    %3344 = vmatpush1.msra.mxu0 %v3300
    %3345 = vmatprep.subr.mxu0 0.0
    %3346 = vmatpush1.msra.mxu0 %v3299
    %3347 = vmatprep.subr.mxu0 0.0
    %3348 = vmatpush2.msra.mxu0 0.0
    %3349 = vmatprep.subr.mxu0 0.0
    %3350 = vmatpush2.msra.mxu0 0.0
    %3351 = vmatprep.subr.mxu0 0.0
    %3352 = vmatpush2.msra.mxu0 0.0
    %3353 = vmatprep.subr.mxu0 0.0
    %3354 = vmatpush2.msra.mxu0 0.0
    %3355 = vmatprep.subr.mxu0 0.0
    %3356 = vmatpush2.msra.mxu0 0.0
    %3357 = vmatprep.subr.mxu0 0.0
    %3358 = vmatpush2.msra.mxu0 0.0
    %3359 = vmatprep.subr.mxu0 0.0
    %3360 = vmatpush2.msra.mxu0 0.0
    %3361 = vmatprep.subr.mxu0 0.0
    %3362 = vmatpush2.msra.mxu0 0.0
    %3363 = vmatprep.subr.mxu0 0.0
    %3364 = vmatpush2.msra.mxu0 0.0
    %3365 = vmatprep.subr.mxu0 0.0
    %3366 = vmatpush2.msra.mxu0 0.0
    %3367 = vmatprep.subr.mxu0 0.0
    %3368 = vmatpush2.msra.mxu0 0.0
    %3369 = vmatprep.subr.mxu0 0.0
    %3370 = vmatpush2.msra.mxu0 0.0
    %3371 = vmatprep.subr.mxu0 0.0
    %3372 = vmatpush2.msra.mxu0 0.0
    %3373 = vmatprep.subr.mxu0 0.0
    %3374 = vmatpush2.msra.mxu0 0.0
    %3375 = vmatprep.subr.mxu0 0.0
    %3376 = vmatpush2.msra.mxu0 0.0
    %3377 = vmatprep.subr.mxu0 0.0
    %3378 = vmatpush2.msra.mxu0 0.0
    %3379 = vmatprep.mubr.f32.mxu0 0.0
    %3380 = vmatmul.mubr.f32.gmra.mxu0 %v3295
    %v3381 = vpop.f32.mrf.mxu0
    %v3382 = vadd.f32 0.0, %v3381
    %v3383 = vpop.f32.mrf.mxu0
    %3384 = vdwg.mxu0
    %v3385 = vadd.f32 %v3222, %v3382
    %v3386 = vld [vmem:[%s11] sm:$0x1]
    %v3388 = vlaneseq
    %v3389 = vshrl.u32 %v3388, 7
    %v3390 = vsub.s32 0, %v3389
    %v3391 = vrot.slane %v3386, %v3390
    %v3393 = vadd.f32 %v3385, %v3391
    %v3394 = vmax.f32 %v3393, 0.0
    %v3395 = vld [vmem:[#allocation9] sm:$0xff]
    %v3396 = vld [vmem:[#allocation9 + $0x8] sm:$0xff]
    %v3397 = vld [vmem:[#allocation9 + $0x10] sm:$0xff]
    %v3398 = vld [vmem:[#allocation9 + $0x18] sm:$0xff]
    %v3399 = vld [vmem:[#allocation9 + $0x20] sm:$0xff]
    %v3400 = vld [vmem:[#allocation9 + $0x28] sm:$0xff]
    %v3401 = vld [vmem:[#allocation9 + $0x30] sm:$0xff]
    %v3402 = vld [vmem:[#allocation9 + $0x38] sm:$0xff]
    %v3403 = vld [vmem:[#allocation9 + $0x40] sm:$0xff]
    %v3404 = vld [vmem:[#allocation9 + $0x48] sm:$0xff]
    %v3405 = vld [vmem:[#allocation9 + $0x50] sm:$0xff]
    %v3406 = vld [vmem:[#allocation9 + $0x58] sm:$0xff]
    %v3407 = vld [vmem:[#allocation9 + $0x60] sm:$0xff]
    %v3408 = vld [vmem:[#allocation9 + $0x68] sm:$0xff]
    %v3409 = vld [vmem:[#allocation9 + $0x70] sm:$0xff]
    %v3410 = vld [vmem:[#allocation9 + $0x78] sm:$0xff]
    %v3411 = vld [vmem:[%s13] sm:$0x1]
    %v3413 = vlaneseq
    %v3414 = vshrl.u32 %v3413, 7
    %v3415 = vsub.s32 0, %v3414
    %v3416 = vrot.slane %v3411, %v3415
    %3418 = vmatprep.subr.mxu0 0.0
    %3419 = vmatpush1.msra.mxu0 %v3410
    %3420 = vmatprep.subr.mxu0 0.0
    %3421 = vmatpush1.msra.mxu0 %v3409
    %3422 = vmatprep.subr.mxu0 0.0
    %3423 = vmatpush1.msra.mxu0 %v3408
    %3424 = vmatprep.subr.mxu0 0.0
    %3425 = vmatpush1.msra.mxu0 %v3407
    %3426 = vmatprep.subr.mxu0 0.0
    %3427 = vmatpush1.msra.mxu0 %v3406
    %3428 = vmatprep.subr.mxu0 0.0
    %3429 = vmatpush1.msra.mxu0 %v3405
    %3430 = vmatprep.subr.mxu0 0.0
    %3431 = vmatpush1.msra.mxu0 %v3404
    %3432 = vmatprep.subr.mxu0 0.0
    %3433 = vmatpush1.msra.mxu0 %v3403
    %3434 = vmatprep.subr.mxu0 0.0
    %3435 = vmatpush1.msra.mxu0 %v3402
    %3436 = vmatprep.subr.mxu0 0.0
    %3437 = vmatpush1.msra.mxu0 %v3401
    %3438 = vmatprep.subr.mxu0 0.0
    %3439 = vmatpush1.msra.mxu0 %v3400
    %3440 = vmatprep.subr.mxu0 0.0
    %3441 = vmatpush1.msra.mxu0 %v3399
    %3442 = vmatprep.subr.mxu0 0.0
    %3443 = vmatpush1.msra.mxu0 %v3398
    %3444 = vmatprep.subr.mxu0 0.0
    %3445 = vmatpush1.msra.mxu0 %v3397
    %3446 = vmatprep.subr.mxu0 0.0
    %3447 = vmatpush1.msra.mxu0 %v3396
    %3448 = vmatprep.subr.mxu0 0.0
    %3449 = vmatpush1.msra.mxu0 %v3395
    %3450 = vmatprep.subr.mxu0 0.0
    %3451 = vmatpush2.msra.mxu0 0.0
    %3452 = vmatprep.subr.mxu0 0.0
    %3453 = vmatpush2.msra.mxu0 0.0
    %3454 = vmatprep.subr.mxu0 0.0
    %3455 = vmatpush2.msra.mxu0 0.0
    %3456 = vmatprep.subr.mxu0 0.0
    %3457 = vmatpush2.msra.mxu0 0.0
    %3458 = vmatprep.subr.mxu0 0.0
    %3459 = vmatpush2.msra.mxu0 0.0
    %3460 = vmatprep.subr.mxu0 0.0
    %3461 = vmatpush2.msra.mxu0 0.0
    %3462 = vmatprep.subr.mxu0 0.0
    %3463 = vmatpush2.msra.mxu0 0.0
    %3464 = vmatprep.subr.mxu0 0.0
    %3465 = vmatpush2.msra.mxu0 0.0
    %3466 = vmatprep.subr.mxu0 0.0
    %3467 = vmatpush2.msra.mxu0 0.0
    %3468 = vmatprep.subr.mxu0 0.0
    %3469 = vmatpush2.msra.mxu0 0.0
    %3470 = vmatprep.subr.mxu0 0.0
    %3471 = vmatpush2.msra.mxu0 0.0
    %3472 = vmatprep.subr.mxu0 0.0
    %3473 = vmatpush2.msra.mxu0 0.0
    %3474 = vmatprep.subr.mxu0 0.0
    %3475 = vmatpush2.msra.mxu0 0.0
    %3476 = vmatprep.subr.mxu0 0.0
    %3477 = vmatpush2.msra.mxu0 0.0
    %3478 = vmatprep.subr.mxu0 0.0
    %3479 = vmatpush2.msra.mxu0 0.0
    %3480 = vmatprep.subr.mxu0 0.0
    %3481 = vmatpush2.msra.mxu0 0.0
    %3482 = vmatprep.mubr.f32.mxu0 0.0
    %3483 = vmatmul.mubr.f32.gmra.mxu0 %v3394
    %v3484 = vpop.f32.mrf.mxu0
    %v3485 = vadd.f32 %v3416, %v3484
    %v3486 = vpop.f32.mrf.mxu0
    %3487 = vdwg.mxu0
    %3488 = vst [vmem:[%s14] sm:$0xff] %v3485
    // Predicated region
    $region78: #{forward.1} parent=1 // pred_check
      _
    $region79: #{forward.1} parent=1 // pred_check_branch
      %3490 = sbr.rel (0) target = $region81
    $region80: #{forward.1} parent=1 // pred_region
      _
    $region81: #{forward.1} parent=1 // pred_fallthru
      _
    // Predicated region
    $region82: #{forward.1} parent=1 // pred_check
      _
    $region83: #{forward.1} parent=1 // pred_check_branch
      %3492 = sbr.rel (0) target = $region85
    $region84: #{forward.1} parent=1 // pred_region
      _
    $region85: #{forward.1} parent=1 // pred_fallthru
      _
    %3493 = vsyncpa [#allocation3], 1
    %3494 = vsyncpa [#allocation5], 1
    %3495 = vsyncpa [#allocation8], 1

</llo_original>
